<compile_context>
chip_gen: v7x
topology: tpu7x:2x2x1
jax: 0.10.0
libtpu: 0.0.40
codegen_flags: <defaults>
</compile_context>

<pallas_src>
import functools

import jax
import jax.numpy as jnp
from jax.experimental import pallas as pl
from jax.experimental.pallas import tpu as pltpu


def _round_up(v, m):
    return ((v + m - 1) // m) * m


def _pad2(x, rows, cols):
    r, c = x.shape
    return jnp.pad(x, ((0, rows - r), (0, cols - c)))


def _pick_tile(n, pref):
    # n is always a multiple of 128; pick the largest divisor of n <= pref
    t = min(pref, n)
    while n % t:
        t //= 2
    return max(t, 128)


# --------------------------------------------------------------------------
# Kernel 1: tiled fused SAGEConv with in-kernel mean normalization
#   grid = (N/tm rows [parallel], N/tk neighbor-K [arbitrary, last])
#   acc(tm, Din) f32 accumulates adj_tile(bf16) @ x_tile(bf16) on the MXU;
#   deg(tm, 1) f32 accumulates adjacency row sums (rides free on the resident
#   adj tile). At the last K step the f32 epilogue applies inv_deg, runs two
#   resident-weight dots (agg @ W_l + x_rows @ W_r), adds bias, optional relu,
#   and stores bf16.
# --------------------------------------------------------------------------
def sage_conv_kernel(adj_ref, xk_ref, xi_ref, wl_ref, wr_ref, b_ref,
                     out_ref, acc_ref, deg_ref, *, apply_relu):
    k = pl.program_id(1)

    @pl.when(k == 0)
    def _init():
        acc_ref[...] = jnp.zeros_like(acc_ref)
        deg_ref[...] = jnp.zeros_like(deg_ref)

    # widen int8 (0/1) adjacency to bf16 right after the DMA, feed the MXU
    adj_bf = adj_ref[...].astype(jnp.bfloat16)
    acc_ref[...] += jnp.dot(adj_bf, xk_ref[...],
                            preferred_element_type=jnp.float32)
    # degree (neighbor count) rides along on the already-resident adj tile
    deg_ref[...] += jnp.sum(adj_bf.astype(jnp.float32), axis=1, keepdims=True)

    @pl.when(k == pl.num_programs(1) - 1)
    def _finalize():
        deg = deg_ref[...]
        inv_deg = jnp.where(deg > 0.0, 1.0 / jnp.maximum(deg, 1.0), 0.0)
        agg = (acc_ref[...] * inv_deg).astype(jnp.bfloat16)     # mean aggregation
        out = (jnp.dot(agg, wl_ref[...], preferred_element_type=jnp.float32)
               + jnp.dot(xi_ref[...], wr_ref[...], preferred_element_type=jnp.float32)
               + b_ref[...])
        if apply_relu:
            out = jnp.maximum(out, 0.0)
        out_ref[...] = out.astype(out_ref.dtype)


def sage_conv(adj_i8, x_bf, w_l, w_r, bias, *, apply_relu):
    n_pad = adj_i8.shape[0]
    din = x_bf.shape[1]
    dout = w_l.shape[1]
    tm = _pick_tile(n_pad, 512)    # row tile (parallel axis)
    tk = _pick_tile(n_pad, 2048)   # neighbor/K tile (reduction axis, last)
    grid = (n_pad // tm, n_pad // tk)

    kernel = functools.partial(sage_conv_kernel, apply_relu=apply_relu)
    return pl.pallas_call(
        kernel,
        out_shape=jax.ShapeDtypeStruct((n_pad, dout), jnp.bfloat16),
        grid_spec=pltpu.PrefetchScalarGridSpec(
            num_scalar_prefetch=0,
            grid=grid,
            in_specs=[
                pl.BlockSpec((tm, tk), lambda i, k: (i, k)),       # adj tile (int8)
                pl.BlockSpec((tk, din), lambda i, k: (k, 0)),      # x (aggregation)
                pl.BlockSpec((tm, din), lambda i, k: (i, 0)),      # x rows (skip term)
                pl.BlockSpec((din, dout), lambda i, k: (0, 0)),    # W_l (bf16)
                pl.BlockSpec((din, dout), lambda i, k: (0, 0)),    # W_r (bf16)
                pl.BlockSpec((1, dout), lambda i, k: (0, 0)),      # bias (f32)
            ],
            out_specs=pl.BlockSpec((tm, dout), lambda i, k: (i, 0)),
            scratch_shapes=[pltpu.VMEM((tm, din), jnp.float32),    # agg accumulator
                            pltpu.VMEM((tm, 1), jnp.float32)],     # degree accumulator
        ),
        compiler_params=pltpu.CompilerParams(
            dimension_semantics=("parallel", "arbitrary"),
        ),
    )(adj_i8, x_bf, x_bf, w_l, w_r, bias)


# --------------------------------------------------------------------------
# Kernel 2: tiled LinkPredictor MLP
#   grid over edge tiles (parallel); bf16 operands into the MXU (f32 acc);
#   lane-dense (1, E_pad) output; the final D->1 projection is a VPU multiply
#   + lane reduction (no width-1 matmul / width-1 store).
# --------------------------------------------------------------------------
def link_pred_kernel(xs_ref, xt_ref, w1_ref, b1_ref, w2_ref, b2_ref, out_ref):
    h = xs_ref[...] * xt_ref[...]                                   # bf16 (tE, D)
    h = jnp.dot(h, w1_ref[...], preferred_element_type=jnp.float32) + b1_ref[...]
    h = jnp.maximum(h, 0.0)                                         # f32 (tE, D)
    z = jnp.sum(h * w2_ref[...], axis=-1) + b2_ref[0]               # (tE,)
    out_ref[...] = jax.nn.sigmoid(z)[None, :]                       # (1, tE)


def link_predict(x_s, x_t, w1, b1, w2_row, b2):
    e, d = x_s.shape
    e_pad = _round_up(e, 128)
    xs = _pad2(x_s, e_pad, d)
    xt = _pad2(x_t, e_pad, d)
    te = _pick_tile(e_pad, 512)

    out = pl.pallas_call(
        link_pred_kernel,
        out_shape=jax.ShapeDtypeStruct((1, e_pad), jnp.float32),
        grid_spec=pltpu.PrefetchScalarGridSpec(
            num_scalar_prefetch=0,
            grid=(e_pad // te,),
            in_specs=[
                pl.BlockSpec((te, d), lambda i: (i, 0)),             # x_s (bf16)
                pl.BlockSpec((te, d), lambda i: (i, 0)),             # x_t (bf16)
                pl.BlockSpec((d, d), lambda i: (0, 0)),              # W1  (bf16)
                pl.BlockSpec((1, d), lambda i: (0, 0)),              # b1  (f32)
                pl.BlockSpec((1, d), lambda i: (0, 0)),              # W2 row (f32)
                pl.BlockSpec(memory_space=pltpu.MemorySpace.SMEM),   # b2 scalar
            ],
            out_specs=pl.BlockSpec((1, te), lambda i: (0, i)),
        ),
        compiler_params=pltpu.CompilerParams(
            dimension_semantics=("parallel",),
        ),
    )(xs, xt, w1, b1, w2_row, b2)
    return out.reshape(-1)[:e]


# --------------------------------------------------------------------------
# Full SAGE_Linear forward (glue: padding, dtype casts, gather)
# --------------------------------------------------------------------------
def sage_linear_forward(params, adj, edges):
    n = adj.shape[0]
    n_pad = _round_up(n, 128)

    # adjacency stays int8 in HBM (0/1 exact); degree is computed in-kernel
    adj_i8 = jnp.pad(adj.astype(jnp.int8), ((0, n_pad - n), (0, n_pad - n)))

    # ---- SAGE layer 1 (+ relu; dropout = identity in inference mode) ----
    emb = params["emb"]
    d0 = emb.shape[1]
    d0p = _round_up(d0, 128)
    x0 = _pad2(emb, n_pad, d0p).astype(jnp.bfloat16)

    w1l, b1l, w1r = params["conv1"]
    d1 = w1l.shape[1]
    d1p = _round_up(d1, 128)
    wl1 = _pad2(w1l, d0p, d1p).astype(jnp.bfloat16)
    wr1 = _pad2(w1r, d0p, d1p).astype(jnp.bfloat16)
    bias1 = jnp.pad(b1l, (0, d1p - d1)).reshape(1, d1p)

    x1 = sage_conv(adj_i8, x0, wl1, wr1, bias1, apply_relu=True)     # (n_pad, d1p) bf16

    # ---- SAGE layer 2 (no activation) ----
    w2l, b2l, w2r = params["conv2"]
    d2 = w2l.shape[1]
    d2p = _round_up(d2, 128)
    wl2 = _pad2(w2l, d1p, d2p).astype(jnp.bfloat16)
    wr2 = _pad2(w2r, d1p, d2p).astype(jnp.bfloat16)
    bias2 = jnp.pad(b2l, (0, d2p - d2)).reshape(1, d2p)

    x2 = sage_conv(adj_i8, x1, wl2, wr2, bias2, apply_relu=False)    # (n_pad, d2p) bf16

    # ---- LinkPredictor ----
    # TODO(synk): edge-endpoint gather stays in XLA (now on bf16 rows); could be
    #             fused into the predictor kernel via scalar-prefetched edge ids
    #             + manual DMA gather once E is large.
    x_s = x2[edges[0, :]]
    x_t = x2[edges[1, :]]

    pw1, pb1 = params["pred1"]           # (288, 288), (288,)
    pw2, pb2 = params["pred2"]           # (288, 1),   (1,)
    w1p = _pad2(pw1, d2p, d2p).astype(jnp.bfloat16)
    b1p = jnp.pad(pb1, (0, d2p - d2)).reshape(1, d2p)
    w2row = jnp.pad(pw2.reshape(1, -1), ((0, 0), (0, d2p - d2)))     # (1, d2p) f32

    return link_predict(x_s, x_t, w1p, b1p, w2row, pb2.reshape(1))


# --------------------------------------------------------------------------
# Deterministic parameter initialization (PyTorch-Linear-style uniform bounds)
# --------------------------------------------------------------------------
def _linear_params(key, in_dim, out_dim, bias=True):
    kw, kb = jax.random.split(key)
    bound = 1.0 / jnp.sqrt(in_dim)
    # store weight already transposed: (in_dim, out_dim) so kernels do x @ W
    w_t = jax.random.uniform(kw, (in_dim, out_dim), jnp.float32, -bound, bound)
    if not bias:
        return w_t
    b = jax.random.uniform(kb, (out_dim,), jnp.float32, -bound, bound)
    return w_t, b


def init_params(key, num_nodes, emb_dim, hid_dim, out_dim):
    ks = jax.random.split(key, 7)
    emb = jax.random.normal(ks[0], (num_nodes, emb_dim), jnp.float32)
    c1_wl, c1_bl = _linear_params(ks[1], emb_dim, hid_dim, bias=True)
    c1_wr = _linear_params(ks[2], emb_dim, hid_dim, bias=False)
    c2_wl, c2_bl = _linear_params(ks[3], hid_dim, out_dim, bias=True)
    c2_wr = _linear_params(ks[4], hid_dim, out_dim, bias=False)
    p1_w, p1_b = _linear_params(ks[5], out_dim, out_dim, bias=True)
    p2_w, p2_b = _linear_params(ks[6], out_dim, 1, bias=True)
    return {
        "emb": emb,
        "conv1": (c1_wl, c1_bl, c1_wr),
        "conv2": (c2_wl, c2_bl, c2_wr),
        "pred1": (p1_w, p1_b),
        "pred2": (p2_w, p2_b),
    }


if __name__ == "__main__":
    key = jax.random.PRNGKey(0)
    k_param, k_adj, k_edge = jax.random.split(key, 3)

    # small shapes consistent with the module defaults
    num_nodes = 64
    emb_dim, hid_dim, out_dim = 100, 256, 288
    num_edges = 16

    params = init_params(k_param, num_nodes, emb_dim, hid_dim, out_dim)

    # dense stand-in for torch_sparse.SparseTensor adj_t: (N, N) 0/1 matrix
    adj = jax.random.bernoulli(k_adj, 0.1, (num_nodes, num_nodes)).astype(jnp.float32)
    adj = adj * (1.0 - jnp.eye(num_nodes, dtype=jnp.float32))  # no self loops

    edges = jax.random.randint(k_edge, (2, num_edges), 0, num_nodes, dtype=jnp.int32)

    out = jax.jit(sage_linear_forward)(params, adj, edges)
    out = jax.block_until_ready(out)

    assert out.shape == (num_edges,)
    assert bool(jnp.all((out >= 0.0) & (out <= 1.0)))
    print("KERNEL_OK")
</pallas_src>

<mosaic_0001>
module attributes {stable_mosaic.version = 11 : i64} {
  func.func @sage_conv_kernel(%arg0: i32, %arg1: i32, %arg2: memref<128x128xi8, #tpu.memory_space<vmem>>, %arg3: memref<128x128xbf16, #tpu.memory_space<vmem>>, %arg4: memref<128x128xbf16, #tpu.memory_space<vmem>>, %arg5: memref<128x256xbf16, #tpu.memory_space<vmem>>, %arg6: memref<128x256xbf16, #tpu.memory_space<vmem>>, %arg7: memref<1x256xf32, #tpu.memory_space<vmem>>, %arg8: memref<128x256xbf16, #tpu.memory_space<vmem>>, %arg9: memref<128x128xf32, #tpu.memory_space<vmem>>, %arg10: memref<128x1xf32, #tpu.memory_space<vmem>>) attributes {dimension_semantics = [#tpu.dimension_semantics<parallel>, #tpu.dimension_semantics<arbitrary>], iteration_bounds = array<i64: 1, 1>, scalar_prefetch = 0 : i64, scratch_operands = 2 : i64, tpu.core_type = #tpu.core_type<tc>, window_params = [{transform_indices = @transform_0, window_bounds = array<i64: 128, 128>}, {transform_indices = @transform_1, window_bounds = array<i64: 128, 128>}, {transform_indices = @transform_2, window_bounds = array<i64: 128, 128>}, {pipeline_mode = #tpu.pipeline_mode<synchronous>, transform_indices = @transform_3, window_bounds = array<i64: 128, 256>}, {pipeline_mode = #tpu.pipeline_mode<synchronous>, transform_indices = @transform_4, window_bounds = array<i64: 128, 256>}, {pipeline_mode = #tpu.pipeline_mode<synchronous>, transform_indices = @transform_5, window_bounds = array<i64: 1, 256>}, {transform_indices = @transform_6, window_bounds = array<i64: 128, 256>}]} {
    %c0_i32 = arith.constant 0 : i32
    %0 = arith.cmpi eq, %arg1, %c0_i32 : i32
    %1 = arith.extui %0 : i1 to i32
    %c0_i32_0 = arith.constant 0 : i32
    %2 = arith.cmpi ne, %1, %c0_i32_0 : i32
    scf.if %2 {
      %cst_15 = arith.constant 0.000000e+00 : f32
      %19 = vector.broadcast %cst_15 : f32 to vector<128x128xf32>
      %c0_16 = arith.constant 0 : index
      %c0_17 = arith.constant 0 : index
      %20 = vector.load %arg9[%c0_16, %c0_17] : memref<128x128xf32, #tpu.memory_space<vmem>>, vector<128x128xf32>
      tpu.vector_store %arg9[%c0_16, %c0_17], %19 {strides = array<i32>} : memref<128x128xf32, #tpu.memory_space<vmem>>, vector<128x128xf32>,
      %cst_18 = arith.constant 0.000000e+00 : f32
      %21 = vector.broadcast %cst_18 : f32 to vector<128x1xf32>
      %c0_19 = arith.constant 0 : index
      %c0_20 = arith.constant 0 : index
      %22 = vector.load %arg10[%c0_19, %c0_20] : memref<128x1xf32, #tpu.memory_space<vmem>>, vector<128x1xf32>
      tpu.vector_store %arg10[%c0_19, %c0_20], %21 {strides = array<i32>} : memref<128x1xf32, #tpu.memory_space<vmem>>, vector<128x1xf32>,
    } else {
    }
    %c0 = arith.constant 0 : index
    %c0_1 = arith.constant 0 : index
    %3 = vector.load %arg2[%c0, %c0_1] : memref<128x128xi8, #tpu.memory_space<vmem>>, vector<128x128xi8>
    %4 = arith.sitofp %3 : vector<128x128xi8> to vector<128x128xbf16>
    %c0_2 = arith.constant 0 : index
    %c0_3 = arith.constant 0 : index
    %5 = vector.load %arg9[%c0_2, %c0_3] : memref<128x128xf32, #tpu.memory_space<vmem>>, vector<128x128xf32>
    %c0_4 = arith.constant 0 : index
    %c0_5 = arith.constant 0 : index
    %6 = vector.load %arg3[%c0_4, %c0_5] : memref<128x128xbf16, #tpu.memory_space<vmem>>, vector<128x128xbf16>
    %cst = arith.constant dense<0.000000e+00> : vector<128x128xf32>
    %7 = tpu.matmul %4, %6, %cst {dimension_numbers = #tpu.dot_dimension_numbers<[1], [0], [0], [1], [0, 0, 1, 1], [], []>} : vector<128x128xbf16>, vector<128x128xbf16>, vector<128x128xf32> -> vector<128x128xf32>
    %8 = arith.addf %5, %7 : vector<128x128xf32>
    %c0_6 = arith.constant 0 : index
    %c0_7 = arith.constant 0 : index
    %9 = vector.load %arg9[%c0_6, %c0_7] : memref<128x128xf32, #tpu.memory_space<vmem>>, vector<128x128xf32>
    tpu.vector_store %arg9[%c0_6, %c0_7], %8 {strides = array<i32>} : memref<128x128xf32, #tpu.memory_space<vmem>>, vector<128x128xf32>,
    %c0_8 = arith.constant 0 : index
    %c0_9 = arith.constant 0 : index
    %10 = vector.load %arg10[%c0_8, %c0_9] : memref<128x1xf32, #tpu.memory_space<vmem>>, vector<128x1xf32>
    %11 = arith.extf %4 : vector<128x128xbf16> to vector<128x128xf32>
    %cst_10 = arith.constant dense<0.000000e+00> : vector<128xf32>
    %12 = vector.multi_reduction <add>, %11, %cst_10 [1] : vector<128x128xf32> to vector<128xf32>
    %13 = vector.shape_cast %12 : vector<128xf32> to vector<128x1xf32>
    %14 = arith.addf %10, %13 : vector<128x1xf32>
    %c0_11 = arith.constant 0 : index
    %c0_12 = arith.constant 0 : index
    %15 = vector.load %arg10[%c0_11, %c0_12] : memref<128x1xf32, #tpu.memory_space<vmem>>, vector<128x1xf32>
    tpu.vector_store %arg10[%c0_11, %c0_12], %14 {strides = array<i32>} : memref<128x1xf32, #tpu.memory_space<vmem>>, vector<128x1xf32>,
    %c0_i32_13 = arith.constant 0 : i32
    %16 = arith.cmpi eq, %arg1, %c0_i32_13 : i32
    %17 = arith.extui %16 : i1 to i32
    %c0_i32_14 = arith.constant 0 : i32
    %18 = arith.cmpi ne, %17, %c0_i32_14 : i32
    scf.if %18 {
      %c0_15 = arith.constant 0 : index
      %c0_16 = arith.constant 0 : index
      %19 = vector.load %arg10[%c0_15, %c0_16] : memref<128x1xf32, #tpu.memory_space<vmem>>, vector<128x1xf32>
      %cst_17 = arith.constant 0.000000e+00 : f32
      %20 = vector.broadcast %cst_17 : f32 to vector<128x1xf32>
      %21 = arith.cmpf ogt, %19, %20 : vector<128x1xf32>
      %cst_18 = arith.constant 1.000000e+00 : f32
      %22 = vector.broadcast %cst_18 : f32 to vector<128x1xf32>
      %23 = arith.maximumf %19, %22 : vector<128x1xf32>
      %cst_19 = arith.constant 1.000000e+00 : f32
      %24 = vector.broadcast %cst_19 : f32 to vector<128x1xf32>
      %25 = arith.divf %24, %23 : vector<128x1xf32>
      %cst_20 = arith.constant 0.000000e+00 : f32
      %26 = vector.broadcast %cst_20 : f32 to vector<128x1xf32>
      %27 = arith.select %21, %25, %26 : vector<128x1xi1>, vector<128x1xf32>
      %c0_21 = arith.constant 0 : index
      %c0_22 = arith.constant 0 : index
      %28 = vector.load %arg9[%c0_21, %c0_22] : memref<128x128xf32, #tpu.memory_space<vmem>>, vector<128x128xf32>
      %29 = vector.broadcast %27 : vector<128x1xf32> to vector<128x128xf32>
      %30 = arith.mulf %28, %29 : vector<128x128xf32>
      %31 = arith.truncf %30 : vector<128x128xf32> to vector<128x128xbf16>
      %c0_23 = arith.constant 0 : index
      %c0_24 = arith.constant 0 : index
      %32 = vector.load %arg5[%c0_23, %c0_24] : memref<128x256xbf16, #tpu.memory_space<vmem>>, vector<128x256xbf16>
      %cst_25 = arith.constant dense<0.000000e+00> : vector<128x256xf32>
      %33 = tpu.matmul %31, %32, %cst_25 {dimension_numbers = #tpu.dot_dimension_numbers<[1], [0], [0], [1], [0, 0, 1, 1], [], []>} : vector<128x128xbf16>, vector<128x256xbf16>, vector<128x256xf32> -> vector<128x256xf32>
      %c0_26 = arith.constant 0 : index
      %c0_27 = arith.constant 0 : index
      %34 = vector.load %arg4[%c0_26, %c0_27] : memref<128x128xbf16, #tpu.memory_space<vmem>>, vector<128x128xbf16>
      %c0_28 = arith.constant 0 : index
      %c0_29 = arith.constant 0 : index
      %35 = vector.load %arg6[%c0_28, %c0_29] : memref<128x256xbf16, #tpu.memory_space<vmem>>, vector<128x256xbf16>
      %cst_30 = arith.constant dense<0.000000e+00> : vector<128x256xf32>
      %36 = tpu.matmul %34, %35, %cst_30 {dimension_numbers = #tpu.dot_dimension_numbers<[1], [0], [0], [1], [0, 0, 1, 1], [], []>} : vector<128x128xbf16>, vector<128x256xbf16>, vector<128x256xf32> -> vector<128x256xf32>
      %37 = arith.addf %33, %36 : vector<128x256xf32>
      %c0_31 = arith.constant 0 : index
      %c0_32 = arith.constant 0 : index
      %38 = vector.load %arg7[%c0_31, %c0_32] : memref<1x256xf32, #tpu.memory_space<vmem>>, vector<1x256xf32>
      %39 = vector.broadcast %38 : vector<1x256xf32> to vector<128x256xf32>
      %40 = arith.addf %37, %39 : vector<128x256xf32>
      %cst_33 = arith.constant 0.000000e+00 : f32
      %41 = vector.broadcast %cst_33 : f32 to vector<128x256xf32>
      %42 = arith.maximumf %40, %41 : vector<128x256xf32>
      %43 = arith.truncf %42 : vector<128x256xf32> to vector<128x256xbf16>
      %c0_34 = arith.constant 0 : index
      %c0_35 = arith.constant 0 : index
      %44 = vector.load %arg8[%c0_34, %c0_35] : memref<128x256xbf16, #tpu.memory_space<vmem>>, vector<128x256xbf16>
      tpu.vector_store %arg8[%c0_34, %c0_35], %43 {strides = array<i32>} : memref<128x256xbf16, #tpu.memory_space<vmem>>, vector<128x256xbf16>,
    } else {
    }
    return
  }
  func.func @transform_0(%arg0: i32, %arg1: i32) -> (i32, i32) {
    %c0_i32 = arith.constant 0 : i32
    return %arg0, %arg1 : i32, i32
  }
  func.func @transform_1(%arg0: i32, %arg1: i32) -> (i32, i32) {
    %c0_i32 = arith.constant 0 : i32
    %c0_i32_0 = arith.constant 0 : i32
    return %arg1, %c0_i32 : i32, i32
  }
  func.func @transform_2(%arg0: i32, %arg1: i32) -> (i32, i32) {
    %c0_i32 = arith.constant 0 : i32
    %c0_i32_0 = arith.constant 0 : i32
    return %arg0, %c0_i32 : i32, i32
  }
  func.func @transform_3(%arg0: i32, %arg1: i32) -> (i32, i32) {
    %c0_i32 = arith.constant 0 : i32
    %c0_i32_0 = arith.constant 0 : i32
    %c0_i32_1 = arith.constant 0 : i32
    return %c0_i32, %c0_i32_0 : i32, i32
  }
  func.func @transform_4(%arg0: i32, %arg1: i32) -> (i32, i32) {
    %c0_i32 = arith.constant 0 : i32
    %c0_i32_0 = arith.constant 0 : i32
    %c0_i32_1 = arith.constant 0 : i32
    return %c0_i32, %c0_i32_0 : i32, i32
  }
  func.func @transform_5(%arg0: i32, %arg1: i32) -> (i32, i32) {
    %c0_i32 = arith.constant 0 : i32
    %c0_i32_0 = arith.constant 0 : i32
    %c0_i32_1 = arith.constant 0 : i32
    return %c0_i32, %c0_i32_0 : i32, i32
  }
  func.func @transform_6(%arg0: i32, %arg1: i32) -> (i32, i32) {
    %c0_i32 = arith.constant 0 : i32
    %c0_i32_0 = arith.constant 0 : i32
    return %arg0, %c0_i32 : i32, i32
  }
}

module attributes {stable_mosaic.version = 11 : i64} {
  func.func @sage_conv_kernel(%arg0: i32, %arg1: i32, %arg2: memref<128x128xi8, #tpu.memory_space<vmem>>, %arg3: memref<128x256xbf16, #tpu.memory_space<vmem>>, %arg4: memref<128x256xbf16, #tpu.memory_space<vmem>>, %arg5: memref<256x384xbf16, #tpu.memory_space<vmem>>, %arg6: memref<256x384xbf16, #tpu.memory_space<vmem>>, %arg7: memref<1x384xf32, #tpu.memory_space<vmem>>, %arg8: memref<128x384xbf16, #tpu.memory_space<vmem>>, %arg9: memref<128x256xf32, #tpu.memory_space<vmem>>, %arg10: memref<128x1xf32, #tpu.memory_space<vmem>>) attributes {dimension_semantics = [#tpu.dimension_semantics<parallel>, #tpu.dimension_semantics<arbitrary>], iteration_bounds = array<i64: 1, 1>, scalar_prefetch = 0 : i64, scratch_operands = 2 : i64, tpu.core_type = #tpu.core_type<tc>, window_params = [{transform_indices = @transform_0, window_bounds = array<i64: 128, 128>}, {transform_indices = @transform_1, window_bounds = array<i64: 128, 256>}, {transform_indices = @transform_2, window_bounds = array<i64: 128, 256>}, {pipeline_mode = #tpu.pipeline_mode<synchronous>, transform_indices = @transform_3, window_bounds = array<i64: 256, 384>}, {pipeline_mode = #tpu.pipeline_mode<synchronous>, transform_indices = @transform_4, window_bounds = array<i64: 256, 384>}, {pipeline_mode = #tpu.pipeline_mode<synchronous>, transform_indices = @transform_5, window_bounds = array<i64: 1, 384>}, {transform_indices = @transform_6, window_bounds = array<i64: 128, 384>}]} {
    %c0_i32 = arith.constant 0 : i32
    %0 = arith.cmpi eq, %arg1, %c0_i32 : i32
    %1 = arith.extui %0 : i1 to i32
    %c0_i32_0 = arith.constant 0 : i32
    %2 = arith.cmpi ne, %1, %c0_i32_0 : i32
    scf.if %2 {
      %cst_15 = arith.constant 0.000000e+00 : f32
      %19 = vector.broadcast %cst_15 : f32 to vector<128x256xf32>
      %c0_16 = arith.constant 0 : index
      %c0_17 = arith.constant 0 : index
      %20 = vector.load %arg9[%c0_16, %c0_17] : memref<128x256xf32, #tpu.memory_space<vmem>>, vector<128x256xf32>
      tpu.vector_store %arg9[%c0_16, %c0_17], %19 {strides = array<i32>} : memref<128x256xf32, #tpu.memory_space<vmem>>, vector<128x256xf32>,
      %cst_18 = arith.constant 0.000000e+00 : f32
      %21 = vector.broadcast %cst_18 : f32 to vector<128x1xf32>
      %c0_19 = arith.constant 0 : index
      %c0_20 = arith.constant 0 : index
      %22 = vector.load %arg10[%c0_19, %c0_20] : memref<128x1xf32, #tpu.memory_space<vmem>>, vector<128x1xf32>
      tpu.vector_store %arg10[%c0_19, %c0_20], %21 {strides = array<i32>} : memref<128x1xf32, #tpu.memory_space<vmem>>, vector<128x1xf32>,
    } else {
    }
    %c0 = arith.constant 0 : index
    %c0_1 = arith.constant 0 : index
    %3 = vector.load %arg2[%c0, %c0_1] : memref<128x128xi8, #tpu.memory_space<vmem>>, vector<128x128xi8>
    %4 = arith.sitofp %3 : vector<128x128xi8> to vector<128x128xbf16>
    %c0_2 = arith.constant 0 : index
    %c0_3 = arith.constant 0 : index
    %5 = vector.load %arg9[%c0_2, %c0_3] : memref<128x256xf32, #tpu.memory_space<vmem>>, vector<128x256xf32>
    %c0_4 = arith.constant 0 : index
    %c0_5 = arith.constant 0 : index
    %6 = vector.load %arg3[%c0_4, %c0_5] : memref<128x256xbf16, #tpu.memory_space<vmem>>, vector<128x256xbf16>
    %cst = arith.constant dense<0.000000e+00> : vector<128x256xf32>
    %7 = tpu.matmul %4, %6, %cst {dimension_numbers = #tpu.dot_dimension_numbers<[1], [0], [0], [1], [0, 0, 1, 1], [], []>} : vector<128x128xbf16>, vector<128x256xbf16>, vector<128x256xf32> -> vector<128x256xf32>
    %8 = arith.addf %5, %7 : vector<128x256xf32>
    %c0_6 = arith.constant 0 : index
    %c0_7 = arith.constant 0 : index
    %9 = vector.load %arg9[%c0_6, %c0_7] : memref<128x256xf32, #tpu.memory_space<vmem>>, vector<128x256xf32>
    tpu.vector_store %arg9[%c0_6, %c0_7], %8 {strides = array<i32>} : memref<128x256xf32, #tpu.memory_space<vmem>>, vector<128x256xf32>,
    %c0_8 = arith.constant 0 : index
    %c0_9 = arith.constant 0 : index
    %10 = vector.load %arg10[%c0_8, %c0_9] : memref<128x1xf32, #tpu.memory_space<vmem>>, vector<128x1xf32>
    %11 = arith.extf %4 : vector<128x128xbf16> to vector<128x128xf32>
    %cst_10 = arith.constant dense<0.000000e+00> : vector<128xf32>
    %12 = vector.multi_reduction <add>, %11, %cst_10 [1] : vector<128x128xf32> to vector<128xf32>
    %13 = vector.shape_cast %12 : vector<128xf32> to vector<128x1xf32>
    %14 = arith.addf %10, %13 : vector<128x1xf32>
    %c0_11 = arith.constant 0 : index
    %c0_12 = arith.constant 0 : index
    %15 = vector.load %arg10[%c0_11, %c0_12] : memref<128x1xf32, #tpu.memory_space<vmem>>, vector<128x1xf32>
    tpu.vector_store %arg10[%c0_11, %c0_12], %14 {strides = array<i32>} : memref<128x1xf32, #tpu.memory_space<vmem>>, vector<128x1xf32>,
    %c0_i32_13 = arith.constant 0 : i32
    %16 = arith.cmpi eq, %arg1, %c0_i32_13 : i32
    %17 = arith.extui %16 : i1 to i32
    %c0_i32_14 = arith.constant 0 : i32
    %18 = arith.cmpi ne, %17, %c0_i32_14 : i32
    scf.if %18 {
      %c0_15 = arith.constant 0 : index
      %c0_16 = arith.constant 0 : index
      %19 = vector.load %arg10[%c0_15, %c0_16] : memref<128x1xf32, #tpu.memory_space<vmem>>, vector<128x1xf32>
      %cst_17 = arith.constant 0.000000e+00 : f32
      %20 = vector.broadcast %cst_17 : f32 to vector<128x1xf32>
      %21 = arith.cmpf ogt, %19, %20 : vector<128x1xf32>
      %cst_18 = arith.constant 1.000000e+00 : f32
      %22 = vector.broadcast %cst_18 : f32 to vector<128x1xf32>
      %23 = arith.maximumf %19, %22 : vector<128x1xf32>
      %cst_19 = arith.constant 1.000000e+00 : f32
      %24 = vector.broadcast %cst_19 : f32 to vector<128x1xf32>
      %25 = arith.divf %24, %23 : vector<128x1xf32>
      %cst_20 = arith.constant 0.000000e+00 : f32
      %26 = vector.broadcast %cst_20 : f32 to vector<128x1xf32>
      %27 = arith.select %21, %25, %26 : vector<128x1xi1>, vector<128x1xf32>
      %c0_21 = arith.constant 0 : index
      %c0_22 = arith.constant 0 : index
      %28 = vector.load %arg9[%c0_21, %c0_22] : memref<128x256xf32, #tpu.memory_space<vmem>>, vector<128x256xf32>
      %29 = vector.broadcast %27 : vector<128x1xf32> to vector<128x256xf32>
      %30 = arith.mulf %28, %29 : vector<128x256xf32>
      %31 = arith.truncf %30 : vector<128x256xf32> to vector<128x256xbf16>
      %c0_23 = arith.constant 0 : index
      %c0_24 = arith.constant 0 : index
      %32 = vector.load %arg5[%c0_23, %c0_24] : memref<256x384xbf16, #tpu.memory_space<vmem>>, vector<256x384xbf16>
      %cst_25 = arith.constant dense<0.000000e+00> : vector<128x384xf32>
      %33 = tpu.matmul %31, %32, %cst_25 {dimension_numbers = #tpu.dot_dimension_numbers<[1], [0], [0], [1], [0, 0, 1, 1], [], []>} : vector<128x256xbf16>, vector<256x384xbf16>, vector<128x384xf32> -> vector<128x384xf32>
      %c0_26 = arith.constant 0 : index
      %c0_27 = arith.constant 0 : index
      %34 = vector.load %arg4[%c0_26, %c0_27] : memref<128x256xbf16, #tpu.memory_space<vmem>>, vector<128x256xbf16>
      %c0_28 = arith.constant 0 : index
      %c0_29 = arith.constant 0 : index
      %35 = vector.load %arg6[%c0_28, %c0_29] : memref<256x384xbf16, #tpu.memory_space<vmem>>, vector<256x384xbf16>
      %cst_30 = arith.constant dense<0.000000e+00> : vector<128x384xf32>
      %36 = tpu.matmul %34, %35, %cst_30 {dimension_numbers = #tpu.dot_dimension_numbers<[1], [0], [0], [1], [0, 0, 1, 1], [], []>} : vector<128x256xbf16>, vector<256x384xbf16>, vector<128x384xf32> -> vector<128x384xf32>
      %37 = arith.addf %33, %36 : vector<128x384xf32>
      %c0_31 = arith.constant 0 : index
      %c0_32 = arith.constant 0 : index
      %38 = vector.load %arg7[%c0_31, %c0_32] : memref<1x384xf32, #tpu.memory_space<vmem>>, vector<1x384xf32>
      %39 = vector.broadcast %38 : vector<1x384xf32> to vector<128x384xf32>
      %40 = arith.addf %37, %39 : vector<128x384xf32>
      %41 = arith.truncf %40 : vector<128x384xf32> to vector<128x384xbf16>
      %c0_33 = arith.constant 0 : index
      %c0_34 = arith.constant 0 : index
      %42 = vector.load %arg8[%c0_33, %c0_34] : memref<128x384xbf16, #tpu.memory_space<vmem>>, vector<128x384xbf16>
      tpu.vector_store %arg8[%c0_33, %c0_34], %41 {strides = array<i32>} : memref<128x384xbf16, #tpu.memory_space<vmem>>, vector<128x384xbf16>,
    } else {
    }
    return
  }
  func.func @transform_0(%arg0: i32, %arg1: i32) -> (i32, i32) {
    %c0_i32 = arith.constant 0 : i32
    return %arg0, %arg1 : i32, i32
  }
  func.func @transform_1(%arg0: i32, %arg1: i32) -> (i32, i32) {
    %c0_i32 = arith.constant 0 : i32
    %c0_i32_0 = arith.constant 0 : i32
    return %arg1, %c0_i32 : i32, i32
  }
  func.func @transform_2(%arg0: i32, %arg1: i32) -> (i32, i32) {
    %c0_i32 = arith.constant 0 : i32
    %c0_i32_0 = arith.constant 0 : i32
    return %arg0, %c0_i32 : i32, i32
  }
  func.func @transform_3(%arg0: i32, %arg1: i32) -> (i32, i32) {
    %c0_i32 = arith.constant 0 : i32
    %c0_i32_0 = arith.constant 0 : i32
    %c0_i32_1 = arith.constant 0 : i32
    return %c0_i32, %c0_i32_0 : i32, i32
  }
  func.func @transform_4(%arg0: i32, %arg1: i32) -> (i32, i32) {
    %c0_i32 = arith.constant 0 : i32
    %c0_i32_0 = arith.constant 0 : i32
    %c0_i32_1 = arith.constant 0 : i32
    return %c0_i32, %c0_i32_0 : i32, i32
  }
  func.func @transform_5(%arg0: i32, %arg1: i32) -> (i32, i32) {
    %c0_i32 = arith.constant 0 : i32
    %c0_i32_0 = arith.constant 0 : i32
    %c0_i32_1 = arith.constant 0 : i32
    return %c0_i32, %c0_i32_0 : i32, i32
  }
  func.func @transform_6(%arg0: i32, %arg1: i32) -> (i32, i32) {
    %c0_i32 = arith.constant 0 : i32
    %c0_i32_0 = arith.constant 0 : i32
    return %arg0, %c0_i32 : i32, i32
  }
}

module attributes {stable_mosaic.version = 11 : i64} {
  func.func @link_pred_kernel(%arg0: i32, %arg1: memref<128x384xbf16, #tpu.memory_space<vmem>>, %arg2: memref<128x384xbf16, #tpu.memory_space<vmem>>, %arg3: memref<384x384xbf16, #tpu.memory_space<vmem>>, %arg4: memref<1x384xf32, #tpu.memory_space<vmem>>, %arg5: memref<1x384xf32, #tpu.memory_space<vmem>>, %arg6: memref<1xf32, #tpu.memory_space<smem>>, %arg7: memref<1x128xf32, #tpu.memory_space<vmem>>) attributes {dimension_semantics = [#tpu.dimension_semantics<parallel>], iteration_bounds = array<i64: 1>, scalar_prefetch = 0 : i64, scratch_operands = 0 : i64, tpu.core_type = #tpu.core_type<tc>, window_params = [{transform_indices = @transform_0, window_bounds = array<i64: 128, 384>}, {transform_indices = @transform_1, window_bounds = array<i64: 128, 384>}, {pipeline_mode = #tpu.pipeline_mode<synchronous>, transform_indices = @transform_2, window_bounds = array<i64: 384, 384>}, {pipeline_mode = #tpu.pipeline_mode<synchronous>, transform_indices = @transform_3, window_bounds = array<i64: 1, 384>}, {pipeline_mode = #tpu.pipeline_mode<synchronous>, transform_indices = @transform_4, window_bounds = array<i64: 1, 384>}, {transform_indices = @transform_5, window_bounds = array<i64: 1>}, {transform_indices = @transform_6, window_bounds = array<i64: 1, 128>}]} {
    %c0 = arith.constant 0 : index
    %c0_0 = arith.constant 0 : index
    %0 = vector.load %arg1[%c0, %c0_0] : memref<128x384xbf16, #tpu.memory_space<vmem>>, vector<128x384xbf16>
    %c0_1 = arith.constant 0 : index
    %c0_2 = arith.constant 0 : index
    %1 = vector.load %arg2[%c0_1, %c0_2] : memref<128x384xbf16, #tpu.memory_space<vmem>>, vector<128x384xbf16>
    %2 = arith.mulf %0, %1 : vector<128x384xbf16>
    %c0_3 = arith.constant 0 : index
    %c0_4 = arith.constant 0 : index
    %3 = vector.load %arg3[%c0_3, %c0_4] : memref<384x384xbf16, #tpu.memory_space<vmem>>, vector<384x384xbf16>
    %cst = arith.constant dense<0.000000e+00> : vector<128x384xf32>
    %4 = tpu.matmul %2, %3, %cst {dimension_numbers = #tpu.dot_dimension_numbers<[1], [0], [0], [1], [0, 0, 1, 1], [], []>} : vector<128x384xbf16>, vector<384x384xbf16>, vector<128x384xf32> -> vector<128x384xf32>
    %c0_5 = arith.constant 0 : index
    %c0_6 = arith.constant 0 : index
    %5 = vector.load %arg4[%c0_5, %c0_6] : memref<1x384xf32, #tpu.memory_space<vmem>>, vector<1x384xf32>
    %6 = vector.broadcast %5 : vector<1x384xf32> to vector<128x384xf32>
    %7 = arith.addf %4, %6 : vector<128x384xf32>
    %cst_7 = arith.constant 0.000000e+00 : f32
    %8 = vector.broadcast %cst_7 : f32 to vector<128x384xf32>
    %9 = arith.maximumf %7, %8 : vector<128x384xf32>
    %c0_8 = arith.constant 0 : index
    %c0_9 = arith.constant 0 : index
    %10 = vector.load %arg5[%c0_8, %c0_9] : memref<1x384xf32, #tpu.memory_space<vmem>>, vector<1x384xf32>
    %11 = vector.broadcast %10 : vector<1x384xf32> to vector<128x384xf32>
    %12 = arith.mulf %9, %11 : vector<128x384xf32>
    %cst_10 = arith.constant dense<0.000000e+00> : vector<128xf32>
    %13 = vector.multi_reduction <add>, %12, %cst_10 [1] : vector<128x384xf32> to vector<128xf32>
    %c0_11 = arith.constant 0 : index
    %14 = memref.load %arg6[%c0_11] : memref<1xf32, #tpu.memory_space<smem>>
    %15 = vector.broadcast %14 : f32 to vector<128xf32>
    %16 = arith.addf %13, %15 : vector<128xf32>
    %17 = arith.negf %16 : vector<128xf32>
    %18 = math.exp %17 : vector<128xf32>
    %cst_12 = arith.constant 1.000000e+00 : f32
    %19 = vector.broadcast %cst_12 : f32 to vector<128xf32>
    %20 = arith.addf %19, %18 : vector<128xf32>
    %21 = arith.divf %19, %20 : vector<128xf32>
    %22 = vector.shape_cast %21 : vector<128xf32> to vector<1x128xf32>
    %c0_13 = arith.constant 0 : index
    %c0_14 = arith.constant 0 : index
    %23 = vector.load %arg7[%c0_13, %c0_14] : memref<1x128xf32, #tpu.memory_space<vmem>>, vector<1x128xf32>
    tpu.vector_store %arg7[%c0_13, %c0_14], %22 {strides = array<i32>} : memref<1x128xf32, #tpu.memory_space<vmem>>, vector<1x128xf32>,
    return
  }
  func.func @transform_0(%arg0: i32) -> (i32, i32) {
    %c0_i32 = arith.constant 0 : i32
    %c0_i32_0 = arith.constant 0 : i32
    return %arg0, %c0_i32 : i32, i32
  }
  func.func @transform_1(%arg0: i32) -> (i32, i32) {
    %c0_i32 = arith.constant 0 : i32
    %c0_i32_0 = arith.constant 0 : i32
    return %arg0, %c0_i32 : i32, i32
  }
  func.func @transform_2(%arg0: i32) -> (i32, i32) {
    %c0_i32 = arith.constant 0 : i32
    %c0_i32_0 = arith.constant 0 : i32
    %c0_i32_1 = arith.constant 0 : i32
    return %c0_i32, %c0_i32_0 : i32, i32
  }
  func.func @transform_3(%arg0: i32) -> (i32, i32) {
    %c0_i32 = arith.constant 0 : i32
    %c0_i32_0 = arith.constant 0 : i32
    %c0_i32_1 = arith.constant 0 : i32
    return %c0_i32, %c0_i32_0 : i32, i32
  }
  func.func @transform_4(%arg0: i32) -> (i32, i32) {
    %c0_i32 = arith.constant 0 : i32
    %c0_i32_0 = arith.constant 0 : i32
    %c0_i32_1 = arith.constant 0 : i32
    return %c0_i32, %c0_i32_0 : i32, i32
  }
  func.func @transform_5(%arg0: i32) -> i32 {
    %c0_i32 = arith.constant 0 : i32
    %c0_i32_0 = arith.constant 0 : i32
    return %c0_i32 : i32
  }
  func.func @transform_6(%arg0: i32) -> (i32, i32) {
    %c0_i32 = arith.constant 0 : i32
    %c0_i32_0 = arith.constant 0 : i32
    return %c0_i32, %arg0 : i32, i32
  }
}

</mosaic_0001>

<llo_original>
// kernel: sage_linear_forward.3
$region0: #{sage_linear_forward.3}
  #allocation0 [shape = 'u32[]', space=smem, size = 0x4, offset = 0x4, fixed_abs, tag = 'smem constant byte address 0x4 - core index']
  #allocation1 [shape = 'u32[144,128]{1,0:T(1,128)}', space=vmem, size = 0x12000, scoped, tag = 'internal scratch']
  #allocation2 [shape = 'f32[128,128]{1,0:T(8,128)}', space=vmem, size = 0x10000, scoped, tag = 'scratch operand']
  #allocation3 [shape = 'f32[128,1]{1,0:T(8,128)}', space=vmem, size = 0x10000, scoped, tag = 'scratch operand']
  %s0 = inlined_call_operand.vmem [shape: s8[128,128], index: 0, kind: input, shape index: {}]
  %s1 = inlined_call_operand.vmem [shape: bf16[128,128], index: 1, kind: input, shape index: {}, may-alias: {1,2}]
  %s2 = inlined_call_operand.vmem [shape: bf16[128,128], index: 2, kind: input, shape index: {}, may-alias: {1,2}]
  %s3 = inlined_call_operand.vmem [shape: bf16[128,256], index: 3, kind: input, shape index: {}]
  %s4 = inlined_call_operand.vmem [shape: bf16[128,256], index: 4, kind: input, shape index: {}]
  %s5 = inlined_call_operand.vmem [shape: f32[1,256], index: 5, kind: input, shape index: {}]
  %s6 = inlined_call_operand.vmem [shape: bf16[128,256], index: 6, kind: output, shape index: {}]
  %s7 = sld [smem:[#allocation0]]
  $region42: #{sage_linear_forward.3} parent=0
    _
  %s9 = ssub.s32 1, %s7
  %s10 = scalar_select 0, %s9, %s7
  // Predicated region
  $region2: #{sage_linear_forward.3} parent=0 // pred_check
    _
  $region3: #{sage_linear_forward.3} parent=0 // pred_check_branch
    %12 = sbr.rel (0) target = $region5
  $region4: #{sage_linear_forward.3} parent=0 // pred_region
    _
  $region5: #{sage_linear_forward.3} parent=0 // pred_fallthru
    _
  // Predicated region
  $region6: #{sage_linear_forward.3} parent=0 // pred_check
    _
  $region7: #{sage_linear_forward.3} parent=0 // pred_check_branch
    %14 = sbr.rel (0) target = $region9
  $region8: #{sage_linear_forward.3} parent=0 // pred_region
    _
  $region9: #{sage_linear_forward.3} parent=0 // pred_fallthru
    _
  // Predicated region
  $region10: #{sage_linear_forward.3} parent=0 // pred_check
    _
  $region11: #{sage_linear_forward.3} parent=0 // pred_check_branch
    %16 = sbr.rel (0) target = $region13
  $region12: #{sage_linear_forward.3} parent=0 // pred_region
    _
  $region13: #{sage_linear_forward.3} parent=0 // pred_fallthru
    _
  // Predicated region
  $region14: #{sage_linear_forward.3} parent=0 // pred_check
    _
  $region15: #{sage_linear_forward.3} parent=0 // pred_check_branch
    %18 = sbr.rel (0) target = $region17
  $region16: #{sage_linear_forward.3} parent=0 // pred_region
    _
  $region17: #{sage_linear_forward.3} parent=0 // pred_fallthru
    _
  // Predicated region
  $region18: #{sage_linear_forward.3} parent=0 // pred_check
    _
  $region19: #{sage_linear_forward.3} parent=0 // pred_check_branch
    %20 = sbr.rel (0) target = $region21
  $region20: #{sage_linear_forward.3} parent=0 // pred_region
    _
  $region21: #{sage_linear_forward.3} parent=0 // pred_fallthru
    _
  // Predicated region
  $region22: #{sage_linear_forward.3} parent=0 // pred_check
    _
  $region23: #{sage_linear_forward.3} parent=0 // pred_check_branch
    %22 = sbr.rel (0) target = $region25
  $region24: #{sage_linear_forward.3} parent=0 // pred_region
    _
  $region25: #{sage_linear_forward.3} parent=0 // pred_fallthru
    _
  %p24 = scmp.eq.s32.totalorder 0, 0
  // Predicated region
  $region26: #{sage_linear_forward.3} parent=0 // pred_check
    %p25 = pneg %p24
  $region27: #{sage_linear_forward.3} parent=0 // pred_check_branch
    %27 = sbr.rel (%p25) target = $region29
  $region28: #{sage_linear_forward.3} parent=0 // pred_region
    %28 = vst [vmem:[#allocation2] sm:$0xff] 0.0
    %29 = vst [vmem:[#allocation2 + $0x8] sm:$0xff] 0.0
    %30 = vst [vmem:[#allocation2 + $0x10] sm:$0xff] 0.0
    %31 = vst [vmem:[#allocation2 + $0x18] sm:$0xff] 0.0
    %32 = vst [vmem:[#allocation2 + $0x20] sm:$0xff] 0.0
    %33 = vst [vmem:[#allocation2 + $0x28] sm:$0xff] 0.0
    %34 = vst [vmem:[#allocation2 + $0x30] sm:$0xff] 0.0
    %35 = vst [vmem:[#allocation2 + $0x38] sm:$0xff] 0.0
    %36 = vst [vmem:[#allocation2 + $0x40] sm:$0xff] 0.0
    %37 = vst [vmem:[#allocation2 + $0x48] sm:$0xff] 0.0
    %38 = vst [vmem:[#allocation2 + $0x50] sm:$0xff] 0.0
    %39 = vst [vmem:[#allocation2 + $0x58] sm:$0xff] 0.0
    %40 = vst [vmem:[#allocation2 + $0x60] sm:$0xff] 0.0
    %41 = vst [vmem:[#allocation2 + $0x68] sm:$0xff] 0.0
    %42 = vst [vmem:[#allocation2 + $0x70] sm:$0xff] 0.0
    %43 = vst [vmem:[#allocation2 + $0x78] sm:$0xff] 0.0
    %vm44 = vcmask 7168
    %45 = vst.msk [vmem:[#allocation3] sm:$0xff] %vm44, 0.0
    %46 = vst.msk [vmem:[#allocation3 + $0x8] sm:$0xff] %vm44, 0.0
    %47 = vst.msk [vmem:[#allocation3 + $0x10] sm:$0xff] %vm44, 0.0
    %48 = vst.msk [vmem:[#allocation3 + $0x18] sm:$0xff] %vm44, 0.0
    %49 = vst.msk [vmem:[#allocation3 + $0x20] sm:$0xff] %vm44, 0.0
    %50 = vst.msk [vmem:[#allocation3 + $0x28] sm:$0xff] %vm44, 0.0
    %51 = vst.msk [vmem:[#allocation3 + $0x30] sm:$0xff] %vm44, 0.0
    %52 = vst.msk [vmem:[#allocation3 + $0x38] sm:$0xff] %vm44, 0.0
    %53 = vst.msk [vmem:[#allocation3 + $0x40] sm:$0xff] %vm44, 0.0
    %54 = vst.msk [vmem:[#allocation3 + $0x48] sm:$0xff] %vm44, 0.0
    %55 = vst.msk [vmem:[#allocation3 + $0x50] sm:$0xff] %vm44, 0.0
    %56 = vst.msk [vmem:[#allocation3 + $0x58] sm:$0xff] %vm44, 0.0
    %57 = vst.msk [vmem:[#allocation3 + $0x60] sm:$0xff] %vm44, 0.0
    %58 = vst.msk [vmem:[#allocation3 + $0x68] sm:$0xff] %vm44, 0.0
    %59 = vst.msk [vmem:[#allocation3 + $0x70] sm:$0xff] %vm44, 0.0
    %60 = vst.msk [vmem:[#allocation3 + $0x78] sm:$0xff] %vm44, 0.0
  $region29: #{sage_linear_forward.3} parent=0 // pred_fallthru
    _
  %v61 = vld [vmem:[%s0] sm:$0xff]
  %v62 = vld [vmem:[%s0 + $0x8] sm:$0xff]
  %v63 = vld [vmem:[%s0 + $0x10] sm:$0xff]
  %v64 = vld [vmem:[%s0 + $0x18] sm:$0xff]
  %v65 = vunpack.c.l.s8.bf16 %v61
  %v66 = vunpack.c.h.s8.bf16 %v61
  %v67 = vunpack.c.l.s8.bf16 %v62
  %v68 = vunpack.c.h.s8.bf16 %v62
  %v69 = vunpack.c.l.s8.bf16 %v63
  %v70 = vunpack.c.h.s8.bf16 %v63
  %v71 = vunpack.c.l.s8.bf16 %v64
  %v72 = vunpack.c.h.s8.bf16 %v64
  %v73 = vld [vmem:[#allocation2] sm:$0xff]
  %v74 = vld [vmem:[#allocation2 + $0x8] sm:$0xff]
  %v75 = vld [vmem:[#allocation2 + $0x10] sm:$0xff]
  %v76 = vld [vmem:[#allocation2 + $0x18] sm:$0xff]
  %v77 = vld [vmem:[#allocation2 + $0x20] sm:$0xff]
  %v78 = vld [vmem:[#allocation2 + $0x28] sm:$0xff]
  %v79 = vld [vmem:[#allocation2 + $0x30] sm:$0xff]
  %v80 = vld [vmem:[#allocation2 + $0x38] sm:$0xff]
  %v81 = vld [vmem:[#allocation2 + $0x40] sm:$0xff]
  %v82 = vld [vmem:[#allocation2 + $0x48] sm:$0xff]
  %v83 = vld [vmem:[#allocation2 + $0x50] sm:$0xff]
  %v84 = vld [vmem:[#allocation2 + $0x58] sm:$0xff]
  %v85 = vld [vmem:[#allocation2 + $0x60] sm:$0xff]
  %v86 = vld [vmem:[#allocation2 + $0x68] sm:$0xff]
  %v87 = vld [vmem:[#allocation2 + $0x70] sm:$0xff]
  %v88 = vld [vmem:[#allocation2 + $0x78] sm:$0xff]
  %v89 = vld [vmem:[%s1] sm:$0xf]
  %v90 = vld [vmem:[%s1 + $0x4] sm:$0xf]
  %v91 = vld [vmem:[%s1 + $0x8] sm:$0xf]
  %v92 = vld [vmem:[%s1 + $0xc] sm:$0xf]
  %v93 = vld [vmem:[%s1 + $0x10] sm:$0xf]
  %v94 = vld [vmem:[%s1 + $0x14] sm:$0xf]
  %v95 = vld [vmem:[%s1 + $0x18] sm:$0xf]
  %v96 = vld [vmem:[%s1 + $0x1c] sm:$0xf]
  %v97 = vld [vmem:[%s1 + $0x20] sm:$0xf]
  %v98 = vld [vmem:[%s1 + $0x24] sm:$0xf]
  %v99 = vld [vmem:[%s1 + $0x28] sm:$0xf]
  %v100 = vld [vmem:[%s1 + $0x2c] sm:$0xf]
  %v101 = vld [vmem:[%s1 + $0x30] sm:$0xf]
  %v102 = vld [vmem:[%s1 + $0x34] sm:$0xf]
  %v103 = vld [vmem:[%s1 + $0x38] sm:$0xf]
  %v104 = vld [vmem:[%s1 + $0x3c] sm:$0xf]
  %v121 = vunpack.c.l.b16 %v89
  %v122 = vunpack.c.l.b16 %v90
  %v123 = vunpack.c.l.b16 %v91
  %v124 = vunpack.c.l.b16 %v92
  %v125 = vunpack.c.l.b16 %v93
  %v126 = vunpack.c.l.b16 %v94
  %v127 = vunpack.c.l.b16 %v95
  %v128 = vunpack.c.l.b16 %v96
  %v129 = vunpack.c.l.b16 %v97
  %v130 = vunpack.c.l.b16 %v98
  %v131 = vunpack.c.l.b16 %v99
  %v132 = vunpack.c.l.b16 %v100
  %v133 = vunpack.c.l.b16 %v101
  %v134 = vunpack.c.l.b16 %v102
  %v135 = vunpack.c.l.b16 %v103
  %v136 = vunpack.c.l.b16 %v104
  %v137 = vpack.c.b16 %v122, %v121
  %v138 = vpack.c.b16 %v124, %v123
  %v139 = vpack.c.b16 %v126, %v125
  %v140 = vpack.c.b16 %v128, %v127
  %v141 = vpack.c.b16 %v130, %v129
  %v142 = vpack.c.b16 %v132, %v131
  %v143 = vpack.c.b16 %v134, %v133
  %v144 = vpack.c.b16 %v136, %v135
  %153 = vmatprep.subr.bf16.mxu0 0
  %154 = vmatpush1.bf16.msra.mxu0 %v137
  %155 = vmatprep.subr.bf16.mxu0 0
  %156 = vmatpush1.bf16.msra.mxu0 %v138
  %157 = vmatprep.subr.bf16.mxu0 0
  %158 = vmatpush1.bf16.msra.mxu0 %v139
  %159 = vmatprep.subr.bf16.mxu0 0
  %160 = vmatpush1.bf16.msra.mxu0 %v140
  %161 = vmatprep.subr.bf16.mxu0 0
  %162 = vmatpush1.bf16.msra.mxu0 %v141
  %163 = vmatprep.subr.bf16.mxu0 0
  %164 = vmatpush1.bf16.msra.mxu0 %v142
  %165 = vmatprep.subr.bf16.mxu0 0
  %166 = vmatpush1.bf16.msra.mxu0 %v143
  %167 = vmatprep.subr.bf16.mxu0 0
  %168 = vmatpush1.bf16.msra.mxu0 %v144
  %169 = vmatprep.subr.bf16.mxu0 0
  %170 = vmatpush1.bf16.msra.mxu0 0
  %171 = vmatprep.subr.bf16.mxu0 0
  %172 = vmatpush1.bf16.msra.mxu0 0
  %173 = vmatprep.subr.bf16.mxu0 0
  %174 = vmatpush1.bf16.msra.mxu0 0
  %175 = vmatprep.subr.bf16.mxu0 0
  %176 = vmatpush1.bf16.msra.mxu0 0
  %177 = vmatprep.subr.bf16.mxu0 0
  %178 = vmatpush1.bf16.msra.mxu0 0
  %179 = vmatprep.subr.bf16.mxu0 0
  %180 = vmatpush1.bf16.msra.mxu0 0
  %181 = vmatprep.subr.bf16.mxu0 0
  %182 = vmatpush1.bf16.msra.mxu0 0
  %183 = vmatprep.subr.bf16.mxu0 0
  %184 = vmatpush1.bf16.msra.mxu0 0
  %185 = vmatprep.mubr.bf16.mxu0 0
  %186 = vmatmul.mubr.bf16.gmra.mrb[0].mxu0 %v65
  %v187 = vpop.f32.mrb[0].mxu0
  %v188 = vadd.f32 0.0, %v187
  %v189 = vpop.f32.mrb[0].mxu0
  %v190 = vpop.f32.mrb[0].mxu0
  %v191 = vadd.f32 0.0, %v190
  %v192 = vpop.f32.mrb[0].mxu0
  %193 = vmatprep.mubr.bf16.mxu0 0
  %194 = vmatmul.mubr.bf16.gmra.mrb[0].mxu0 %v66
  %v195 = vpop.f32.mrb[0].mxu0
  %v196 = vadd.f32 0.0, %v195
  %v197 = vpop.f32.mrb[0].mxu0
  %v198 = vpop.f32.mrb[0].mxu0
  %v199 = vadd.f32 0.0, %v198
  %v200 = vpop.f32.mrb[0].mxu0
  %201 = vmatprep.mubr.bf16.mxu0 0
  %202 = vmatmul.mubr.bf16.gmra.mrb[0].mxu0 %v67
  %v203 = vpop.f32.mrb[0].mxu0
  %v204 = vadd.f32 0.0, %v203
  %v205 = vpop.f32.mrb[0].mxu0
  %v206 = vpop.f32.mrb[0].mxu0
  %v207 = vadd.f32 0.0, %v206
  %v208 = vpop.f32.mrb[0].mxu0
  %209 = vmatprep.mubr.bf16.mxu0 0
  %210 = vmatmul.mubr.bf16.gmra.mrb[0].mxu0 %v68
  %v211 = vpop.f32.mrb[0].mxu0
  %v212 = vadd.f32 0.0, %v211
  %v213 = vpop.f32.mrb[0].mxu0
  %v214 = vpop.f32.mrb[0].mxu0
  %v215 = vadd.f32 0.0, %v214
  %v216 = vpop.f32.mrb[0].mxu0
  %217 = vmatprep.mubr.bf16.mxu0 0
  %218 = vmatmul.mubr.bf16.gmra.mrb[0].mxu0 %v69
  %v219 = vpop.f32.mrb[0].mxu0
  %v220 = vadd.f32 0.0, %v219
  %v221 = vpop.f32.mrb[0].mxu0
  %v222 = vpop.f32.mrb[0].mxu0
  %v223 = vadd.f32 0.0, %v222
  %v224 = vpop.f32.mrb[0].mxu0
  %225 = vmatprep.mubr.bf16.mxu0 0
  %226 = vmatmul.mubr.bf16.gmra.mrb[0].mxu0 %v70
  %v227 = vpop.f32.mrb[0].mxu0
  %v228 = vadd.f32 0.0, %v227
  %v229 = vpop.f32.mrb[0].mxu0
  %v230 = vpop.f32.mrb[0].mxu0
  %v231 = vadd.f32 0.0, %v230
  %v232 = vpop.f32.mrb[0].mxu0
  %233 = vmatprep.mubr.bf16.mxu0 0
  %234 = vmatmul.mubr.bf16.gmra.mrb[0].mxu0 %v71
  %v235 = vpop.f32.mrb[0].mxu0
  %v236 = vadd.f32 0.0, %v235
  %v237 = vpop.f32.mrb[0].mxu0
  %v238 = vpop.f32.mrb[0].mxu0
  %v239 = vadd.f32 0.0, %v238
  %v240 = vpop.f32.mrb[0].mxu0
  %241 = vmatprep.mubr.bf16.mxu0 0
  %242 = vmatmul.mubr.bf16.gmra.mrb[0].mxu0 %v72
  %v243 = vpop.f32.mrb[0].mxu0
  %v244 = vadd.f32 0.0, %v243
  %v245 = vpop.f32.mrb[0].mxu0
  %v246 = vpop.f32.mrb[0].mxu0
  %v247 = vadd.f32 0.0, %v246
  %v248 = vpop.f32.mrb[0].mxu0
  %249 = vdwg.mxu0
  %v250 = vadd.f32 %v73, %v188
  %v251 = vadd.f32 %v74, %v191
  %v252 = vadd.f32 %v75, %v196
  %v253 = vadd.f32 %v76, %v199
  %v254 = vadd.f32 %v77, %v204
  %v255 = vadd.f32 %v78, %v207
  %v256 = vadd.f32 %v79, %v212
  %v257 = vadd.f32 %v80, %v215
  %v258 = vadd.f32 %v81, %v220
  %v259 = vadd.f32 %v82, %v223
  %v260 = vadd.f32 %v83, %v228
  %v261 = vadd.f32 %v84, %v231
  %v262 = vadd.f32 %v85, %v236
  %v263 = vadd.f32 %v86, %v239
  %v264 = vadd.f32 %v87, %v244
  %v265 = vadd.f32 %v88, %v247
  %266 = vst [vmem:[#allocation2] sm:$0xff] %v250
  %267 = vst [vmem:[#allocation2 + $0x8] sm:$0xff] %v251
  %268 = vst [vmem:[#allocation2 + $0x10] sm:$0xff] %v252
  %269 = vst [vmem:[#allocation2 + $0x18] sm:$0xff] %v253
  %270 = vst [vmem:[#allocation2 + $0x20] sm:$0xff] %v254
  %271 = vst [vmem:[#allocation2 + $0x28] sm:$0xff] %v255
  %272 = vst [vmem:[#allocation2 + $0x30] sm:$0xff] %v256
  %273 = vst [vmem:[#allocation2 + $0x38] sm:$0xff] %v257
  %274 = vst [vmem:[#allocation2 + $0x40] sm:$0xff] %v258
  %275 = vst [vmem:[#allocation2 + $0x48] sm:$0xff] %v259
  %276 = vst [vmem:[#allocation2 + $0x50] sm:$0xff] %v260
  %277 = vst [vmem:[#allocation2 + $0x58] sm:$0xff] %v261
  %278 = vst [vmem:[#allocation2 + $0x60] sm:$0xff] %v262
  %279 = vst [vmem:[#allocation2 + $0x68] sm:$0xff] %v263
  %280 = vst [vmem:[#allocation2 + $0x70] sm:$0xff] %v264
  %281 = vst [vmem:[#allocation2 + $0x78] sm:$0xff] %v265
  %v282 = vld [vmem:[#allocation3] sm:$0xff]
  %v283 = vld [vmem:[#allocation3 + $0x8] sm:$0xff]
  %v284 = vld [vmem:[#allocation3 + $0x10] sm:$0xff]
  %v285 = vld [vmem:[#allocation3 + $0x18] sm:$0xff]
  %v286 = vld [vmem:[#allocation3 + $0x20] sm:$0xff]
  %v287 = vld [vmem:[#allocation3 + $0x28] sm:$0xff]
  %v288 = vld [vmem:[#allocation3 + $0x30] sm:$0xff]
  %v289 = vld [vmem:[#allocation3 + $0x38] sm:$0xff]
  %v290 = vld [vmem:[#allocation3 + $0x40] sm:$0xff]
  %v291 = vld [vmem:[#allocation3 + $0x48] sm:$0xff]
  %v292 = vld [vmem:[#allocation3 + $0x50] sm:$0xff]
  %v293 = vld [vmem:[#allocation3 + $0x58] sm:$0xff]
  %v294 = vld [vmem:[#allocation3 + $0x60] sm:$0xff]
  %v295 = vld [vmem:[#allocation3 + $0x68] sm:$0xff]
  %v296 = vld [vmem:[#allocation3 + $0x70] sm:$0xff]
  %v297 = vld [vmem:[#allocation3 + $0x78] sm:$0xff]
  %v298 = vunpack.c.l.bf16 %v65
  %v299 = vunpack.c.h.bf16 %v65
  %v300 = vunpack.c.l.bf16 %v66
  %v301 = vunpack.c.h.bf16 %v66
  %v302 = vunpack.c.l.bf16 %v67
  %v303 = vunpack.c.h.bf16 %v67
  %v304 = vunpack.c.l.bf16 %v68
  %v305 = vunpack.c.h.bf16 %v68
  %v306 = vunpack.c.l.bf16 %v69
  %v307 = vunpack.c.h.bf16 %v69
  %v308 = vunpack.c.l.bf16 %v70
  %v309 = vunpack.c.h.bf16 %v70
  %v310 = vunpack.c.l.bf16 %v71
  %v311 = vunpack.c.h.bf16 %v71
  %v312 = vunpack.c.l.bf16 %v72
  %v313 = vunpack.c.h.bf16 %v72
  %314 = vadd.xlane.f32.xlu0 %v298
  %v315 = vpop.xlane.xlu0 %314
  %316 = vadd.xlane.f32.xlu0 %v299
  %v317 = vpop.xlane.xlu0 %316
  %318 = vadd.xlane.f32.xlu0 %v300
  %v319 = vpop.xlane.xlu0 %318
  %320 = vadd.xlane.f32.xlu0 %v301
  %v321 = vpop.xlane.xlu0 %320
  %322 = vadd.xlane.f32.xlu0 %v302
  %v323 = vpop.xlane.xlu0 %322
  %324 = vadd.xlane.f32.xlu0 %v303
  %v325 = vpop.xlane.xlu0 %324
  %326 = vadd.xlane.f32.xlu0 %v304
  %v327 = vpop.xlane.xlu0 %326
  %328 = vadd.xlane.f32.xlu0 %v305
  %v329 = vpop.xlane.xlu0 %328
  %330 = vadd.xlane.f32.xlu0 %v306
  %v331 = vpop.xlane.xlu0 %330
  %332 = vadd.xlane.f32.xlu0 %v307
  %v333 = vpop.xlane.xlu0 %332
  %334 = vadd.xlane.f32.xlu0 %v308
  %v335 = vpop.xlane.xlu0 %334
  %336 = vadd.xlane.f32.xlu0 %v309
  %v337 = vpop.xlane.xlu0 %336
  %338 = vadd.xlane.f32.xlu0 %v310
  %v339 = vpop.xlane.xlu0 %338
  %340 = vadd.xlane.f32.xlu0 %v311
  %v341 = vpop.xlane.xlu0 %340
  %342 = vadd.xlane.f32.xlu0 %v312
  %v343 = vpop.xlane.xlu0 %342
  %344 = vadd.xlane.f32.xlu0 %v313
  %v345 = vpop.xlane.xlu0 %344
  %v346 = vadd.f32 %v282, %v315
  %v347 = vadd.f32 %v283, %v317
  %v348 = vadd.f32 %v284, %v319
  %v349 = vadd.f32 %v285, %v321
  %v350 = vadd.f32 %v286, %v323
  %v351 = vadd.f32 %v287, %v325
  %v352 = vadd.f32 %v288, %v327
  %v353 = vadd.f32 %v289, %v329
  %v354 = vadd.f32 %v290, %v331
  %v355 = vadd.f32 %v291, %v333
  %v356 = vadd.f32 %v292, %v335
  %v357 = vadd.f32 %v293, %v337
  %v358 = vadd.f32 %v294, %v339
  %v359 = vadd.f32 %v295, %v341
  %v360 = vadd.f32 %v296, %v343
  %v361 = vadd.f32 %v297, %v345
  %vm362 = vcmask 7168
  %363 = vst.msk [vmem:[#allocation3] sm:$0xff] %vm362, %v346
  %364 = vst.msk [vmem:[#allocation3 + $0x8] sm:$0xff] %vm362, %v347
  %365 = vst.msk [vmem:[#allocation3 + $0x10] sm:$0xff] %vm362, %v348
  %366 = vst.msk [vmem:[#allocation3 + $0x18] sm:$0xff] %vm362, %v349
  %367 = vst.msk [vmem:[#allocation3 + $0x20] sm:$0xff] %vm362, %v350
  %368 = vst.msk [vmem:[#allocation3 + $0x28] sm:$0xff] %vm362, %v351
  %369 = vst.msk [vmem:[#allocation3 + $0x30] sm:$0xff] %vm362, %v352
  %370 = vst.msk [vmem:[#allocation3 + $0x38] sm:$0xff] %vm362, %v353
  %371 = vst.msk [vmem:[#allocation3 + $0x40] sm:$0xff] %vm362, %v354
  %372 = vst.msk [vmem:[#allocation3 + $0x48] sm:$0xff] %vm362, %v355
  %373 = vst.msk [vmem:[#allocation3 + $0x50] sm:$0xff] %vm362, %v356
  %374 = vst.msk [vmem:[#allocation3 + $0x58] sm:$0xff] %vm362, %v357
  %375 = vst.msk [vmem:[#allocation3 + $0x60] sm:$0xff] %vm362, %v358
  %376 = vst.msk [vmem:[#allocation3 + $0x68] sm:$0xff] %vm362, %v359
  %377 = vst.msk [vmem:[#allocation3 + $0x70] sm:$0xff] %vm362, %v360
  %378 = vst.msk [vmem:[#allocation3 + $0x78] sm:$0xff] %vm362, %v361
  // Predicated region
  $region30: #{sage_linear_forward.3} parent=0 // pred_check
    %p379 = pneg %p24
  $region31: #{sage_linear_forward.3} parent=0 // pred_check_branch
    %381 = sbr.rel (%p379) target = $region33
  $region32: #{sage_linear_forward.3} parent=0 // pred_region
    %v382 = vld [vmem:[#allocation3] sm:$0xff]
    %v383 = vld [vmem:[#allocation3 + $0x8] sm:$0xff]
    %v384 = vld [vmem:[#allocation3 + $0x10] sm:$0xff]
    %v385 = vld [vmem:[#allocation3 + $0x18] sm:$0xff]
    %v386 = vld [vmem:[#allocation3 + $0x20] sm:$0xff]
    %v387 = vld [vmem:[#allocation3 + $0x28] sm:$0xff]
    %v388 = vld [vmem:[#allocation3 + $0x30] sm:$0xff]
    %v389 = vld [vmem:[#allocation3 + $0x38] sm:$0xff]
    %v390 = vld [vmem:[#allocation3 + $0x40] sm:$0xff]
    %v391 = vld [vmem:[#allocation3 + $0x48] sm:$0xff]
    %v392 = vld [vmem:[#allocation3 + $0x50] sm:$0xff]
    %v393 = vld [vmem:[#allocation3 + $0x58] sm:$0xff]
    %v394 = vld [vmem:[#allocation3 + $0x60] sm:$0xff]
    %v395 = vld [vmem:[#allocation3 + $0x68] sm:$0xff]
    %v396 = vld [vmem:[#allocation3 + $0x70] sm:$0xff]
    %v397 = vld [vmem:[#allocation3 + $0x78] sm:$0xff]
    %vm398 = vcmp.gt.f32.partialorder %v382, 0.0
    %vm399 = vcmp.gt.f32.partialorder %v383, 0.0
    %vm400 = vcmp.gt.f32.partialorder %v384, 0.0
    %vm401 = vcmp.gt.f32.partialorder %v385, 0.0
    %vm402 = vcmp.gt.f32.partialorder %v386, 0.0
    %vm403 = vcmp.gt.f32.partialorder %v387, 0.0
    %vm404 = vcmp.gt.f32.partialorder %v388, 0.0
    %vm405 = vcmp.gt.f32.partialorder %v389, 0.0
    %vm406 = vcmp.gt.f32.partialorder %v390, 0.0
    %vm407 = vcmp.gt.f32.partialorder %v391, 0.0
    %vm408 = vcmp.gt.f32.partialorder %v392, 0.0
    %vm409 = vcmp.gt.f32.partialorder %v393, 0.0
    %vm410 = vcmp.gt.f32.partialorder %v394, 0.0
    %vm411 = vcmp.gt.f32.partialorder %v395, 0.0
    %vm412 = vcmp.gt.f32.partialorder %v396, 0.0
    %vm413 = vcmp.gt.f32.partialorder %v397, 0.0
    %v414 = vmax.f32 %v382, 1.0
    %v415 = vmax.f32 %v383, 1.0
    %v416 = vmax.f32 %v384, 1.0
    %v417 = vmax.f32 %v385, 1.0
    %v418 = vmax.f32 %v386, 1.0
    %v419 = vmax.f32 %v387, 1.0
    %v420 = vmax.f32 %v388, 1.0
    %v421 = vmax.f32 %v389, 1.0
    %v422 = vmax.f32 %v390, 1.0
    %v423 = vmax.f32 %v391, 1.0
    %v424 = vmax.f32 %v392, 1.0
    %v425 = vmax.f32 %v393, 1.0
    %v426 = vmax.f32 %v394, 1.0
    %v427 = vmax.f32 %v395, 1.0
    %v428 = vmax.f32 %v396, 1.0
    %v429 = vmax.f32 %v397, 1.0
    %v430 = vrcp.pop %v414
    %v431 = vmul.f32 1.0, %v430
    %v432 = vrcp.pop %v415
    %v433 = vmul.f32 1.0, %v432
    %v434 = vrcp.pop %v416
    %v435 = vmul.f32 1.0, %v434
    %v436 = vrcp.pop %v417
    %v437 = vmul.f32 1.0, %v436
    %v438 = vrcp.pop %v418
    %v439 = vmul.f32 1.0, %v438
    %v440 = vrcp.pop %v419
    %v441 = vmul.f32 1.0, %v440
    %v442 = vrcp.pop %v420
    %v443 = vmul.f32 1.0, %v442
    %v444 = vrcp.pop %v421
    %v445 = vmul.f32 1.0, %v444
    %v446 = vrcp.pop %v422
    %v447 = vmul.f32 1.0, %v446
    %v448 = vrcp.pop %v423
    %v449 = vmul.f32 1.0, %v448
    %v450 = vrcp.pop %v424
    %v451 = vmul.f32 1.0, %v450
    %v452 = vrcp.pop %v425
    %v453 = vmul.f32 1.0, %v452
    %v454 = vrcp.pop %v426
    %v455 = vmul.f32 1.0, %v454
    %v456 = vrcp.pop %v427
    %v457 = vmul.f32 1.0, %v456
    %v458 = vrcp.pop %v428
    %v459 = vmul.f32 1.0, %v458
    %v460 = vrcp.pop %v429
    %v461 = vmul.f32 1.0, %v460
    %v462 = vsel %vm398, %v431, 0.0
    %v463 = vsel %vm399, %v433, 0.0
    %v464 = vsel %vm400, %v435, 0.0
    %v465 = vsel %vm401, %v437, 0.0
    %v466 = vsel %vm402, %v439, 0.0
    %v467 = vsel %vm403, %v441, 0.0
    %v468 = vsel %vm404, %v443, 0.0
    %v469 = vsel %vm405, %v445, 0.0
    %v470 = vsel %vm406, %v447, 0.0
    %v471 = vsel %vm407, %v449, 0.0
    %v472 = vsel %vm408, %v451, 0.0
    %v473 = vsel %vm409, %v453, 0.0
    %v474 = vsel %vm410, %v455, 0.0
    %v475 = vsel %vm411, %v457, 0.0
    %v476 = vsel %vm412, %v459, 0.0
    %v477 = vsel %vm413, %v461, 0.0
    %v478 = vld [vmem:[#allocation2] sm:$0xff]
    %v479 = vld [vmem:[#allocation2 + $0x8] sm:$0xff]
    %v480 = vld [vmem:[#allocation2 + $0x10] sm:$0xff]
    %v481 = vld [vmem:[#allocation2 + $0x18] sm:$0xff]
    %v482 = vld [vmem:[#allocation2 + $0x20] sm:$0xff]
    %v483 = vld [vmem:[#allocation2 + $0x28] sm:$0xff]
    %v484 = vld [vmem:[#allocation2 + $0x30] sm:$0xff]
    %v485 = vld [vmem:[#allocation2 + $0x38] sm:$0xff]
    %v486 = vld [vmem:[#allocation2 + $0x40] sm:$0xff]
    %v487 = vld [vmem:[#allocation2 + $0x48] sm:$0xff]
    %v488 = vld [vmem:[#allocation2 + $0x50] sm:$0xff]
    %v489 = vld [vmem:[#allocation2 + $0x58] sm:$0xff]
    %v490 = vld [vmem:[#allocation2 + $0x60] sm:$0xff]
    %v491 = vld [vmem:[#allocation2 + $0x68] sm:$0xff]
    %v492 = vld [vmem:[#allocation2 + $0x70] sm:$0xff]
    %v493 = vld [vmem:[#allocation2 + $0x78] sm:$0xff]
    %495 = vset.pattern.permute.xlu0 0
    %496 = vperm.xlu0 %495, %v462
    %v497 = vpop.permute.xlu0 %496
    %500 = vset.pattern.permute.xlu0 0
    %501 = vperm.xlu0 %500, %v463
    %v502 = vpop.permute.xlu0 %501
    %505 = vset.pattern.permute.xlu0 0
    %506 = vperm.xlu0 %505, %v464
    %v507 = vpop.permute.xlu0 %506
    %510 = vset.pattern.permute.xlu0 0
    %511 = vperm.xlu0 %510, %v465
    %v512 = vpop.permute.xlu0 %511
    %515 = vset.pattern.permute.xlu0 0
    %516 = vperm.xlu0 %515, %v466
    %v517 = vpop.permute.xlu0 %516
    %520 = vset.pattern.permute.xlu0 0
    %521 = vperm.xlu0 %520, %v467
    %v522 = vpop.permute.xlu0 %521
    %525 = vset.pattern.permute.xlu0 0
    %526 = vperm.xlu0 %525, %v468
    %v527 = vpop.permute.xlu0 %526
    %530 = vset.pattern.permute.xlu0 0
    %531 = vperm.xlu0 %530, %v469
    %v532 = vpop.permute.xlu0 %531
    %535 = vset.pattern.permute.xlu0 0
    %536 = vperm.xlu0 %535, %v470
    %v537 = vpop.permute.xlu0 %536
    %540 = vset.pattern.permute.xlu0 0
    %541 = vperm.xlu0 %540, %v471
    %v542 = vpop.permute.xlu0 %541
    %545 = vset.pattern.permute.xlu0 0
    %546 = vperm.xlu0 %545, %v472
    %v547 = vpop.permute.xlu0 %546
    %550 = vset.pattern.permute.xlu0 0
    %551 = vperm.xlu0 %550, %v473
    %v552 = vpop.permute.xlu0 %551
    %555 = vset.pattern.permute.xlu0 0
    %556 = vperm.xlu0 %555, %v474
    %v557 = vpop.permute.xlu0 %556
    %560 = vset.pattern.permute.xlu0 0
    %561 = vperm.xlu0 %560, %v475
    %v562 = vpop.permute.xlu0 %561
    %565 = vset.pattern.permute.xlu0 0
    %566 = vperm.xlu0 %565, %v476
    %v567 = vpop.permute.xlu0 %566
    %570 = vset.pattern.permute.xlu0 0
    %571 = vperm.xlu0 %570, %v477
    %v572 = vpop.permute.xlu0 %571
    %v574 = vmul.f32 %v478, %v497
    %v575 = vmul.f32 %v479, %v502
    %v576 = vmul.f32 %v480, %v507
    %v577 = vmul.f32 %v481, %v512
    %v578 = vmul.f32 %v482, %v517
    %v579 = vmul.f32 %v483, %v522
    %v580 = vmul.f32 %v484, %v527
    %v581 = vmul.f32 %v485, %v532
    %v582 = vmul.f32 %v486, %v537
    %v583 = vmul.f32 %v487, %v542
    %v584 = vmul.f32 %v488, %v547
    %v585 = vmul.f32 %v489, %v552
    %v586 = vmul.f32 %v490, %v557
    %v587 = vmul.f32 %v491, %v562
    %v588 = vmul.f32 %v492, %v567
    %v589 = vmul.f32 %v493, %v572
    %v590 = vpack.c.bf16 %v575, %v574
    %v591 = vpack.c.bf16 %v577, %v576
    %v592 = vpack.c.bf16 %v579, %v578
    %v593 = vpack.c.bf16 %v581, %v580
    %v594 = vpack.c.bf16 %v583, %v582
    %v595 = vpack.c.bf16 %v585, %v584
    %v596 = vpack.c.bf16 %v587, %v586
    %v597 = vpack.c.bf16 %v589, %v588
    %v598 = vld [vmem:[%s3] sm:$0xff]
    %v599 = vld [vmem:[%s3 + $0x8] sm:$0xff]
    %v600 = vld [vmem:[%s3 + $0x10] sm:$0xff]
    %v601 = vld [vmem:[%s3 + $0x18] sm:$0xff]
    %v602 = vld [vmem:[%s3 + $0x20] sm:$0xff]
    %v603 = vld [vmem:[%s3 + $0x28] sm:$0xff]
    %v604 = vld [vmem:[%s3 + $0x30] sm:$0xff]
    %v605 = vld [vmem:[%s3 + $0x38] sm:$0xff]
    %v606 = vld [vmem:[%s3 + $0x40] sm:$0xff]
    %v607 = vld [vmem:[%s3 + $0x48] sm:$0xff]
    %v608 = vld [vmem:[%s3 + $0x50] sm:$0xff]
    %v609 = vld [vmem:[%s3 + $0x58] sm:$0xff]
    %v610 = vld [vmem:[%s3 + $0x60] sm:$0xff]
    %v611 = vld [vmem:[%s3 + $0x68] sm:$0xff]
    %v612 = vld [vmem:[%s3 + $0x70] sm:$0xff]
    %v613 = vld [vmem:[%s3 + $0x78] sm:$0xff]
    %v614 = vld [vmem:[%s2] sm:$0xf]
    %v615 = vld [vmem:[%s2 + $0x4] sm:$0xf]
    %v616 = vld [vmem:[%s2 + $0x8] sm:$0xf]
    %v617 = vld [vmem:[%s2 + $0xc] sm:$0xf]
    %v618 = vld [vmem:[%s2 + $0x10] sm:$0xf]
    %v619 = vld [vmem:[%s2 + $0x14] sm:$0xf]
    %v620 = vld [vmem:[%s2 + $0x18] sm:$0xf]
    %v621 = vld [vmem:[%s2 + $0x1c] sm:$0xf]
    %v622 = vld [vmem:[%s2 + $0x20] sm:$0xf]
    %v623 = vld [vmem:[%s2 + $0x24] sm:$0xf]
    %v624 = vld [vmem:[%s2 + $0x28] sm:$0xf]
    %v625 = vld [vmem:[%s2 + $0x2c] sm:$0xf]
    %v626 = vld [vmem:[%s2 + $0x30] sm:$0xf]
    %v627 = vld [vmem:[%s2 + $0x34] sm:$0xf]
    %v628 = vld [vmem:[%s2 + $0x38] sm:$0xf]
    %v629 = vld [vmem:[%s2 + $0x3c] sm:$0xf]
    %v630 = vld [vmem:[%s4] sm:$0xff]
    %v631 = vld [vmem:[%s4 + $0x8] sm:$0xff]
    %v632 = vld [vmem:[%s4 + $0x10] sm:$0xff]
    %v633 = vld [vmem:[%s4 + $0x18] sm:$0xff]
    %v634 = vld [vmem:[%s4 + $0x20] sm:$0xff]
    %v635 = vld [vmem:[%s4 + $0x28] sm:$0xff]
    %v636 = vld [vmem:[%s4 + $0x30] sm:$0xff]
    %v637 = vld [vmem:[%s4 + $0x38] sm:$0xff]
    %v638 = vld [vmem:[%s4 + $0x40] sm:$0xff]
    %v639 = vld [vmem:[%s4 + $0x48] sm:$0xff]
    %v640 = vld [vmem:[%s4 + $0x50] sm:$0xff]
    %v641 = vld [vmem:[%s4 + $0x58] sm:$0xff]
    %v642 = vld [vmem:[%s4 + $0x60] sm:$0xff]
    %v643 = vld [vmem:[%s4 + $0x68] sm:$0xff]
    %v644 = vld [vmem:[%s4 + $0x70] sm:$0xff]
    %v645 = vld [vmem:[%s4 + $0x78] sm:$0xff]
    %v662 = vunpack.c.l.b16 %v614
    %v663 = vunpack.c.l.b16 %v615
    %v664 = vunpack.c.l.b16 %v616
    %v665 = vunpack.c.l.b16 %v617
    %v666 = vunpack.c.l.b16 %v618
    %v667 = vunpack.c.l.b16 %v619
    %v668 = vunpack.c.l.b16 %v620
    %v669 = vunpack.c.l.b16 %v621
    %v670 = vunpack.c.l.b16 %v622
    %v671 = vunpack.c.l.b16 %v623
    %v672 = vunpack.c.l.b16 %v624
    %v673 = vunpack.c.l.b16 %v625
    %v674 = vunpack.c.l.b16 %v626
    %v675 = vunpack.c.l.b16 %v627
    %v676 = vunpack.c.l.b16 %v628
    %v677 = vunpack.c.l.b16 %v629
    %v678 = vpack.c.b16 %v663, %v662
    %v679 = vpack.c.b16 %v665, %v664
    %v680 = vpack.c.b16 %v667, %v666
    %v681 = vpack.c.b16 %v669, %v668
    %v682 = vpack.c.b16 %v671, %v670
    %v683 = vpack.c.b16 %v673, %v672
    %v684 = vpack.c.b16 %v675, %v674
    %v685 = vpack.c.b16 %v677, %v676
    %v710 = vunpack.c.l.b16 %v630
    %v711 = vunpack.c.h.b16 %v630
    %v712 = vunpack.c.l.b16 %v631
    %v713 = vunpack.c.h.b16 %v631
    %v714 = vunpack.c.l.b16 %v632
    %v715 = vunpack.c.h.b16 %v632
    %v716 = vunpack.c.l.b16 %v633
    %v717 = vunpack.c.h.b16 %v633
    %v718 = vunpack.c.l.b16 %v634
    %v719 = vunpack.c.h.b16 %v634
    %v720 = vunpack.c.l.b16 %v635
    %v721 = vunpack.c.h.b16 %v635
    %v722 = vunpack.c.l.b16 %v636
    %v723 = vunpack.c.h.b16 %v636
    %v724 = vunpack.c.l.b16 %v637
    %v725 = vunpack.c.h.b16 %v637
    %v726 = vunpack.c.l.b16 %v638
    %v727 = vunpack.c.h.b16 %v638
    %v728 = vunpack.c.l.b16 %v639
    %v729 = vunpack.c.h.b16 %v639
    %v730 = vunpack.c.l.b16 %v640
    %v731 = vunpack.c.h.b16 %v640
    %v732 = vunpack.c.l.b16 %v641
    %v733 = vunpack.c.h.b16 %v641
    %v734 = vunpack.c.l.b16 %v642
    %v735 = vunpack.c.h.b16 %v642
    %v736 = vunpack.c.l.b16 %v643
    %v737 = vunpack.c.h.b16 %v643
    %v738 = vunpack.c.l.b16 %v644
    %v739 = vunpack.c.h.b16 %v644
    %v740 = vunpack.c.l.b16 %v645
    %v741 = vunpack.c.h.b16 %v645
    %v742 = vpack.c.b16 %v712, %v710
    %v743 = vpack.c.b16 %v713, %v711
    %v744 = vpack.c.b16 %v716, %v714
    %v745 = vpack.c.b16 %v717, %v715
    %v746 = vpack.c.b16 %v720, %v718
    %v747 = vpack.c.b16 %v721, %v719
    %v748 = vpack.c.b16 %v724, %v722
    %v749 = vpack.c.b16 %v725, %v723
    %v750 = vpack.c.b16 %v728, %v726
    %v751 = vpack.c.b16 %v729, %v727
    %v752 = vpack.c.b16 %v732, %v730
    %v753 = vpack.c.b16 %v733, %v731
    %v754 = vpack.c.b16 %v736, %v734
    %v755 = vpack.c.b16 %v737, %v735
    %v756 = vpack.c.b16 %v740, %v738
    %v757 = vpack.c.b16 %v741, %v739
    %774 = vmatprep.subr.bf16.mxu0 %v743
    %775 = vmatpush1.bf16.msra.mxu0 %v742
    %776 = vmatprep.subr.bf16.mxu0 %v745
    %777 = vmatpush1.bf16.msra.mxu0 %v744
    %778 = vmatprep.subr.bf16.mxu0 %v747
    %779 = vmatpush1.bf16.msra.mxu0 %v746
    %780 = vmatprep.subr.bf16.mxu0 %v749
    %781 = vmatpush1.bf16.msra.mxu0 %v748
    %782 = vmatprep.subr.bf16.mxu0 %v751
    %783 = vmatpush1.bf16.msra.mxu0 %v750
    %784 = vmatprep.subr.bf16.mxu0 %v753
    %785 = vmatpush1.bf16.msra.mxu0 %v752
    %786 = vmatprep.subr.bf16.mxu0 %v755
    %787 = vmatpush1.bf16.msra.mxu0 %v754
    %788 = vmatprep.subr.bf16.mxu0 %v757
    %789 = vmatpush1.bf16.msra.mxu0 %v756
    %790 = vmatprep.subr.bf16.mxu0 0
    %791 = vmatpush1.bf16.msra.mxu0 0
    %792 = vmatprep.subr.bf16.mxu0 0
    %793 = vmatpush1.bf16.msra.mxu0 0
    %794 = vmatprep.subr.bf16.mxu0 0
    %795 = vmatpush1.bf16.msra.mxu0 0
    %796 = vmatprep.subr.bf16.mxu0 0
    %797 = vmatpush1.bf16.msra.mxu0 0
    %798 = vmatprep.subr.bf16.mxu0 0
    %799 = vmatpush1.bf16.msra.mxu0 0
    %800 = vmatprep.subr.bf16.mxu0 0
    %801 = vmatpush1.bf16.msra.mxu0 0
    %802 = vmatprep.subr.bf16.mxu0 0
    %803 = vmatpush1.bf16.msra.mxu0 0
    %804 = vmatprep.subr.bf16.mxu0 0
    %805 = vmatpush1.bf16.msra.mxu0 0
    %806 = vmatprep.mubr.bf16.mxu0 0
    %807 = vmatmul.mubr.bf16.gmra.mrb[0].mxu0 %v678
    %v808 = vpop.f32.mrb[0].mxu0
    %v809 = vadd.f32 0.0, %v808
    %v810 = vpop.f32.mrb[0].mxu0
    %v811 = vadd.f32 0.0, %v810
    %v812 = vpop.f32.mrb[0].mxu0
    %v813 = vadd.f32 0.0, %v812
    %v814 = vpop.f32.mrb[0].mxu0
    %v815 = vadd.f32 0.0, %v814
    %816 = vmatprep.mubr.bf16.mxu0 0
    %817 = vmatmul.mubr.bf16.gmra.mrb[0].mxu0 %v679
    %v818 = vpop.f32.mrb[0].mxu0
    %v819 = vadd.f32 0.0, %v818
    %v820 = vpop.f32.mrb[0].mxu0
    %v821 = vadd.f32 0.0, %v820
    %v822 = vpop.f32.mrb[0].mxu0
    %v823 = vadd.f32 0.0, %v822
    %v824 = vpop.f32.mrb[0].mxu0
    %v825 = vadd.f32 0.0, %v824
    %826 = vmatprep.mubr.bf16.mxu0 0
    %827 = vmatmul.mubr.bf16.gmra.mrb[0].mxu0 %v680
    %v828 = vpop.f32.mrb[0].mxu0
    %v829 = vadd.f32 0.0, %v828
    %v830 = vpop.f32.mrb[0].mxu0
    %v831 = vadd.f32 0.0, %v830
    %v832 = vpop.f32.mrb[0].mxu0
    %v833 = vadd.f32 0.0, %v832
    %v834 = vpop.f32.mrb[0].mxu0
    %v835 = vadd.f32 0.0, %v834
    %836 = vmatprep.mubr.bf16.mxu0 0
    %837 = vmatmul.mubr.bf16.gmra.mrb[0].mxu0 %v681
    %v838 = vpop.f32.mrb[0].mxu0
    %v839 = vadd.f32 0.0, %v838
    %v840 = vpop.f32.mrb[0].mxu0
    %v841 = vadd.f32 0.0, %v840
    %v842 = vpop.f32.mrb[0].mxu0
    %v843 = vadd.f32 0.0, %v842
    %v844 = vpop.f32.mrb[0].mxu0
    %v845 = vadd.f32 0.0, %v844
    %846 = vmatprep.mubr.bf16.mxu0 0
    %847 = vmatmul.mubr.bf16.gmra.mrb[0].mxu0 %v682
    %v848 = vpop.f32.mrb[0].mxu0
    %v849 = vadd.f32 0.0, %v848
    %v850 = vpop.f32.mrb[0].mxu0
    %v851 = vadd.f32 0.0, %v850
    %v852 = vpop.f32.mrb[0].mxu0
    %v853 = vadd.f32 0.0, %v852
    %v854 = vpop.f32.mrb[0].mxu0
    %v855 = vadd.f32 0.0, %v854
    %856 = vmatprep.mubr.bf16.mxu0 0
    %857 = vmatmul.mubr.bf16.gmra.mrb[0].mxu0 %v683
    %v858 = vpop.f32.mrb[0].mxu0
    %v859 = vadd.f32 0.0, %v858
    %v860 = vpop.f32.mrb[0].mxu0
    %v861 = vadd.f32 0.0, %v860
    %v862 = vpop.f32.mrb[0].mxu0
    %v863 = vadd.f32 0.0, %v862
    %v864 = vpop.f32.mrb[0].mxu0
    %v865 = vadd.f32 0.0, %v864
    %866 = vmatprep.mubr.bf16.mxu0 0
    %867 = vmatmul.mubr.bf16.gmra.mrb[0].mxu0 %v684
    %v868 = vpop.f32.mrb[0].mxu0
    %v869 = vadd.f32 0.0, %v868
    %v870 = vpop.f32.mrb[0].mxu0
    %v871 = vadd.f32 0.0, %v870
    %v872 = vpop.f32.mrb[0].mxu0
    %v873 = vadd.f32 0.0, %v872
    %v874 = vpop.f32.mrb[0].mxu0
    %v875 = vadd.f32 0.0, %v874
    %876 = vmatprep.mubr.bf16.mxu0 0
    %877 = vmatmul.mubr.bf16.gmra.mrb[0].mxu0 %v685
    %v878 = vpop.f32.mrb[0].mxu0
    %v879 = vadd.f32 0.0, %v878
    %v880 = vpop.f32.mrb[0].mxu0
    %v881 = vadd.f32 0.0, %v880
    %v882 = vpop.f32.mrb[0].mxu0
    %v883 = vadd.f32 0.0, %v882
    %v884 = vpop.f32.mrb[0].mxu0
    %v885 = vadd.f32 0.0, %v884
    %886 = vdwg.mxu0
    %v903 = vunpack.c.l.b16 %v598
    %v904 = vunpack.c.h.b16 %v598
    %v905 = vunpack.c.l.b16 %v599
    %v906 = vunpack.c.h.b16 %v599
    %v907 = vunpack.c.l.b16 %v600
    %v908 = vunpack.c.h.b16 %v600
    %v909 = vunpack.c.l.b16 %v601
    %v910 = vunpack.c.h.b16 %v601
    %v911 = vunpack.c.l.b16 %v602
    %v912 = vunpack.c.h.b16 %v602
    %v913 = vunpack.c.l.b16 %v603
    %v914 = vunpack.c.h.b16 %v603
    %v915 = vunpack.c.l.b16 %v604
    %v916 = vunpack.c.h.b16 %v604
    %v917 = vunpack.c.l.b16 %v605
    %v918 = vunpack.c.h.b16 %v605
    %v919 = vunpack.c.l.b16 %v606
    %v920 = vunpack.c.h.b16 %v606
    %v921 = vunpack.c.l.b16 %v607
    %v922 = vunpack.c.h.b16 %v607
    %v923 = vunpack.c.l.b16 %v608
    %v924 = vunpack.c.h.b16 %v608
    %v925 = vunpack.c.l.b16 %v609
    %v926 = vunpack.c.h.b16 %v609
    %v927 = vunpack.c.l.b16 %v610
    %v928 = vunpack.c.h.b16 %v610
    %v929 = vunpack.c.l.b16 %v611
    %v930 = vunpack.c.h.b16 %v611
    %v931 = vunpack.c.l.b16 %v612
    %v932 = vunpack.c.h.b16 %v612
    %v933 = vunpack.c.l.b16 %v613
    %v934 = vunpack.c.h.b16 %v613
    %v935 = vpack.c.b16 %v905, %v903
    %v936 = vpack.c.b16 %v906, %v904
    %v937 = vpack.c.b16 %v909, %v907
    %v938 = vpack.c.b16 %v910, %v908
    %v939 = vpack.c.b16 %v913, %v911
    %v940 = vpack.c.b16 %v914, %v912
    %v941 = vpack.c.b16 %v917, %v915
    %v942 = vpack.c.b16 %v918, %v916
    %v943 = vpack.c.b16 %v921, %v919
    %v944 = vpack.c.b16 %v922, %v920
    %v945 = vpack.c.b16 %v925, %v923
    %v946 = vpack.c.b16 %v926, %v924
    %v947 = vpack.c.b16 %v929, %v927
    %v948 = vpack.c.b16 %v930, %v928
    %v949 = vpack.c.b16 %v933, %v931
    %v950 = vpack.c.b16 %v934, %v932
    %967 = vmatprep.subr.bf16.mxu0 %v936
    %968 = vmatpush1.bf16.msra.mxu0 %v935
    %969 = vmatprep.subr.bf16.mxu0 %v938
    %970 = vmatpush1.bf16.msra.mxu0 %v937
    %971 = vmatprep.subr.bf16.mxu0 %v940
    %972 = vmatpush1.bf16.msra.mxu0 %v939
    %973 = vmatprep.subr.bf16.mxu0 %v942
    %974 = vmatpush1.bf16.msra.mxu0 %v941
    %975 = vmatprep.subr.bf16.mxu0 %v944
    %976 = vmatpush1.bf16.msra.mxu0 %v943
    %977 = vmatprep.subr.bf16.mxu0 %v946
    %978 = vmatpush1.bf16.msra.mxu0 %v945
    %979 = vmatprep.subr.bf16.mxu0 %v948
    %980 = vmatpush1.bf16.msra.mxu0 %v947
    %981 = vmatprep.subr.bf16.mxu0 %v950
    %982 = vmatpush1.bf16.msra.mxu0 %v949
    %983 = vmatprep.subr.bf16.mxu0 0
    %984 = vmatpush1.bf16.msra.mxu0 0
    %985 = vmatprep.subr.bf16.mxu0 0
    %986 = vmatpush1.bf16.msra.mxu0 0
    %987 = vmatprep.subr.bf16.mxu0 0
    %988 = vmatpush1.bf16.msra.mxu0 0
    %989 = vmatprep.subr.bf16.mxu0 0
    %990 = vmatpush1.bf16.msra.mxu0 0
    %991 = vmatprep.subr.bf16.mxu0 0
    %992 = vmatpush1.bf16.msra.mxu0 0
    %993 = vmatprep.subr.bf16.mxu0 0
    %994 = vmatpush1.bf16.msra.mxu0 0
    %995 = vmatprep.subr.bf16.mxu0 0
    %996 = vmatpush1.bf16.msra.mxu0 0
    %997 = vmatprep.subr.bf16.mxu0 0
    %998 = vmatpush1.bf16.msra.mxu0 0
    %999 = vmatprep.mubr.bf16.mxu0 0
    %1000 = vmatmul.mubr.bf16.gmra.mrb[0].mxu0 %v590
    %v1001 = vpop.f32.mrb[0].mxu0
    %v1002 = vadd.f32 %v809, %v1001
    %v1003 = vpop.f32.mrb[0].mxu0
    %v1004 = vadd.f32 %v811, %v1003
    %v1005 = vpop.f32.mrb[0].mxu0
    %v1006 = vadd.f32 %v813, %v1005
    %v1007 = vpop.f32.mrb[0].mxu0
    %v1008 = vadd.f32 %v815, %v1007
    %1009 = vmatprep.mubr.bf16.mxu0 0
    %1010 = vmatmul.mubr.bf16.gmra.mrb[0].mxu0 %v591
    %v1011 = vpop.f32.mrb[0].mxu0
    %v1012 = vadd.f32 %v819, %v1011
    %v1013 = vpop.f32.mrb[0].mxu0
    %v1014 = vadd.f32 %v821, %v1013
    %v1015 = vpop.f32.mrb[0].mxu0
    %v1016 = vadd.f32 %v823, %v1015
    %v1017 = vpop.f32.mrb[0].mxu0
    %v1018 = vadd.f32 %v825, %v1017
    %1019 = vmatprep.mubr.bf16.mxu0 0
    %1020 = vmatmul.mubr.bf16.gmra.mrb[0].mxu0 %v592
    %v1021 = vpop.f32.mrb[0].mxu0
    %v1022 = vadd.f32 %v829, %v1021
    %v1023 = vpop.f32.mrb[0].mxu0
    %v1024 = vadd.f32 %v831, %v1023
    %v1025 = vpop.f32.mrb[0].mxu0
    %v1026 = vadd.f32 %v833, %v1025
    %v1027 = vpop.f32.mrb[0].mxu0
    %v1028 = vadd.f32 %v835, %v1027
    %1029 = vmatprep.mubr.bf16.mxu0 0
    %1030 = vmatmul.mubr.bf16.gmra.mrb[0].mxu0 %v593
    %v1031 = vpop.f32.mrb[0].mxu0
    %v1032 = vadd.f32 %v839, %v1031
    %v1033 = vpop.f32.mrb[0].mxu0
    %v1034 = vadd.f32 %v841, %v1033
    %v1035 = vpop.f32.mrb[0].mxu0
    %v1036 = vadd.f32 %v843, %v1035
    %v1037 = vpop.f32.mrb[0].mxu0
    %v1038 = vadd.f32 %v845, %v1037
    %1039 = vmatprep.mubr.bf16.mxu0 0
    %1040 = vmatmul.mubr.bf16.gmra.mrb[0].mxu0 %v594
    %v1041 = vpop.f32.mrb[0].mxu0
    %v1042 = vadd.f32 %v849, %v1041
    %v1043 = vpop.f32.mrb[0].mxu0
    %v1044 = vadd.f32 %v851, %v1043
    %v1045 = vpop.f32.mrb[0].mxu0
    %v1046 = vadd.f32 %v853, %v1045
    %v1047 = vpop.f32.mrb[0].mxu0
    %v1048 = vadd.f32 %v855, %v1047
    %1049 = vmatprep.mubr.bf16.mxu0 0
    %1050 = vmatmul.mubr.bf16.gmra.mrb[0].mxu0 %v595
    %v1051 = vpop.f32.mrb[0].mxu0
    %v1052 = vadd.f32 %v859, %v1051
    %v1053 = vpop.f32.mrb[0].mxu0
    %v1054 = vadd.f32 %v861, %v1053
    %v1055 = vpop.f32.mrb[0].mxu0
    %v1056 = vadd.f32 %v863, %v1055
    %v1057 = vpop.f32.mrb[0].mxu0
    %v1058 = vadd.f32 %v865, %v1057
    %1059 = vmatprep.mubr.bf16.mxu0 0
    %1060 = vmatmul.mubr.bf16.gmra.mrb[0].mxu0 %v596
    %v1061 = vpop.f32.mrb[0].mxu0
    %v1062 = vadd.f32 %v869, %v1061
    %v1063 = vpop.f32.mrb[0].mxu0
    %v1064 = vadd.f32 %v871, %v1063
    %v1065 = vpop.f32.mrb[0].mxu0
    %v1066 = vadd.f32 %v873, %v1065
    %v1067 = vpop.f32.mrb[0].mxu0
    %v1068 = vadd.f32 %v875, %v1067
    %1069 = vmatprep.mubr.bf16.mxu0 0
    %1070 = vmatmul.mubr.bf16.gmra.mrb[0].mxu0 %v597
    %v1071 = vpop.f32.mrb[0].mxu0
    %v1072 = vadd.f32 %v879, %v1071
    %v1073 = vpop.f32.mrb[0].mxu0
    %v1074 = vadd.f32 %v881, %v1073
    %v1075 = vpop.f32.mrb[0].mxu0
    %v1076 = vadd.f32 %v883, %v1075
    %v1077 = vpop.f32.mrb[0].mxu0
    %v1078 = vadd.f32 %v885, %v1077
    %1079 = vdwg.mxu0
    %v1080 = vld [vmem:[%s5] sm:$0x3]
    %v1082 = vlaneseq
    %v1083 = vshrl.u32 %v1082, 7
    %v1084 = vsub.s32 0, %v1083
    %v1085 = vrot.slane %v1080, %v1084
    %v1086 = vlaneseq
    %v1087 = vshrl.u32 %v1086, 7
    %v1088 = vsub.s32 1, %v1087
    %v1089 = vrot.slane %v1080, %v1088
    %v1092 = vadd.f32 %v1002, %v1085
    %v1093 = vadd.f32 %v1004, %v1089
    %v1094 = vadd.f32 %v1006, %v1085
    %v1095 = vadd.f32 %v1008, %v1089
    %v1096 = vadd.f32 %v1012, %v1085
    %v1097 = vadd.f32 %v1014, %v1089
    %v1098 = vadd.f32 %v1016, %v1085
    %v1099 = vadd.f32 %v1018, %v1089
    %v1100 = vadd.f32 %v1022, %v1085
    %v1101 = vadd.f32 %v1024, %v1089
    %v1102 = vadd.f32 %v1026, %v1085
    %v1103 = vadd.f32 %v1028, %v1089
    %v1104 = vadd.f32 %v1032, %v1085
    %v1105 = vadd.f32 %v1034, %v1089
    %v1106 = vadd.f32 %v1036, %v1085
    %v1107 = vadd.f32 %v1038, %v1089
    %v1108 = vadd.f32 %v1042, %v1085
    %v1109 = vadd.f32 %v1044, %v1089
    %v1110 = vadd.f32 %v1046, %v1085
    %v1111 = vadd.f32 %v1048, %v1089
    %v1112 = vadd.f32 %v1052, %v1085
    %v1113 = vadd.f32 %v1054, %v1089
    %v1114 = vadd.f32 %v1056, %v1085
    %v1115 = vadd.f32 %v1058, %v1089
    %v1116 = vadd.f32 %v1062, %v1085
    %v1117 = vadd.f32 %v1064, %v1089
    %v1118 = vadd.f32 %v1066, %v1085
    %v1119 = vadd.f32 %v1068, %v1089
    %v1120 = vadd.f32 %v1072, %v1085
    %v1121 = vadd.f32 %v1074, %v1089
    %v1122 = vadd.f32 %v1076, %v1085
    %v1123 = vadd.f32 %v1078, %v1089
    %v1124 = vmax.f32 %v1092, 0.0
    %v1125 = vmax.f32 %v1093, 0.0
    %v1126 = vmax.f32 %v1094, 0.0
    %v1127 = vmax.f32 %v1095, 0.0
    %v1128 = vmax.f32 %v1096, 0.0
    %v1129 = vmax.f32 %v1097, 0.0
    %v1130 = vmax.f32 %v1098, 0.0
    %v1131 = vmax.f32 %v1099, 0.0
    %v1132 = vmax.f32 %v1100, 0.0
    %v1133 = vmax.f32 %v1101, 0.0
    %v1134 = vmax.f32 %v1102, 0.0
    %v1135 = vmax.f32 %v1103, 0.0
    %v1136 = vmax.f32 %v1104, 0.0
    %v1137 = vmax.f32 %v1105, 0.0
    %v1138 = vmax.f32 %v1106, 0.0
    %v1139 = vmax.f32 %v1107, 0.0
    %v1140 = vmax.f32 %v1108, 0.0
    %v1141 = vmax.f32 %v1109, 0.0
    %v1142 = vmax.f32 %v1110, 0.0
    %v1143 = vmax.f32 %v1111, 0.0
    %v1144 = vmax.f32 %v1112, 0.0
    %v1145 = vmax.f32 %v1113, 0.0
    %v1146 = vmax.f32 %v1114, 0.0
    %v1147 = vmax.f32 %v1115, 0.0
    %v1148 = vmax.f32 %v1116, 0.0
    %v1149 = vmax.f32 %v1117, 0.0
    %v1150 = vmax.f32 %v1118, 0.0
    %v1151 = vmax.f32 %v1119, 0.0
    %v1152 = vmax.f32 %v1120, 0.0
    %v1153 = vmax.f32 %v1121, 0.0
    %v1154 = vmax.f32 %v1122, 0.0
    %v1155 = vmax.f32 %v1123, 0.0
    %v1156 = vpack.c.bf16 %v1126, %v1124
    %v1157 = vpack.c.bf16 %v1127, %v1125
    %v1158 = vpack.c.bf16 %v1130, %v1128
    %v1159 = vpack.c.bf16 %v1131, %v1129
    %v1160 = vpack.c.bf16 %v1134, %v1132
    %v1161 = vpack.c.bf16 %v1135, %v1133
    %v1162 = vpack.c.bf16 %v1138, %v1136
    %v1163 = vpack.c.bf16 %v1139, %v1137
    %v1164 = vpack.c.bf16 %v1142, %v1140
    %v1165 = vpack.c.bf16 %v1143, %v1141
    %v1166 = vpack.c.bf16 %v1146, %v1144
    %v1167 = vpack.c.bf16 %v1147, %v1145
    %v1168 = vpack.c.bf16 %v1150, %v1148
    %v1169 = vpack.c.bf16 %v1151, %v1149
    %v1170 = vpack.c.bf16 %v1154, %v1152
    %v1171 = vpack.c.bf16 %v1155, %v1153
    %v1188 = vunpack.c.l.b16 %v1156
    %v1189 = vunpack.c.l.b16 %v1157
    %v1190 = vunpack.c.h.b16 %v1156
    %v1191 = vunpack.c.h.b16 %v1157
    %v1192 = vunpack.c.l.b16 %v1158
    %v1193 = vunpack.c.l.b16 %v1159
    %v1194 = vunpack.c.h.b16 %v1158
    %v1195 = vunpack.c.h.b16 %v1159
    %v1196 = vunpack.c.l.b16 %v1160
    %v1197 = vunpack.c.l.b16 %v1161
    %v1198 = vunpack.c.h.b16 %v1160
    %v1199 = vunpack.c.h.b16 %v1161
    %v1200 = vunpack.c.l.b16 %v1162
    %v1201 = vunpack.c.l.b16 %v1163
    %v1202 = vunpack.c.h.b16 %v1162
    %v1203 = vunpack.c.h.b16 %v1163
    %v1204 = vunpack.c.l.b16 %v1164
    %v1205 = vunpack.c.l.b16 %v1165
    %v1206 = vunpack.c.h.b16 %v1164
    %v1207 = vunpack.c.h.b16 %v1165
    %v1208 = vunpack.c.l.b16 %v1166
    %v1209 = vunpack.c.l.b16 %v1167
    %v1210 = vunpack.c.h.b16 %v1166
    %v1211 = vunpack.c.h.b16 %v1167
    %v1212 = vunpack.c.l.b16 %v1168
    %v1213 = vunpack.c.l.b16 %v1169
    %v1214 = vunpack.c.h.b16 %v1168
    %v1215 = vunpack.c.h.b16 %v1169
    %v1216 = vunpack.c.l.b16 %v1170
    %v1217 = vunpack.c.l.b16 %v1171
    %v1218 = vunpack.c.h.b16 %v1170
    %v1219 = vunpack.c.h.b16 %v1171
    %v1220 = vpack.c.b16 %v1189, %v1188
    %v1221 = vpack.c.b16 %v1191, %v1190
    %v1222 = vpack.c.b16 %v1193, %v1192
    %v1223 = vpack.c.b16 %v1195, %v1194
    %v1224 = vpack.c.b16 %v1197, %v1196
    %v1225 = vpack.c.b16 %v1199, %v1198
    %v1226 = vpack.c.b16 %v1201, %v1200
    %v1227 = vpack.c.b16 %v1203, %v1202
    %v1228 = vpack.c.b16 %v1205, %v1204
    %v1229 = vpack.c.b16 %v1207, %v1206
    %v1230 = vpack.c.b16 %v1209, %v1208
    %v1231 = vpack.c.b16 %v1211, %v1210
    %v1232 = vpack.c.b16 %v1213, %v1212
    %v1233 = vpack.c.b16 %v1215, %v1214
    %v1234 = vpack.c.b16 %v1217, %v1216
    %v1235 = vpack.c.b16 %v1219, %v1218
    %1252 = vst [vmem:[%s6] sm:$0xff] %v1220
    %1253 = vst [vmem:[%s6 + $0x8] sm:$0xff] %v1221
    %1254 = vst [vmem:[%s6 + $0x10] sm:$0xff] %v1222
    %1255 = vst [vmem:[%s6 + $0x18] sm:$0xff] %v1223
    %1256 = vst [vmem:[%s6 + $0x20] sm:$0xff] %v1224
    %1257 = vst [vmem:[%s6 + $0x28] sm:$0xff] %v1225
    %1258 = vst [vmem:[%s6 + $0x30] sm:$0xff] %v1226
    %1259 = vst [vmem:[%s6 + $0x38] sm:$0xff] %v1227
    %1260 = vst [vmem:[%s6 + $0x40] sm:$0xff] %v1228
    %1261 = vst [vmem:[%s6 + $0x48] sm:$0xff] %v1229
    %1262 = vst [vmem:[%s6 + $0x50] sm:$0xff] %v1230
    %1263 = vst [vmem:[%s6 + $0x58] sm:$0xff] %v1231
    %1264 = vst [vmem:[%s6 + $0x60] sm:$0xff] %v1232
    %1265 = vst [vmem:[%s6 + $0x68] sm:$0xff] %v1233
    %1266 = vst [vmem:[%s6 + $0x70] sm:$0xff] %v1234
    %1267 = vst [vmem:[%s6 + $0x78] sm:$0xff] %v1235
  $region33: #{sage_linear_forward.3} parent=0 // pred_fallthru
    _
  // Predicated region
  $region34: #{sage_linear_forward.3} parent=0 // pred_check
    _
  $region35: #{sage_linear_forward.3} parent=0 // pred_check_branch
    %1269 = sbr.rel (0) target = $region37
  $region36: #{sage_linear_forward.3} parent=0 // pred_region
    _
  $region37: #{sage_linear_forward.3} parent=0 // pred_fallthru
    _
  // Predicated region
  $region38: #{sage_linear_forward.3} parent=0 // pred_check
    _
  $region39: #{sage_linear_forward.3} parent=0 // pred_check_branch
    %1271 = sbr.rel (0) target = $region41
  $region40: #{sage_linear_forward.3} parent=0 // pred_region
    _
  $region41: #{sage_linear_forward.3} parent=0 // pred_fallthru
    _

// kernel: sage_linear_forward.4
$region0: #{sage_linear_forward.4}
  #allocation0 [shape = 'u32[]', space=smem, size = 0x4, offset = 0x4, fixed_abs, tag = 'smem constant byte address 0x4 - core index']
  #allocation1 [shape = 'u32[144,128]{1,0:T(1,128)}', space=vmem, size = 0x12000, scoped, tag = 'internal scratch']
  #allocation2 [shape = 'f32[128,256]{1,0:T(8,128)}', space=vmem, size = 0x20000, scoped, tag = 'scratch operand']
  #allocation3 [shape = 'f32[128,1]{1,0:T(8,128)}', space=vmem, size = 0x10000, scoped, tag = 'scratch operand']
  %s0 = inlined_call_operand.vmem [shape: s8[128,128], index: 0, kind: input, shape index: {}]
  %s1 = inlined_call_operand.vmem [shape: bf16[128,256], index: 1, kind: input, shape index: {}, may-alias: {1,2}]
  %s2 = inlined_call_operand.vmem [shape: bf16[128,256], index: 2, kind: input, shape index: {}, may-alias: {1,2}]
  %s3 = inlined_call_operand.vmem [shape: bf16[256,384], index: 3, kind: input, shape index: {}]
  %s4 = inlined_call_operand.vmem [shape: bf16[256,384], index: 4, kind: input, shape index: {}]
  %s5 = inlined_call_operand.vmem [shape: f32[1,384], index: 5, kind: input, shape index: {}]
  %s6 = inlined_call_operand.vmem [shape: bf16[128,384], index: 6, kind: output, shape index: {}]
  %s7 = sld [smem:[#allocation0]]
  $region42: #{sage_linear_forward.4} parent=0
    _
  %s9 = ssub.s32 1, %s7
  %s10 = scalar_select 0, %s9, %s7
  // Predicated region
  $region2: #{sage_linear_forward.4} parent=0 // pred_check
    _
  $region3: #{sage_linear_forward.4} parent=0 // pred_check_branch
    %12 = sbr.rel (0) target = $region5
  $region4: #{sage_linear_forward.4} parent=0 // pred_region
    _
  $region5: #{sage_linear_forward.4} parent=0 // pred_fallthru
    _
  // Predicated region
  $region6: #{sage_linear_forward.4} parent=0 // pred_check
    _
  $region7: #{sage_linear_forward.4} parent=0 // pred_check_branch
    %14 = sbr.rel (0) target = $region9
  $region8: #{sage_linear_forward.4} parent=0 // pred_region
    _
  $region9: #{sage_linear_forward.4} parent=0 // pred_fallthru
    _
  // Predicated region
  $region10: #{sage_linear_forward.4} parent=0 // pred_check
    _
  $region11: #{sage_linear_forward.4} parent=0 // pred_check_branch
    %16 = sbr.rel (0) target = $region13
  $region12: #{sage_linear_forward.4} parent=0 // pred_region
    _
  $region13: #{sage_linear_forward.4} parent=0 // pred_fallthru
    _
  // Predicated region
  $region14: #{sage_linear_forward.4} parent=0 // pred_check
    _
  $region15: #{sage_linear_forward.4} parent=0 // pred_check_branch
    %18 = sbr.rel (0) target = $region17
  $region16: #{sage_linear_forward.4} parent=0 // pred_region
    _
  $region17: #{sage_linear_forward.4} parent=0 // pred_fallthru
    _
  // Predicated region
  $region18: #{sage_linear_forward.4} parent=0 // pred_check
    _
  $region19: #{sage_linear_forward.4} parent=0 // pred_check_branch
    %20 = sbr.rel (0) target = $region21
  $region20: #{sage_linear_forward.4} parent=0 // pred_region
    _
  $region21: #{sage_linear_forward.4} parent=0 // pred_fallthru
    _
  // Predicated region
  $region22: #{sage_linear_forward.4} parent=0 // pred_check
    _
  $region23: #{sage_linear_forward.4} parent=0 // pred_check_branch
    %22 = sbr.rel (0) target = $region25
  $region24: #{sage_linear_forward.4} parent=0 // pred_region
    _
  $region25: #{sage_linear_forward.4} parent=0 // pred_fallthru
    _
  %p24 = scmp.eq.s32.totalorder 0, 0
  // Predicated region
  $region26: #{sage_linear_forward.4} parent=0 // pred_check
    %p25 = pneg %p24
  $region27: #{sage_linear_forward.4} parent=0 // pred_check_branch
    %27 = sbr.rel (%p25) target = $region29
  $region28: #{sage_linear_forward.4} parent=0 // pred_region
    %28 = vst [vmem:[#allocation2] sm:$0xff] 0.0
    %29 = vst [vmem:[#allocation2 + $0x8] sm:$0xff] 0.0
    %30 = vst [vmem:[#allocation2 + $0x10] sm:$0xff] 0.0
    %31 = vst [vmem:[#allocation2 + $0x18] sm:$0xff] 0.0
    %32 = vst [vmem:[#allocation2 + $0x20] sm:$0xff] 0.0
    %33 = vst [vmem:[#allocation2 + $0x28] sm:$0xff] 0.0
    %34 = vst [vmem:[#allocation2 + $0x30] sm:$0xff] 0.0
    %35 = vst [vmem:[#allocation2 + $0x38] sm:$0xff] 0.0
    %36 = vst [vmem:[#allocation2 + $0x40] sm:$0xff] 0.0
    %37 = vst [vmem:[#allocation2 + $0x48] sm:$0xff] 0.0
    %38 = vst [vmem:[#allocation2 + $0x50] sm:$0xff] 0.0
    %39 = vst [vmem:[#allocation2 + $0x58] sm:$0xff] 0.0
    %40 = vst [vmem:[#allocation2 + $0x60] sm:$0xff] 0.0
    %41 = vst [vmem:[#allocation2 + $0x68] sm:$0xff] 0.0
    %42 = vst [vmem:[#allocation2 + $0x70] sm:$0xff] 0.0
    %43 = vst [vmem:[#allocation2 + $0x78] sm:$0xff] 0.0
    %44 = vst [vmem:[#allocation2 + $0x80] sm:$0xff] 0.0
    %45 = vst [vmem:[#allocation2 + $0x88] sm:$0xff] 0.0
    %46 = vst [vmem:[#allocation2 + $0x90] sm:$0xff] 0.0
    %47 = vst [vmem:[#allocation2 + $0x98] sm:$0xff] 0.0
    %48 = vst [vmem:[#allocation2 + $0xa0] sm:$0xff] 0.0
    %49 = vst [vmem:[#allocation2 + $0xa8] sm:$0xff] 0.0
    %50 = vst [vmem:[#allocation2 + $0xb0] sm:$0xff] 0.0
    %51 = vst [vmem:[#allocation2 + $0xb8] sm:$0xff] 0.0
    %52 = vst [vmem:[#allocation2 + $0xc0] sm:$0xff] 0.0
    %53 = vst [vmem:[#allocation2 + $0xc8] sm:$0xff] 0.0
    %54 = vst [vmem:[#allocation2 + $0xd0] sm:$0xff] 0.0
    %55 = vst [vmem:[#allocation2 + $0xd8] sm:$0xff] 0.0
    %56 = vst [vmem:[#allocation2 + $0xe0] sm:$0xff] 0.0
    %57 = vst [vmem:[#allocation2 + $0xe8] sm:$0xff] 0.0
    %58 = vst [vmem:[#allocation2 + $0xf0] sm:$0xff] 0.0
    %59 = vst [vmem:[#allocation2 + $0xf8] sm:$0xff] 0.0
    %vm60 = vcmask 7168
    %61 = vst.msk [vmem:[#allocation3] sm:$0xff] %vm60, 0.0
    %62 = vst.msk [vmem:[#allocation3 + $0x8] sm:$0xff] %vm60, 0.0
    %63 = vst.msk [vmem:[#allocation3 + $0x10] sm:$0xff] %vm60, 0.0
    %64 = vst.msk [vmem:[#allocation3 + $0x18] sm:$0xff] %vm60, 0.0
    %65 = vst.msk [vmem:[#allocation3 + $0x20] sm:$0xff] %vm60, 0.0
    %66 = vst.msk [vmem:[#allocation3 + $0x28] sm:$0xff] %vm60, 0.0
    %67 = vst.msk [vmem:[#allocation3 + $0x30] sm:$0xff] %vm60, 0.0
    %68 = vst.msk [vmem:[#allocation3 + $0x38] sm:$0xff] %vm60, 0.0
    %69 = vst.msk [vmem:[#allocation3 + $0x40] sm:$0xff] %vm60, 0.0
    %70 = vst.msk [vmem:[#allocation3 + $0x48] sm:$0xff] %vm60, 0.0
    %71 = vst.msk [vmem:[#allocation3 + $0x50] sm:$0xff] %vm60, 0.0
    %72 = vst.msk [vmem:[#allocation3 + $0x58] sm:$0xff] %vm60, 0.0
    %73 = vst.msk [vmem:[#allocation3 + $0x60] sm:$0xff] %vm60, 0.0
    %74 = vst.msk [vmem:[#allocation3 + $0x68] sm:$0xff] %vm60, 0.0
    %75 = vst.msk [vmem:[#allocation3 + $0x70] sm:$0xff] %vm60, 0.0
    %76 = vst.msk [vmem:[#allocation3 + $0x78] sm:$0xff] %vm60, 0.0
  $region29: #{sage_linear_forward.4} parent=0 // pred_fallthru
    _
  %v77 = vld [vmem:[%s0] sm:$0xff]
  %v78 = vld [vmem:[%s0 + $0x8] sm:$0xff]
  %v79 = vld [vmem:[%s0 + $0x10] sm:$0xff]
  %v80 = vld [vmem:[%s0 + $0x18] sm:$0xff]
  %v81 = vunpack.c.l.s8.bf16 %v77
  %v82 = vunpack.c.h.s8.bf16 %v77
  %v83 = vunpack.c.l.s8.bf16 %v78
  %v84 = vunpack.c.h.s8.bf16 %v78
  %v85 = vunpack.c.l.s8.bf16 %v79
  %v86 = vunpack.c.h.s8.bf16 %v79
  %v87 = vunpack.c.l.s8.bf16 %v80
  %v88 = vunpack.c.h.s8.bf16 %v80
  %v89 = vld [vmem:[#allocation2] sm:$0xff]
  %v90 = vld [vmem:[#allocation2 + $0x8] sm:$0xff]
  %v91 = vld [vmem:[#allocation2 + $0x10] sm:$0xff]
  %v92 = vld [vmem:[#allocation2 + $0x18] sm:$0xff]
  %v93 = vld [vmem:[#allocation2 + $0x20] sm:$0xff]
  %v94 = vld [vmem:[#allocation2 + $0x28] sm:$0xff]
  %v95 = vld [vmem:[#allocation2 + $0x30] sm:$0xff]
  %v96 = vld [vmem:[#allocation2 + $0x38] sm:$0xff]
  %v97 = vld [vmem:[#allocation2 + $0x40] sm:$0xff]
  %v98 = vld [vmem:[#allocation2 + $0x48] sm:$0xff]
  %v99 = vld [vmem:[#allocation2 + $0x50] sm:$0xff]
  %v100 = vld [vmem:[#allocation2 + $0x58] sm:$0xff]
  %v101 = vld [vmem:[#allocation2 + $0x60] sm:$0xff]
  %v102 = vld [vmem:[#allocation2 + $0x68] sm:$0xff]
  %v103 = vld [vmem:[#allocation2 + $0x70] sm:$0xff]
  %v104 = vld [vmem:[#allocation2 + $0x78] sm:$0xff]
  %v105 = vld [vmem:[#allocation2 + $0x80] sm:$0xff]
  %v106 = vld [vmem:[#allocation2 + $0x88] sm:$0xff]
  %v107 = vld [vmem:[#allocation2 + $0x90] sm:$0xff]
  %v108 = vld [vmem:[#allocation2 + $0x98] sm:$0xff]
  %v109 = vld [vmem:[#allocation2 + $0xa0] sm:$0xff]
  %v110 = vld [vmem:[#allocation2 + $0xa8] sm:$0xff]
  %v111 = vld [vmem:[#allocation2 + $0xb0] sm:$0xff]
  %v112 = vld [vmem:[#allocation2 + $0xb8] sm:$0xff]
  %v113 = vld [vmem:[#allocation2 + $0xc0] sm:$0xff]
  %v114 = vld [vmem:[#allocation2 + $0xc8] sm:$0xff]
  %v115 = vld [vmem:[#allocation2 + $0xd0] sm:$0xff]
  %v116 = vld [vmem:[#allocation2 + $0xd8] sm:$0xff]
  %v117 = vld [vmem:[#allocation2 + $0xe0] sm:$0xff]
  %v118 = vld [vmem:[#allocation2 + $0xe8] sm:$0xff]
  %v119 = vld [vmem:[#allocation2 + $0xf0] sm:$0xff]
  %v120 = vld [vmem:[#allocation2 + $0xf8] sm:$0xff]
  %v121 = vld [vmem:[%s1] sm:$0xff]
  %v122 = vld [vmem:[%s1 + $0x8] sm:$0xff]
  %v123 = vld [vmem:[%s1 + $0x10] sm:$0xff]
  %v124 = vld [vmem:[%s1 + $0x18] sm:$0xff]
  %v125 = vld [vmem:[%s1 + $0x20] sm:$0xff]
  %v126 = vld [vmem:[%s1 + $0x28] sm:$0xff]
  %v127 = vld [vmem:[%s1 + $0x30] sm:$0xff]
  %v128 = vld [vmem:[%s1 + $0x38] sm:$0xff]
  %v129 = vld [vmem:[%s1 + $0x40] sm:$0xff]
  %v130 = vld [vmem:[%s1 + $0x48] sm:$0xff]
  %v131 = vld [vmem:[%s1 + $0x50] sm:$0xff]
  %v132 = vld [vmem:[%s1 + $0x58] sm:$0xff]
  %v133 = vld [vmem:[%s1 + $0x60] sm:$0xff]
  %v134 = vld [vmem:[%s1 + $0x68] sm:$0xff]
  %v135 = vld [vmem:[%s1 + $0x70] sm:$0xff]
  %v136 = vld [vmem:[%s1 + $0x78] sm:$0xff]
  %v153 = vunpack.c.l.b16 %v121
  %v154 = vunpack.c.h.b16 %v121
  %v155 = vunpack.c.l.b16 %v122
  %v156 = vunpack.c.h.b16 %v122
  %v157 = vunpack.c.l.b16 %v123
  %v158 = vunpack.c.h.b16 %v123
  %v159 = vunpack.c.l.b16 %v124
  %v160 = vunpack.c.h.b16 %v124
  %v161 = vunpack.c.l.b16 %v125
  %v162 = vunpack.c.h.b16 %v125
  %v163 = vunpack.c.l.b16 %v126
  %v164 = vunpack.c.h.b16 %v126
  %v165 = vunpack.c.l.b16 %v127
  %v166 = vunpack.c.h.b16 %v127
  %v167 = vunpack.c.l.b16 %v128
  %v168 = vunpack.c.h.b16 %v128
  %v169 = vunpack.c.l.b16 %v129
  %v170 = vunpack.c.h.b16 %v129
  %v171 = vunpack.c.l.b16 %v130
  %v172 = vunpack.c.h.b16 %v130
  %v173 = vunpack.c.l.b16 %v131
  %v174 = vunpack.c.h.b16 %v131
  %v175 = vunpack.c.l.b16 %v132
  %v176 = vunpack.c.h.b16 %v132
  %v177 = vunpack.c.l.b16 %v133
  %v178 = vunpack.c.h.b16 %v133
  %v179 = vunpack.c.l.b16 %v134
  %v180 = vunpack.c.h.b16 %v134
  %v181 = vunpack.c.l.b16 %v135
  %v182 = vunpack.c.h.b16 %v135
  %v183 = vunpack.c.l.b16 %v136
  %v184 = vunpack.c.h.b16 %v136
  %v185 = vpack.c.b16 %v155, %v153
  %v186 = vpack.c.b16 %v156, %v154
  %v187 = vpack.c.b16 %v159, %v157
  %v188 = vpack.c.b16 %v160, %v158
  %v189 = vpack.c.b16 %v163, %v161
  %v190 = vpack.c.b16 %v164, %v162
  %v191 = vpack.c.b16 %v167, %v165
  %v192 = vpack.c.b16 %v168, %v166
  %v193 = vpack.c.b16 %v171, %v169
  %v194 = vpack.c.b16 %v172, %v170
  %v195 = vpack.c.b16 %v175, %v173
  %v196 = vpack.c.b16 %v176, %v174
  %v197 = vpack.c.b16 %v179, %v177
  %v198 = vpack.c.b16 %v180, %v178
  %v199 = vpack.c.b16 %v183, %v181
  %v200 = vpack.c.b16 %v184, %v182
  %217 = vmatprep.subr.bf16.mxu0 %v186
  %218 = vmatpush1.bf16.msra.mxu0 %v185
  %219 = vmatprep.subr.bf16.mxu0 %v188
  %220 = vmatpush1.bf16.msra.mxu0 %v187
  %221 = vmatprep.subr.bf16.mxu0 %v190
  %222 = vmatpush1.bf16.msra.mxu0 %v189
  %223 = vmatprep.subr.bf16.mxu0 %v192
  %224 = vmatpush1.bf16.msra.mxu0 %v191
  %225 = vmatprep.subr.bf16.mxu0 %v194
  %226 = vmatpush1.bf16.msra.mxu0 %v193
  %227 = vmatprep.subr.bf16.mxu0 %v196
  %228 = vmatpush1.bf16.msra.mxu0 %v195
  %229 = vmatprep.subr.bf16.mxu0 %v198
  %230 = vmatpush1.bf16.msra.mxu0 %v197
  %231 = vmatprep.subr.bf16.mxu0 %v200
  %232 = vmatpush1.bf16.msra.mxu0 %v199
  %233 = vmatprep.subr.bf16.mxu0 0
  %234 = vmatpush1.bf16.msra.mxu0 0
  %235 = vmatprep.subr.bf16.mxu0 0
  %236 = vmatpush1.bf16.msra.mxu0 0
  %237 = vmatprep.subr.bf16.mxu0 0
  %238 = vmatpush1.bf16.msra.mxu0 0
  %239 = vmatprep.subr.bf16.mxu0 0
  %240 = vmatpush1.bf16.msra.mxu0 0
  %241 = vmatprep.subr.bf16.mxu0 0
  %242 = vmatpush1.bf16.msra.mxu0 0
  %243 = vmatprep.subr.bf16.mxu0 0
  %244 = vmatpush1.bf16.msra.mxu0 0
  %245 = vmatprep.subr.bf16.mxu0 0
  %246 = vmatpush1.bf16.msra.mxu0 0
  %247 = vmatprep.subr.bf16.mxu0 0
  %248 = vmatpush1.bf16.msra.mxu0 0
  %249 = vmatprep.mubr.bf16.mxu0 0
  %250 = vmatmul.mubr.bf16.gmra.mrb[0].mxu0 %v81
  %v251 = vpop.f32.mrb[0].mxu0
  %v252 = vadd.f32 0.0, %v251
  %v253 = vpop.f32.mrb[0].mxu0
  %v254 = vadd.f32 0.0, %v253
  %v255 = vpop.f32.mrb[0].mxu0
  %v256 = vadd.f32 0.0, %v255
  %v257 = vpop.f32.mrb[0].mxu0
  %v258 = vadd.f32 0.0, %v257
  %259 = vmatprep.mubr.bf16.mxu0 0
  %260 = vmatmul.mubr.bf16.gmra.mrb[0].mxu0 %v82
  %v261 = vpop.f32.mrb[0].mxu0
  %v262 = vadd.f32 0.0, %v261
  %v263 = vpop.f32.mrb[0].mxu0
  %v264 = vadd.f32 0.0, %v263
  %v265 = vpop.f32.mrb[0].mxu0
  %v266 = vadd.f32 0.0, %v265
  %v267 = vpop.f32.mrb[0].mxu0
  %v268 = vadd.f32 0.0, %v267
  %269 = vmatprep.mubr.bf16.mxu0 0
  %270 = vmatmul.mubr.bf16.gmra.mrb[0].mxu0 %v83
  %v271 = vpop.f32.mrb[0].mxu0
  %v272 = vadd.f32 0.0, %v271
  %v273 = vpop.f32.mrb[0].mxu0
  %v274 = vadd.f32 0.0, %v273
  %v275 = vpop.f32.mrb[0].mxu0
  %v276 = vadd.f32 0.0, %v275
  %v277 = vpop.f32.mrb[0].mxu0
  %v278 = vadd.f32 0.0, %v277
  %279 = vmatprep.mubr.bf16.mxu0 0
  %280 = vmatmul.mubr.bf16.gmra.mrb[0].mxu0 %v84
  %v281 = vpop.f32.mrb[0].mxu0
  %v282 = vadd.f32 0.0, %v281
  %v283 = vpop.f32.mrb[0].mxu0
  %v284 = vadd.f32 0.0, %v283
  %v285 = vpop.f32.mrb[0].mxu0
  %v286 = vadd.f32 0.0, %v285
  %v287 = vpop.f32.mrb[0].mxu0
  %v288 = vadd.f32 0.0, %v287
  %289 = vmatprep.mubr.bf16.mxu0 0
  %290 = vmatmul.mubr.bf16.gmra.mrb[0].mxu0 %v85
  %v291 = vpop.f32.mrb[0].mxu0
  %v292 = vadd.f32 0.0, %v291
  %v293 = vpop.f32.mrb[0].mxu0
  %v294 = vadd.f32 0.0, %v293
  %v295 = vpop.f32.mrb[0].mxu0
  %v296 = vadd.f32 0.0, %v295
  %v297 = vpop.f32.mrb[0].mxu0
  %v298 = vadd.f32 0.0, %v297
  %299 = vmatprep.mubr.bf16.mxu0 0
  %300 = vmatmul.mubr.bf16.gmra.mrb[0].mxu0 %v86
  %v301 = vpop.f32.mrb[0].mxu0
  %v302 = vadd.f32 0.0, %v301
  %v303 = vpop.f32.mrb[0].mxu0
  %v304 = vadd.f32 0.0, %v303
  %v305 = vpop.f32.mrb[0].mxu0
  %v306 = vadd.f32 0.0, %v305
  %v307 = vpop.f32.mrb[0].mxu0
  %v308 = vadd.f32 0.0, %v307
  %309 = vmatprep.mubr.bf16.mxu0 0
  %310 = vmatmul.mubr.bf16.gmra.mrb[0].mxu0 %v87
  %v311 = vpop.f32.mrb[0].mxu0
  %v312 = vadd.f32 0.0, %v311
  %v313 = vpop.f32.mrb[0].mxu0
  %v314 = vadd.f32 0.0, %v313
  %v315 = vpop.f32.mrb[0].mxu0
  %v316 = vadd.f32 0.0, %v315
  %v317 = vpop.f32.mrb[0].mxu0
  %v318 = vadd.f32 0.0, %v317
  %319 = vmatprep.mubr.bf16.mxu0 0
  %320 = vmatmul.mubr.bf16.gmra.mrb[0].mxu0 %v88
  %v321 = vpop.f32.mrb[0].mxu0
  %v322 = vadd.f32 0.0, %v321
  %v323 = vpop.f32.mrb[0].mxu0
  %v324 = vadd.f32 0.0, %v323
  %v325 = vpop.f32.mrb[0].mxu0
  %v326 = vadd.f32 0.0, %v325
  %v327 = vpop.f32.mrb[0].mxu0
  %v328 = vadd.f32 0.0, %v327
  %329 = vdwg.mxu0
  %v330 = vadd.f32 %v89, %v252
  %v331 = vadd.f32 %v90, %v254
  %v332 = vadd.f32 %v91, %v256
  %v333 = vadd.f32 %v92, %v258
  %v334 = vadd.f32 %v93, %v262
  %v335 = vadd.f32 %v94, %v264
  %v336 = vadd.f32 %v95, %v266
  %v337 = vadd.f32 %v96, %v268
  %v338 = vadd.f32 %v97, %v272
  %v339 = vadd.f32 %v98, %v274
  %v340 = vadd.f32 %v99, %v276
  %v341 = vadd.f32 %v100, %v278
  %v342 = vadd.f32 %v101, %v282
  %v343 = vadd.f32 %v102, %v284
  %v344 = vadd.f32 %v103, %v286
  %v345 = vadd.f32 %v104, %v288
  %v346 = vadd.f32 %v105, %v292
  %v347 = vadd.f32 %v106, %v294
  %v348 = vadd.f32 %v107, %v296
  %v349 = vadd.f32 %v108, %v298
  %v350 = vadd.f32 %v109, %v302
  %v351 = vadd.f32 %v110, %v304
  %v352 = vadd.f32 %v111, %v306
  %v353 = vadd.f32 %v112, %v308
  %v354 = vadd.f32 %v113, %v312
  %v355 = vadd.f32 %v114, %v314
  %v356 = vadd.f32 %v115, %v316
  %v357 = vadd.f32 %v116, %v318
  %v358 = vadd.f32 %v117, %v322
  %v359 = vadd.f32 %v118, %v324
  %v360 = vadd.f32 %v119, %v326
  %v361 = vadd.f32 %v120, %v328
  %362 = vst [vmem:[#allocation2] sm:$0xff] %v330
  %363 = vst [vmem:[#allocation2 + $0x8] sm:$0xff] %v331
  %364 = vst [vmem:[#allocation2 + $0x10] sm:$0xff] %v332
  %365 = vst [vmem:[#allocation2 + $0x18] sm:$0xff] %v333
  %366 = vst [vmem:[#allocation2 + $0x20] sm:$0xff] %v334
  %367 = vst [vmem:[#allocation2 + $0x28] sm:$0xff] %v335
  %368 = vst [vmem:[#allocation2 + $0x30] sm:$0xff] %v336
  %369 = vst [vmem:[#allocation2 + $0x38] sm:$0xff] %v337
  %370 = vst [vmem:[#allocation2 + $0x40] sm:$0xff] %v338
  %371 = vst [vmem:[#allocation2 + $0x48] sm:$0xff] %v339
  %372 = vst [vmem:[#allocation2 + $0x50] sm:$0xff] %v340
  %373 = vst [vmem:[#allocation2 + $0x58] sm:$0xff] %v341
  %374 = vst [vmem:[#allocation2 + $0x60] sm:$0xff] %v342
  %375 = vst [vmem:[#allocation2 + $0x68] sm:$0xff] %v343
  %376 = vst [vmem:[#allocation2 + $0x70] sm:$0xff] %v344
  %377 = vst [vmem:[#allocation2 + $0x78] sm:$0xff] %v345
  %378 = vst [vmem:[#allocation2 + $0x80] sm:$0xff] %v346
  %379 = vst [vmem:[#allocation2 + $0x88] sm:$0xff] %v347
  %380 = vst [vmem:[#allocation2 + $0x90] sm:$0xff] %v348
  %381 = vst [vmem:[#allocation2 + $0x98] sm:$0xff] %v349
  %382 = vst [vmem:[#allocation2 + $0xa0] sm:$0xff] %v350
  %383 = vst [vmem:[#allocation2 + $0xa8] sm:$0xff] %v351
  %384 = vst [vmem:[#allocation2 + $0xb0] sm:$0xff] %v352
  %385 = vst [vmem:[#allocation2 + $0xb8] sm:$0xff] %v353
  %386 = vst [vmem:[#allocation2 + $0xc0] sm:$0xff] %v354
  %387 = vst [vmem:[#allocation2 + $0xc8] sm:$0xff] %v355
  %388 = vst [vmem:[#allocation2 + $0xd0] sm:$0xff] %v356
  %389 = vst [vmem:[#allocation2 + $0xd8] sm:$0xff] %v357
  %390 = vst [vmem:[#allocation2 + $0xe0] sm:$0xff] %v358
  %391 = vst [vmem:[#allocation2 + $0xe8] sm:$0xff] %v359
  %392 = vst [vmem:[#allocation2 + $0xf0] sm:$0xff] %v360
  %393 = vst [vmem:[#allocation2 + $0xf8] sm:$0xff] %v361
  %v394 = vld [vmem:[#allocation3] sm:$0xff]
  %v395 = vld [vmem:[#allocation3 + $0x8] sm:$0xff]
  %v396 = vld [vmem:[#allocation3 + $0x10] sm:$0xff]
  %v397 = vld [vmem:[#allocation3 + $0x18] sm:$0xff]
  %v398 = vld [vmem:[#allocation3 + $0x20] sm:$0xff]
  %v399 = vld [vmem:[#allocation3 + $0x28] sm:$0xff]
  %v400 = vld [vmem:[#allocation3 + $0x30] sm:$0xff]
  %v401 = vld [vmem:[#allocation3 + $0x38] sm:$0xff]
  %v402 = vld [vmem:[#allocation3 + $0x40] sm:$0xff]
  %v403 = vld [vmem:[#allocation3 + $0x48] sm:$0xff]
  %v404 = vld [vmem:[#allocation3 + $0x50] sm:$0xff]
  %v405 = vld [vmem:[#allocation3 + $0x58] sm:$0xff]
  %v406 = vld [vmem:[#allocation3 + $0x60] sm:$0xff]
  %v407 = vld [vmem:[#allocation3 + $0x68] sm:$0xff]
  %v408 = vld [vmem:[#allocation3 + $0x70] sm:$0xff]
  %v409 = vld [vmem:[#allocation3 + $0x78] sm:$0xff]
  %v410 = vunpack.c.l.bf16 %v81
  %v411 = vunpack.c.h.bf16 %v81
  %v412 = vunpack.c.l.bf16 %v82
  %v413 = vunpack.c.h.bf16 %v82
  %v414 = vunpack.c.l.bf16 %v83
  %v415 = vunpack.c.h.bf16 %v83
  %v416 = vunpack.c.l.bf16 %v84
  %v417 = vunpack.c.h.bf16 %v84
  %v418 = vunpack.c.l.bf16 %v85
  %v419 = vunpack.c.h.bf16 %v85
  %v420 = vunpack.c.l.bf16 %v86
  %v421 = vunpack.c.h.bf16 %v86
  %v422 = vunpack.c.l.bf16 %v87
  %v423 = vunpack.c.h.bf16 %v87
  %v424 = vunpack.c.l.bf16 %v88
  %v425 = vunpack.c.h.bf16 %v88
  %426 = vadd.xlane.f32.xlu0 %v410
  %v427 = vpop.xlane.xlu0 %426
  %428 = vadd.xlane.f32.xlu0 %v411
  %v429 = vpop.xlane.xlu0 %428
  %430 = vadd.xlane.f32.xlu0 %v412
  %v431 = vpop.xlane.xlu0 %430
  %432 = vadd.xlane.f32.xlu0 %v413
  %v433 = vpop.xlane.xlu0 %432
  %434 = vadd.xlane.f32.xlu0 %v414
  %v435 = vpop.xlane.xlu0 %434
  %436 = vadd.xlane.f32.xlu0 %v415
  %v437 = vpop.xlane.xlu0 %436
  %438 = vadd.xlane.f32.xlu0 %v416
  %v439 = vpop.xlane.xlu0 %438
  %440 = vadd.xlane.f32.xlu0 %v417
  %v441 = vpop.xlane.xlu0 %440
  %442 = vadd.xlane.f32.xlu0 %v418
  %v443 = vpop.xlane.xlu0 %442
  %444 = vadd.xlane.f32.xlu0 %v419
  %v445 = vpop.xlane.xlu0 %444
  %446 = vadd.xlane.f32.xlu0 %v420
  %v447 = vpop.xlane.xlu0 %446
  %448 = vadd.xlane.f32.xlu0 %v421
  %v449 = vpop.xlane.xlu0 %448
  %450 = vadd.xlane.f32.xlu0 %v422
  %v451 = vpop.xlane.xlu0 %450
  %452 = vadd.xlane.f32.xlu0 %v423
  %v453 = vpop.xlane.xlu0 %452
  %454 = vadd.xlane.f32.xlu0 %v424
  %v455 = vpop.xlane.xlu0 %454
  %456 = vadd.xlane.f32.xlu0 %v425
  %v457 = vpop.xlane.xlu0 %456
  %v458 = vadd.f32 %v394, %v427
  %v459 = vadd.f32 %v395, %v429
  %v460 = vadd.f32 %v396, %v431
  %v461 = vadd.f32 %v397, %v433
  %v462 = vadd.f32 %v398, %v435
  %v463 = vadd.f32 %v399, %v437
  %v464 = vadd.f32 %v400, %v439
  %v465 = vadd.f32 %v401, %v441
  %v466 = vadd.f32 %v402, %v443
  %v467 = vadd.f32 %v403, %v445
  %v468 = vadd.f32 %v404, %v447
  %v469 = vadd.f32 %v405, %v449
  %v470 = vadd.f32 %v406, %v451
  %v471 = vadd.f32 %v407, %v453
  %v472 = vadd.f32 %v408, %v455
  %v473 = vadd.f32 %v409, %v457
  %vm474 = vcmask 7168
  %475 = vst.msk [vmem:[#allocation3] sm:$0xff] %vm474, %v458
  %476 = vst.msk [vmem:[#allocation3 + $0x8] sm:$0xff] %vm474, %v459
  %477 = vst.msk [vmem:[#allocation3 + $0x10] sm:$0xff] %vm474, %v460
  %478 = vst.msk [vmem:[#allocation3 + $0x18] sm:$0xff] %vm474, %v461
  %479 = vst.msk [vmem:[#allocation3 + $0x20] sm:$0xff] %vm474, %v462
  %480 = vst.msk [vmem:[#allocation3 + $0x28] sm:$0xff] %vm474, %v463
  %481 = vst.msk [vmem:[#allocation3 + $0x30] sm:$0xff] %vm474, %v464
  %482 = vst.msk [vmem:[#allocation3 + $0x38] sm:$0xff] %vm474, %v465
  %483 = vst.msk [vmem:[#allocation3 + $0x40] sm:$0xff] %vm474, %v466
  %484 = vst.msk [vmem:[#allocation3 + $0x48] sm:$0xff] %vm474, %v467
  %485 = vst.msk [vmem:[#allocation3 + $0x50] sm:$0xff] %vm474, %v468
  %486 = vst.msk [vmem:[#allocation3 + $0x58] sm:$0xff] %vm474, %v469
  %487 = vst.msk [vmem:[#allocation3 + $0x60] sm:$0xff] %vm474, %v470
  %488 = vst.msk [vmem:[#allocation3 + $0x68] sm:$0xff] %vm474, %v471
  %489 = vst.msk [vmem:[#allocation3 + $0x70] sm:$0xff] %vm474, %v472
  %490 = vst.msk [vmem:[#allocation3 + $0x78] sm:$0xff] %vm474, %v473
  // Predicated region
  $region30: #{sage_linear_forward.4} parent=0 // pred_check
    %p491 = pneg %p24
  $region31: #{sage_linear_forward.4} parent=0 // pred_check_branch
    %493 = sbr.rel (%p491) target = $region33
  $region32: #{sage_linear_forward.4} parent=0 // pred_region
    %v494 = vld [vmem:[#allocation3] sm:$0xff]
    %v495 = vld [vmem:[#allocation3 + $0x8] sm:$0xff]
    %v496 = vld [vmem:[#allocation3 + $0x10] sm:$0xff]
    %v497 = vld [vmem:[#allocation3 + $0x18] sm:$0xff]
    %v498 = vld [vmem:[#allocation3 + $0x20] sm:$0xff]
    %v499 = vld [vmem:[#allocation3 + $0x28] sm:$0xff]
    %v500 = vld [vmem:[#allocation3 + $0x30] sm:$0xff]
    %v501 = vld [vmem:[#allocation3 + $0x38] sm:$0xff]
    %v502 = vld [vmem:[#allocation3 + $0x40] sm:$0xff]
    %v503 = vld [vmem:[#allocation3 + $0x48] sm:$0xff]
    %v504 = vld [vmem:[#allocation3 + $0x50] sm:$0xff]
    %v505 = vld [vmem:[#allocation3 + $0x58] sm:$0xff]
    %v506 = vld [vmem:[#allocation3 + $0x60] sm:$0xff]
    %v507 = vld [vmem:[#allocation3 + $0x68] sm:$0xff]
    %v508 = vld [vmem:[#allocation3 + $0x70] sm:$0xff]
    %v509 = vld [vmem:[#allocation3 + $0x78] sm:$0xff]
    %vm510 = vcmp.gt.f32.partialorder %v494, 0.0
    %vm511 = vcmp.gt.f32.partialorder %v495, 0.0
    %vm512 = vcmp.gt.f32.partialorder %v496, 0.0
    %vm513 = vcmp.gt.f32.partialorder %v497, 0.0
    %vm514 = vcmp.gt.f32.partialorder %v498, 0.0
    %vm515 = vcmp.gt.f32.partialorder %v499, 0.0
    %vm516 = vcmp.gt.f32.partialorder %v500, 0.0
    %vm517 = vcmp.gt.f32.partialorder %v501, 0.0
    %vm518 = vcmp.gt.f32.partialorder %v502, 0.0
    %vm519 = vcmp.gt.f32.partialorder %v503, 0.0
    %vm520 = vcmp.gt.f32.partialorder %v504, 0.0
    %vm521 = vcmp.gt.f32.partialorder %v505, 0.0
    %vm522 = vcmp.gt.f32.partialorder %v506, 0.0
    %vm523 = vcmp.gt.f32.partialorder %v507, 0.0
    %vm524 = vcmp.gt.f32.partialorder %v508, 0.0
    %vm525 = vcmp.gt.f32.partialorder %v509, 0.0
    %v526 = vmax.f32 %v494, 1.0
    %v527 = vmax.f32 %v495, 1.0
    %v528 = vmax.f32 %v496, 1.0
    %v529 = vmax.f32 %v497, 1.0
    %v530 = vmax.f32 %v498, 1.0
    %v531 = vmax.f32 %v499, 1.0
    %v532 = vmax.f32 %v500, 1.0
    %v533 = vmax.f32 %v501, 1.0
    %v534 = vmax.f32 %v502, 1.0
    %v535 = vmax.f32 %v503, 1.0
    %v536 = vmax.f32 %v504, 1.0
    %v537 = vmax.f32 %v505, 1.0
    %v538 = vmax.f32 %v506, 1.0
    %v539 = vmax.f32 %v507, 1.0
    %v540 = vmax.f32 %v508, 1.0
    %v541 = vmax.f32 %v509, 1.0
    %v542 = vrcp.pop %v526
    %v543 = vmul.f32 1.0, %v542
    %v544 = vrcp.pop %v527
    %v545 = vmul.f32 1.0, %v544
    %v546 = vrcp.pop %v528
    %v547 = vmul.f32 1.0, %v546
    %v548 = vrcp.pop %v529
    %v549 = vmul.f32 1.0, %v548
    %v550 = vrcp.pop %v530
    %v551 = vmul.f32 1.0, %v550
    %v552 = vrcp.pop %v531
    %v553 = vmul.f32 1.0, %v552
    %v554 = vrcp.pop %v532
    %v555 = vmul.f32 1.0, %v554
    %v556 = vrcp.pop %v533
    %v557 = vmul.f32 1.0, %v556
    %v558 = vrcp.pop %v534
    %v559 = vmul.f32 1.0, %v558
    %v560 = vrcp.pop %v535
    %v561 = vmul.f32 1.0, %v560
    %v562 = vrcp.pop %v536
    %v563 = vmul.f32 1.0, %v562
    %v564 = vrcp.pop %v537
    %v565 = vmul.f32 1.0, %v564
    %v566 = vrcp.pop %v538
    %v567 = vmul.f32 1.0, %v566
    %v568 = vrcp.pop %v539
    %v569 = vmul.f32 1.0, %v568
    %v570 = vrcp.pop %v540
    %v571 = vmul.f32 1.0, %v570
    %v572 = vrcp.pop %v541
    %v573 = vmul.f32 1.0, %v572
    %v574 = vsel %vm510, %v543, 0.0
    %v575 = vsel %vm511, %v545, 0.0
    %v576 = vsel %vm512, %v547, 0.0
    %v577 = vsel %vm513, %v549, 0.0
    %v578 = vsel %vm514, %v551, 0.0
    %v579 = vsel %vm515, %v553, 0.0
    %v580 = vsel %vm516, %v555, 0.0
    %v581 = vsel %vm517, %v557, 0.0
    %v582 = vsel %vm518, %v559, 0.0
    %v583 = vsel %vm519, %v561, 0.0
    %v584 = vsel %vm520, %v563, 0.0
    %v585 = vsel %vm521, %v565, 0.0
    %v586 = vsel %vm522, %v567, 0.0
    %v587 = vsel %vm523, %v569, 0.0
    %v588 = vsel %vm524, %v571, 0.0
    %v589 = vsel %vm525, %v573, 0.0
    %v590 = vld [vmem:[#allocation2] sm:$0xff]
    %v591 = vld [vmem:[#allocation2 + $0x8] sm:$0xff]
    %v592 = vld [vmem:[#allocation2 + $0x10] sm:$0xff]
    %v593 = vld [vmem:[#allocation2 + $0x18] sm:$0xff]
    %v594 = vld [vmem:[#allocation2 + $0x20] sm:$0xff]
    %v595 = vld [vmem:[#allocation2 + $0x28] sm:$0xff]
    %v596 = vld [vmem:[#allocation2 + $0x30] sm:$0xff]
    %v597 = vld [vmem:[#allocation2 + $0x38] sm:$0xff]
    %v598 = vld [vmem:[#allocation2 + $0x40] sm:$0xff]
    %v599 = vld [vmem:[#allocation2 + $0x48] sm:$0xff]
    %v600 = vld [vmem:[#allocation2 + $0x50] sm:$0xff]
    %v601 = vld [vmem:[#allocation2 + $0x58] sm:$0xff]
    %v602 = vld [vmem:[#allocation2 + $0x60] sm:$0xff]
    %v603 = vld [vmem:[#allocation2 + $0x68] sm:$0xff]
    %v604 = vld [vmem:[#allocation2 + $0x70] sm:$0xff]
    %v605 = vld [vmem:[#allocation2 + $0x78] sm:$0xff]
    %v606 = vld [vmem:[#allocation2 + $0x80] sm:$0xff]
    %v607 = vld [vmem:[#allocation2 + $0x88] sm:$0xff]
    %v608 = vld [vmem:[#allocation2 + $0x90] sm:$0xff]
    %v609 = vld [vmem:[#allocation2 + $0x98] sm:$0xff]
    %v610 = vld [vmem:[#allocation2 + $0xa0] sm:$0xff]
    %v611 = vld [vmem:[#allocation2 + $0xa8] sm:$0xff]
    %v612 = vld [vmem:[#allocation2 + $0xb0] sm:$0xff]
    %v613 = vld [vmem:[#allocation2 + $0xb8] sm:$0xff]
    %v614 = vld [vmem:[#allocation2 + $0xc0] sm:$0xff]
    %v615 = vld [vmem:[#allocation2 + $0xc8] sm:$0xff]
    %v616 = vld [vmem:[#allocation2 + $0xd0] sm:$0xff]
    %v617 = vld [vmem:[#allocation2 + $0xd8] sm:$0xff]
    %v618 = vld [vmem:[#allocation2 + $0xe0] sm:$0xff]
    %v619 = vld [vmem:[#allocation2 + $0xe8] sm:$0xff]
    %v620 = vld [vmem:[#allocation2 + $0xf0] sm:$0xff]
    %v621 = vld [vmem:[#allocation2 + $0xf8] sm:$0xff]
    %623 = vset.pattern.permute.xlu0 0
    %624 = vperm.xlu0 %623, %v574
    %v625 = vpop.permute.xlu0 %624
    %628 = vset.pattern.permute.xlu0 0
    %629 = vperm.xlu0 %628, %v575
    %v630 = vpop.permute.xlu0 %629
    %633 = vset.pattern.permute.xlu0 0
    %634 = vperm.xlu0 %633, %v576
    %v635 = vpop.permute.xlu0 %634
    %638 = vset.pattern.permute.xlu0 0
    %639 = vperm.xlu0 %638, %v577
    %v640 = vpop.permute.xlu0 %639
    %643 = vset.pattern.permute.xlu0 0
    %644 = vperm.xlu0 %643, %v578
    %v645 = vpop.permute.xlu0 %644
    %648 = vset.pattern.permute.xlu0 0
    %649 = vperm.xlu0 %648, %v579
    %v650 = vpop.permute.xlu0 %649
    %653 = vset.pattern.permute.xlu0 0
    %654 = vperm.xlu0 %653, %v580
    %v655 = vpop.permute.xlu0 %654
    %658 = vset.pattern.permute.xlu0 0
    %659 = vperm.xlu0 %658, %v581
    %v660 = vpop.permute.xlu0 %659
    %663 = vset.pattern.permute.xlu0 0
    %664 = vperm.xlu0 %663, %v582
    %v665 = vpop.permute.xlu0 %664
    %668 = vset.pattern.permute.xlu0 0
    %669 = vperm.xlu0 %668, %v583
    %v670 = vpop.permute.xlu0 %669
    %673 = vset.pattern.permute.xlu0 0
    %674 = vperm.xlu0 %673, %v584
    %v675 = vpop.permute.xlu0 %674
    %678 = vset.pattern.permute.xlu0 0
    %679 = vperm.xlu0 %678, %v585
    %v680 = vpop.permute.xlu0 %679
    %683 = vset.pattern.permute.xlu0 0
    %684 = vperm.xlu0 %683, %v586
    %v685 = vpop.permute.xlu0 %684
    %688 = vset.pattern.permute.xlu0 0
    %689 = vperm.xlu0 %688, %v587
    %v690 = vpop.permute.xlu0 %689
    %693 = vset.pattern.permute.xlu0 0
    %694 = vperm.xlu0 %693, %v588
    %v695 = vpop.permute.xlu0 %694
    %698 = vset.pattern.permute.xlu0 0
    %699 = vperm.xlu0 %698, %v589
    %v700 = vpop.permute.xlu0 %699
    %v702 = vmul.f32 %v590, %v625
    %v703 = vmul.f32 %v591, %v625
    %v704 = vmul.f32 %v592, %v630
    %v705 = vmul.f32 %v593, %v630
    %v706 = vmul.f32 %v594, %v635
    %v707 = vmul.f32 %v595, %v635
    %v708 = vmul.f32 %v596, %v640
    %v709 = vmul.f32 %v597, %v640
    %v710 = vmul.f32 %v598, %v645
    %v711 = vmul.f32 %v599, %v645
    %v712 = vmul.f32 %v600, %v650
    %v713 = vmul.f32 %v601, %v650
    %v714 = vmul.f32 %v602, %v655
    %v715 = vmul.f32 %v603, %v655
    %v716 = vmul.f32 %v604, %v660
    %v717 = vmul.f32 %v605, %v660
    %v718 = vmul.f32 %v606, %v665
    %v719 = vmul.f32 %v607, %v665
    %v720 = vmul.f32 %v608, %v670
    %v721 = vmul.f32 %v609, %v670
    %v722 = vmul.f32 %v610, %v675
    %v723 = vmul.f32 %v611, %v675
    %v724 = vmul.f32 %v612, %v680
    %v725 = vmul.f32 %v613, %v680
    %v726 = vmul.f32 %v614, %v685
    %v727 = vmul.f32 %v615, %v685
    %v728 = vmul.f32 %v616, %v690
    %v729 = vmul.f32 %v617, %v690
    %v730 = vmul.f32 %v618, %v695
    %v731 = vmul.f32 %v619, %v695
    %v732 = vmul.f32 %v620, %v700
    %v733 = vmul.f32 %v621, %v700
    %v734 = vpack.c.bf16 %v704, %v702
    %v735 = vpack.c.bf16 %v705, %v703
    %v736 = vpack.c.bf16 %v708, %v706
    %v737 = vpack.c.bf16 %v709, %v707
    %v738 = vpack.c.bf16 %v712, %v710
    %v739 = vpack.c.bf16 %v713, %v711
    %v740 = vpack.c.bf16 %v716, %v714
    %v741 = vpack.c.bf16 %v717, %v715
    %v742 = vpack.c.bf16 %v720, %v718
    %v743 = vpack.c.bf16 %v721, %v719
    %v744 = vpack.c.bf16 %v724, %v722
    %v745 = vpack.c.bf16 %v725, %v723
    %v746 = vpack.c.bf16 %v728, %v726
    %v747 = vpack.c.bf16 %v729, %v727
    %v748 = vpack.c.bf16 %v732, %v730
    %v749 = vpack.c.bf16 %v733, %v731
    %v750 = vld [vmem:[%s3] sm:$0xff]
    %v751 = vld [vmem:[%s3 + $0x8] sm:$0xf]
    %v752 = vld [vmem:[%s3 + $0xc] sm:$0xff]
    %v753 = vld [vmem:[%s3 + $0x14] sm:$0xf]
    %v754 = vld [vmem:[%s3 + $0x18] sm:$0xff]
    %v755 = vld [vmem:[%s3 + $0x20] sm:$0xf]
    %v756 = vld [vmem:[%s3 + $0x24] sm:$0xff]
    %v757 = vld [vmem:[%s3 + $0x2c] sm:$0xf]
    %v758 = vld [vmem:[%s3 + $0x30] sm:$0xff]
    %v759 = vld [vmem:[%s3 + $0x38] sm:$0xf]
    %v760 = vld [vmem:[%s3 + $0x3c] sm:$0xff]
    %v761 = vld [vmem:[%s3 + $0x44] sm:$0xf]
    %v762 = vld [vmem:[%s3 + $0x48] sm:$0xff]
    %v763 = vld [vmem:[%s3 + $0x50] sm:$0xf]
    %v764 = vld [vmem:[%s3 + $0x54] sm:$0xff]
    %v765 = vld [vmem:[%s3 + $0x5c] sm:$0xf]
    %v766 = vld [vmem:[%s3 + $0x60] sm:$0xff]
    %v767 = vld [vmem:[%s3 + $0x68] sm:$0xf]
    %v768 = vld [vmem:[%s3 + $0x6c] sm:$0xff]
    %v769 = vld [vmem:[%s3 + $0x74] sm:$0xf]
    %v770 = vld [vmem:[%s3 + $0x78] sm:$0xff]
    %v771 = vld [vmem:[%s3 + $0x80] sm:$0xf]
    %v772 = vld [vmem:[%s3 + $0x84] sm:$0xff]
    %v773 = vld [vmem:[%s3 + $0x8c] sm:$0xf]
    %v774 = vld [vmem:[%s3 + $0x90] sm:$0xff]
    %v775 = vld [vmem:[%s3 + $0x98] sm:$0xf]
    %v776 = vld [vmem:[%s3 + $0x9c] sm:$0xff]
    %v777 = vld [vmem:[%s3 + $0xa4] sm:$0xf]
    %v778 = vld [vmem:[%s3 + $0xa8] sm:$0xff]
    %v779 = vld [vmem:[%s3 + $0xb0] sm:$0xf]
    %v780 = vld [vmem:[%s3 + $0xb4] sm:$0xff]
    %v781 = vld [vmem:[%s3 + $0xbc] sm:$0xf]
    %v782 = vld [vmem:[%s3 + $0xc0] sm:$0xff]
    %v783 = vld [vmem:[%s3 + $0xc8] sm:$0xf]
    %v784 = vld [vmem:[%s3 + $0xcc] sm:$0xff]
    %v785 = vld [vmem:[%s3 + $0xd4] sm:$0xf]
    %v786 = vld [vmem:[%s3 + $0xd8] sm:$0xff]
    %v787 = vld [vmem:[%s3 + $0xe0] sm:$0xf]
    %v788 = vld [vmem:[%s3 + $0xe4] sm:$0xff]
    %v789 = vld [vmem:[%s3 + $0xec] sm:$0xf]
    %v790 = vld [vmem:[%s3 + $0xf0] sm:$0xff]
    %v791 = vld [vmem:[%s3 + $0xf8] sm:$0xf]
    %v792 = vld [vmem:[%s3 + $0xfc] sm:$0xff]
    %v793 = vld [vmem:[%s3 + $0x104] sm:$0xf]
    %v794 = vld [vmem:[%s3 + $0x108] sm:$0xff]
    %v795 = vld [vmem:[%s3 + $0x110] sm:$0xf]
    %v796 = vld [vmem:[%s3 + $0x114] sm:$0xff]
    %v797 = vld [vmem:[%s3 + $0x11c] sm:$0xf]
    %v798 = vld [vmem:[%s3 + $0x120] sm:$0xff]
    %v799 = vld [vmem:[%s3 + $0x128] sm:$0xf]
    %v800 = vld [vmem:[%s3 + $0x12c] sm:$0xff]
    %v801 = vld [vmem:[%s3 + $0x134] sm:$0xf]
    %v802 = vld [vmem:[%s3 + $0x138] sm:$0xff]
    %v803 = vld [vmem:[%s3 + $0x140] sm:$0xf]
    %v804 = vld [vmem:[%s3 + $0x144] sm:$0xff]
    %v805 = vld [vmem:[%s3 + $0x14c] sm:$0xf]
    %v806 = vld [vmem:[%s3 + $0x150] sm:$0xff]
    %v807 = vld [vmem:[%s3 + $0x158] sm:$0xf]
    %v808 = vld [vmem:[%s3 + $0x15c] sm:$0xff]
    %v809 = vld [vmem:[%s3 + $0x164] sm:$0xf]
    %v810 = vld [vmem:[%s3 + $0x168] sm:$0xff]
    %v811 = vld [vmem:[%s3 + $0x170] sm:$0xf]
    %v812 = vld [vmem:[%s3 + $0x174] sm:$0xff]
    %v813 = vld [vmem:[%s3 + $0x17c] sm:$0xf]
    %v814 = vld [vmem:[%s2] sm:$0xff]
    %v815 = vld [vmem:[%s2 + $0x8] sm:$0xff]
    %v816 = vld [vmem:[%s2 + $0x10] sm:$0xff]
    %v817 = vld [vmem:[%s2 + $0x18] sm:$0xff]
    %v818 = vld [vmem:[%s2 + $0x20] sm:$0xff]
    %v819 = vld [vmem:[%s2 + $0x28] sm:$0xff]
    %v820 = vld [vmem:[%s2 + $0x30] sm:$0xff]
    %v821 = vld [vmem:[%s2 + $0x38] sm:$0xff]
    %v822 = vld [vmem:[%s2 + $0x40] sm:$0xff]
    %v823 = vld [vmem:[%s2 + $0x48] sm:$0xff]
    %v824 = vld [vmem:[%s2 + $0x50] sm:$0xff]
    %v825 = vld [vmem:[%s2 + $0x58] sm:$0xff]
    %v826 = vld [vmem:[%s2 + $0x60] sm:$0xff]
    %v827 = vld [vmem:[%s2 + $0x68] sm:$0xff]
    %v828 = vld [vmem:[%s2 + $0x70] sm:$0xff]
    %v829 = vld [vmem:[%s2 + $0x78] sm:$0xff]
    %v830 = vld [vmem:[%s4] sm:$0xff]
    %v831 = vld [vmem:[%s4 + $0x8] sm:$0xf]
    %v832 = vld [vmem:[%s4 + $0xc] sm:$0xff]
    %v833 = vld [vmem:[%s4 + $0x14] sm:$0xf]
    %v834 = vld [vmem:[%s4 + $0x18] sm:$0xff]
    %v835 = vld [vmem:[%s4 + $0x20] sm:$0xf]
    %v836 = vld [vmem:[%s4 + $0x24] sm:$0xff]
    %v837 = vld [vmem:[%s4 + $0x2c] sm:$0xf]
    %v838 = vld [vmem:[%s4 + $0x30] sm:$0xff]
    %v839 = vld [vmem:[%s4 + $0x38] sm:$0xf]
    %v840 = vld [vmem:[%s4 + $0x3c] sm:$0xff]
    %v841 = vld [vmem:[%s4 + $0x44] sm:$0xf]
    %v842 = vld [vmem:[%s4 + $0x48] sm:$0xff]
    %v843 = vld [vmem:[%s4 + $0x50] sm:$0xf]
    %v844 = vld [vmem:[%s4 + $0x54] sm:$0xff]
    %v845 = vld [vmem:[%s4 + $0x5c] sm:$0xf]
    %v846 = vld [vmem:[%s4 + $0x60] sm:$0xff]
    %v847 = vld [vmem:[%s4 + $0x68] sm:$0xf]
    %v848 = vld [vmem:[%s4 + $0x6c] sm:$0xff]
    %v849 = vld [vmem:[%s4 + $0x74] sm:$0xf]
    %v850 = vld [vmem:[%s4 + $0x78] sm:$0xff]
    %v851 = vld [vmem:[%s4 + $0x80] sm:$0xf]
    %v852 = vld [vmem:[%s4 + $0x84] sm:$0xff]
    %v853 = vld [vmem:[%s4 + $0x8c] sm:$0xf]
    %v854 = vld [vmem:[%s4 + $0x90] sm:$0xff]
    %v855 = vld [vmem:[%s4 + $0x98] sm:$0xf]
    %v856 = vld [vmem:[%s4 + $0x9c] sm:$0xff]
    %v857 = vld [vmem:[%s4 + $0xa4] sm:$0xf]
    %v858 = vld [vmem:[%s4 + $0xa8] sm:$0xff]
    %v859 = vld [vmem:[%s4 + $0xb0] sm:$0xf]
    %v860 = vld [vmem:[%s4 + $0xb4] sm:$0xff]
    %v861 = vld [vmem:[%s4 + $0xbc] sm:$0xf]
    %v862 = vld [vmem:[%s4 + $0xc0] sm:$0xff]
    %v863 = vld [vmem:[%s4 + $0xc8] sm:$0xf]
    %v864 = vld [vmem:[%s4 + $0xcc] sm:$0xff]
    %v865 = vld [vmem:[%s4 + $0xd4] sm:$0xf]
    %v866 = vld [vmem:[%s4 + $0xd8] sm:$0xff]
    %v867 = vld [vmem:[%s4 + $0xe0] sm:$0xf]
    %v868 = vld [vmem:[%s4 + $0xe4] sm:$0xff]
    %v869 = vld [vmem:[%s4 + $0xec] sm:$0xf]
    %v870 = vld [vmem:[%s4 + $0xf0] sm:$0xff]
    %v871 = vld [vmem:[%s4 + $0xf8] sm:$0xf]
    %v872 = vld [vmem:[%s4 + $0xfc] sm:$0xff]
    %v873 = vld [vmem:[%s4 + $0x104] sm:$0xf]
    %v874 = vld [vmem:[%s4 + $0x108] sm:$0xff]
    %v875 = vld [vmem:[%s4 + $0x110] sm:$0xf]
    %v876 = vld [vmem:[%s4 + $0x114] sm:$0xff]
    %v877 = vld [vmem:[%s4 + $0x11c] sm:$0xf]
    %v878 = vld [vmem:[%s4 + $0x120] sm:$0xff]
    %v879 = vld [vmem:[%s4 + $0x128] sm:$0xf]
    %v880 = vld [vmem:[%s4 + $0x12c] sm:$0xff]
    %v881 = vld [vmem:[%s4 + $0x134] sm:$0xf]
    %v882 = vld [vmem:[%s4 + $0x138] sm:$0xff]
    %v883 = vld [vmem:[%s4 + $0x140] sm:$0xf]
    %v884 = vld [vmem:[%s4 + $0x144] sm:$0xff]
    %v885 = vld [vmem:[%s4 + $0x14c] sm:$0xf]
    %v886 = vld [vmem:[%s4 + $0x150] sm:$0xff]
    %v887 = vld [vmem:[%s4 + $0x158] sm:$0xf]
    %v888 = vld [vmem:[%s4 + $0x15c] sm:$0xff]
    %v889 = vld [vmem:[%s4 + $0x164] sm:$0xf]
    %v890 = vld [vmem:[%s4 + $0x168] sm:$0xff]
    %v891 = vld [vmem:[%s4 + $0x170] sm:$0xf]
    %v892 = vld [vmem:[%s4 + $0x174] sm:$0xff]
    %v893 = vld [vmem:[%s4 + $0x17c] sm:$0xf]
    %v910 = vunpack.c.l.b16 %v814
    %v911 = vunpack.c.h.b16 %v814
    %v912 = vunpack.c.l.b16 %v815
    %v913 = vunpack.c.h.b16 %v815
    %v914 = vunpack.c.l.b16 %v816
    %v915 = vunpack.c.h.b16 %v816
    %v916 = vunpack.c.l.b16 %v817
    %v917 = vunpack.c.h.b16 %v817
    %v918 = vunpack.c.l.b16 %v818
    %v919 = vunpack.c.h.b16 %v818
    %v920 = vunpack.c.l.b16 %v819
    %v921 = vunpack.c.h.b16 %v819
    %v922 = vunpack.c.l.b16 %v820
    %v923 = vunpack.c.h.b16 %v820
    %v924 = vunpack.c.l.b16 %v821
    %v925 = vunpack.c.h.b16 %v821
    %v926 = vunpack.c.l.b16 %v822
    %v927 = vunpack.c.h.b16 %v822
    %v928 = vunpack.c.l.b16 %v823
    %v929 = vunpack.c.h.b16 %v823
    %v930 = vunpack.c.l.b16 %v824
    %v931 = vunpack.c.h.b16 %v824
    %v932 = vunpack.c.l.b16 %v825
    %v933 = vunpack.c.h.b16 %v825
    %v934 = vunpack.c.l.b16 %v826
    %v935 = vunpack.c.h.b16 %v826
    %v936 = vunpack.c.l.b16 %v827
    %v937 = vunpack.c.h.b16 %v827
    %v938 = vunpack.c.l.b16 %v828
    %v939 = vunpack.c.h.b16 %v828
    %v940 = vunpack.c.l.b16 %v829
    %v941 = vunpack.c.h.b16 %v829
    %v942 = vpack.c.b16 %v912, %v910
    %v943 = vpack.c.b16 %v913, %v911
    %v944 = vpack.c.b16 %v916, %v914
    %v945 = vpack.c.b16 %v917, %v915
    %v946 = vpack.c.b16 %v920, %v918
    %v947 = vpack.c.b16 %v921, %v919
    %v948 = vpack.c.b16 %v924, %v922
    %v949 = vpack.c.b16 %v925, %v923
    %v950 = vpack.c.b16 %v928, %v926
    %v951 = vpack.c.b16 %v929, %v927
    %v952 = vpack.c.b16 %v932, %v930
    %v953 = vpack.c.b16 %v933, %v931
    %v954 = vpack.c.b16 %v936, %v934
    %v955 = vpack.c.b16 %v937, %v935
    %v956 = vpack.c.b16 %v940, %v938
    %v957 = vpack.c.b16 %v941, %v939
    %v1038 = vunpack.c.l.b16 %v830
    %v1039 = vunpack.c.h.b16 %v830
    %v1040 = vunpack.c.l.b16 %v831
    %v1041 = vunpack.c.l.b16 %v832
    %v1042 = vunpack.c.h.b16 %v832
    %v1043 = vunpack.c.l.b16 %v833
    %v1044 = vunpack.c.l.b16 %v834
    %v1045 = vunpack.c.h.b16 %v834
    %v1046 = vunpack.c.l.b16 %v835
    %v1047 = vunpack.c.l.b16 %v836
    %v1048 = vunpack.c.h.b16 %v836
    %v1049 = vunpack.c.l.b16 %v837
    %v1050 = vunpack.c.l.b16 %v838
    %v1051 = vunpack.c.h.b16 %v838
    %v1052 = vunpack.c.l.b16 %v839
    %v1053 = vunpack.c.l.b16 %v840
    %v1054 = vunpack.c.h.b16 %v840
    %v1055 = vunpack.c.l.b16 %v841
    %v1056 = vunpack.c.l.b16 %v842
    %v1057 = vunpack.c.h.b16 %v842
    %v1058 = vunpack.c.l.b16 %v843
    %v1059 = vunpack.c.l.b16 %v844
    %v1060 = vunpack.c.h.b16 %v844
    %v1061 = vunpack.c.l.b16 %v845
    %v1062 = vunpack.c.l.b16 %v846
    %v1063 = vunpack.c.h.b16 %v846
    %v1064 = vunpack.c.l.b16 %v847
    %v1065 = vunpack.c.l.b16 %v848
    %v1066 = vunpack.c.h.b16 %v848
    %v1067 = vunpack.c.l.b16 %v849
    %v1068 = vunpack.c.l.b16 %v850
    %v1069 = vunpack.c.h.b16 %v850
    %v1070 = vunpack.c.l.b16 %v851
    %v1071 = vunpack.c.l.b16 %v852
    %v1072 = vunpack.c.h.b16 %v852
    %v1073 = vunpack.c.l.b16 %v853
    %v1074 = vunpack.c.l.b16 %v854
    %v1075 = vunpack.c.h.b16 %v854
    %v1076 = vunpack.c.l.b16 %v855
    %v1077 = vunpack.c.l.b16 %v856
    %v1078 = vunpack.c.h.b16 %v856
    %v1079 = vunpack.c.l.b16 %v857
    %v1080 = vunpack.c.l.b16 %v858
    %v1081 = vunpack.c.h.b16 %v858
    %v1082 = vunpack.c.l.b16 %v859
    %v1083 = vunpack.c.l.b16 %v860
    %v1084 = vunpack.c.h.b16 %v860
    %v1085 = vunpack.c.l.b16 %v861
    %v1086 = vunpack.c.l.b16 %v862
    %v1087 = vunpack.c.h.b16 %v862
    %v1088 = vunpack.c.l.b16 %v863
    %v1089 = vunpack.c.l.b16 %v864
    %v1090 = vunpack.c.h.b16 %v864
    %v1091 = vunpack.c.l.b16 %v865
    %v1092 = vunpack.c.l.b16 %v866
    %v1093 = vunpack.c.h.b16 %v866
    %v1094 = vunpack.c.l.b16 %v867
    %v1095 = vunpack.c.l.b16 %v868
    %v1096 = vunpack.c.h.b16 %v868
    %v1097 = vunpack.c.l.b16 %v869
    %v1098 = vunpack.c.l.b16 %v870
    %v1099 = vunpack.c.h.b16 %v870
    %v1100 = vunpack.c.l.b16 %v871
    %v1101 = vunpack.c.l.b16 %v872
    %v1102 = vunpack.c.h.b16 %v872
    %v1103 = vunpack.c.l.b16 %v873
    %v1104 = vunpack.c.l.b16 %v874
    %v1105 = vunpack.c.h.b16 %v874
    %v1106 = vunpack.c.l.b16 %v875
    %v1107 = vunpack.c.l.b16 %v876
    %v1108 = vunpack.c.h.b16 %v876
    %v1109 = vunpack.c.l.b16 %v877
    %v1110 = vunpack.c.l.b16 %v878
    %v1111 = vunpack.c.h.b16 %v878
    %v1112 = vunpack.c.l.b16 %v879
    %v1113 = vunpack.c.l.b16 %v880
    %v1114 = vunpack.c.h.b16 %v880
    %v1115 = vunpack.c.l.b16 %v881
    %v1116 = vunpack.c.l.b16 %v882
    %v1117 = vunpack.c.h.b16 %v882
    %v1118 = vunpack.c.l.b16 %v883
    %v1119 = vunpack.c.l.b16 %v884
    %v1120 = vunpack.c.h.b16 %v884
    %v1121 = vunpack.c.l.b16 %v885
    %v1122 = vunpack.c.l.b16 %v886
    %v1123 = vunpack.c.h.b16 %v886
    %v1124 = vunpack.c.l.b16 %v887
    %v1125 = vunpack.c.l.b16 %v888
    %v1126 = vunpack.c.h.b16 %v888
    %v1127 = vunpack.c.l.b16 %v889
    %v1128 = vunpack.c.l.b16 %v890
    %v1129 = vunpack.c.h.b16 %v890
    %v1130 = vunpack.c.l.b16 %v891
    %v1131 = vunpack.c.l.b16 %v892
    %v1132 = vunpack.c.h.b16 %v892
    %v1133 = vunpack.c.l.b16 %v893
    %v1134 = vpack.c.b16 %v1041, %v1038
    %v1135 = vpack.c.b16 %v1042, %v1039
    %v1136 = vpack.c.b16 %v1043, %v1040
    %v1137 = vpack.c.b16 %v1047, %v1044
    %v1138 = vpack.c.b16 %v1048, %v1045
    %v1139 = vpack.c.b16 %v1049, %v1046
    %v1140 = vpack.c.b16 %v1053, %v1050
    %v1141 = vpack.c.b16 %v1054, %v1051
    %v1142 = vpack.c.b16 %v1055, %v1052
    %v1143 = vpack.c.b16 %v1059, %v1056
    %v1144 = vpack.c.b16 %v1060, %v1057
    %v1145 = vpack.c.b16 %v1061, %v1058
    %v1146 = vpack.c.b16 %v1065, %v1062
    %v1147 = vpack.c.b16 %v1066, %v1063
    %v1148 = vpack.c.b16 %v1067, %v1064
    %v1149 = vpack.c.b16 %v1071, %v1068
    %v1150 = vpack.c.b16 %v1072, %v1069
    %v1151 = vpack.c.b16 %v1073, %v1070
    %v1152 = vpack.c.b16 %v1077, %v1074
    %v1153 = vpack.c.b16 %v1078, %v1075
    %v1154 = vpack.c.b16 %v1079, %v1076
    %v1155 = vpack.c.b16 %v1083, %v1080
    %v1156 = vpack.c.b16 %v1084, %v1081
    %v1157 = vpack.c.b16 %v1085, %v1082
    %v1158 = vpack.c.b16 %v1089, %v1086
    %v1159 = vpack.c.b16 %v1090, %v1087
    %v1160 = vpack.c.b16 %v1091, %v1088
    %v1161 = vpack.c.b16 %v1095, %v1092
    %v1162 = vpack.c.b16 %v1096, %v1093
    %v1163 = vpack.c.b16 %v1097, %v1094
    %v1164 = vpack.c.b16 %v1101, %v1098
    %v1165 = vpack.c.b16 %v1102, %v1099
    %v1166 = vpack.c.b16 %v1103, %v1100
    %v1167 = vpack.c.b16 %v1107, %v1104
    %v1168 = vpack.c.b16 %v1108, %v1105
    %v1169 = vpack.c.b16 %v1109, %v1106
    %v1170 = vpack.c.b16 %v1113, %v1110
    %v1171 = vpack.c.b16 %v1114, %v1111
    %v1172 = vpack.c.b16 %v1115, %v1112
    %v1173 = vpack.c.b16 %v1119, %v1116
    %v1174 = vpack.c.b16 %v1120, %v1117
    %v1175 = vpack.c.b16 %v1121, %v1118
    %v1176 = vpack.c.b16 %v1125, %v1122
    %v1177 = vpack.c.b16 %v1126, %v1123
    %v1178 = vpack.c.b16 %v1127, %v1124
    %v1179 = vpack.c.b16 %v1131, %v1128
    %v1180 = vpack.c.b16 %v1132, %v1129
    %v1181 = vpack.c.b16 %v1133, %v1130
    %1230 = vmatprep.subr.bf16.mxu0 %v1135
    %1231 = vmatpush1.bf16.msra.mxu0 %v1134
    %1232 = vmatprep.subr.bf16.mxu0 %v1138
    %1233 = vmatpush1.bf16.msra.mxu0 %v1137
    %1234 = vmatprep.subr.bf16.mxu0 %v1141
    %1235 = vmatpush1.bf16.msra.mxu0 %v1140
    %1236 = vmatprep.subr.bf16.mxu0 %v1144
    %1237 = vmatpush1.bf16.msra.mxu0 %v1143
    %1238 = vmatprep.subr.bf16.mxu0 %v1147
    %1239 = vmatpush1.bf16.msra.mxu0 %v1146
    %1240 = vmatprep.subr.bf16.mxu0 %v1150
    %1241 = vmatpush1.bf16.msra.mxu0 %v1149
    %1242 = vmatprep.subr.bf16.mxu0 %v1153
    %1243 = vmatpush1.bf16.msra.mxu0 %v1152
    %1244 = vmatprep.subr.bf16.mxu0 %v1156
    %1245 = vmatpush1.bf16.msra.mxu0 %v1155
    %1246 = vmatprep.subr.bf16.mxu0 %v1159
    %1247 = vmatpush1.bf16.msra.mxu0 %v1158
    %1248 = vmatprep.subr.bf16.mxu0 %v1162
    %1249 = vmatpush1.bf16.msra.mxu0 %v1161
    %1250 = vmatprep.subr.bf16.mxu0 %v1165
    %1251 = vmatpush1.bf16.msra.mxu0 %v1164
    %1252 = vmatprep.subr.bf16.mxu0 %v1168
    %1253 = vmatpush1.bf16.msra.mxu0 %v1167
    %1254 = vmatprep.subr.bf16.mxu0 %v1171
    %1255 = vmatpush1.bf16.msra.mxu0 %v1170
    %1256 = vmatprep.subr.bf16.mxu0 %v1174
    %1257 = vmatpush1.bf16.msra.mxu0 %v1173
    %1258 = vmatprep.subr.bf16.mxu0 %v1177
    %1259 = vmatpush1.bf16.msra.mxu0 %v1176
    %1260 = vmatprep.subr.bf16.mxu0 %v1180
    %1261 = vmatpush1.bf16.msra.mxu0 %v1179
    %1262 = vmatprep.mubr.bf16.mxu0 %v943
    %1263 = vmatmul.mubr.bf16.gmra.mrb[0].mxu0 %v942
    %v1264 = vpop.f32.mrb[0].mxu0
    %v1265 = vadd.f32 0.0, %v1264
    %v1266 = vpop.f32.mrb[0].mxu0
    %v1267 = vadd.f32 0.0, %v1266
    %v1268 = vpop.f32.mrb[0].mxu0
    %v1269 = vadd.f32 0.0, %v1268
    %v1270 = vpop.f32.mrb[0].mxu0
    %v1271 = vadd.f32 0.0, %v1270
    %1272 = vmatprep.mubr.bf16.mxu0 %v945
    %1273 = vmatmul.mubr.bf16.gmra.mrb[0].mxu0 %v944
    %v1274 = vpop.f32.mrb[0].mxu0
    %v1275 = vadd.f32 0.0, %v1274
    %v1276 = vpop.f32.mrb[0].mxu0
    %v1277 = vadd.f32 0.0, %v1276
    %v1278 = vpop.f32.mrb[0].mxu0
    %v1279 = vadd.f32 0.0, %v1278
    %v1280 = vpop.f32.mrb[0].mxu0
    %v1281 = vadd.f32 0.0, %v1280
    %1282 = vmatprep.mubr.bf16.mxu0 %v947
    %1283 = vmatmul.mubr.bf16.gmra.mrb[0].mxu0 %v946
    %v1284 = vpop.f32.mrb[0].mxu0
    %v1285 = vadd.f32 0.0, %v1284
    %v1286 = vpop.f32.mrb[0].mxu0
    %v1287 = vadd.f32 0.0, %v1286
    %v1288 = vpop.f32.mrb[0].mxu0
    %v1289 = vadd.f32 0.0, %v1288
    %v1290 = vpop.f32.mrb[0].mxu0
    %v1291 = vadd.f32 0.0, %v1290
    %1292 = vmatprep.mubr.bf16.mxu0 %v949
    %1293 = vmatmul.mubr.bf16.gmra.mrb[0].mxu0 %v948
    %v1294 = vpop.f32.mrb[0].mxu0
    %v1295 = vadd.f32 0.0, %v1294
    %v1296 = vpop.f32.mrb[0].mxu0
    %v1297 = vadd.f32 0.0, %v1296
    %v1298 = vpop.f32.mrb[0].mxu0
    %v1299 = vadd.f32 0.0, %v1298
    %v1300 = vpop.f32.mrb[0].mxu0
    %v1301 = vadd.f32 0.0, %v1300
    %1302 = vmatprep.mubr.bf16.mxu0 %v951
    %1303 = vmatmul.mubr.bf16.gmra.mrb[0].mxu0 %v950
    %v1304 = vpop.f32.mrb[0].mxu0
    %v1305 = vadd.f32 0.0, %v1304
    %v1306 = vpop.f32.mrb[0].mxu0
    %v1307 = vadd.f32 0.0, %v1306
    %v1308 = vpop.f32.mrb[0].mxu0
    %v1309 = vadd.f32 0.0, %v1308
    %v1310 = vpop.f32.mrb[0].mxu0
    %v1311 = vadd.f32 0.0, %v1310
    %1312 = vmatprep.mubr.bf16.mxu0 %v953
    %1313 = vmatmul.mubr.bf16.gmra.mrb[0].mxu0 %v952
    %v1314 = vpop.f32.mrb[0].mxu0
    %v1315 = vadd.f32 0.0, %v1314
    %v1316 = vpop.f32.mrb[0].mxu0
    %v1317 = vadd.f32 0.0, %v1316
    %v1318 = vpop.f32.mrb[0].mxu0
    %v1319 = vadd.f32 0.0, %v1318
    %v1320 = vpop.f32.mrb[0].mxu0
    %v1321 = vadd.f32 0.0, %v1320
    %1322 = vmatprep.mubr.bf16.mxu0 %v955
    %1323 = vmatmul.mubr.bf16.gmra.mrb[0].mxu0 %v954
    %v1324 = vpop.f32.mrb[0].mxu0
    %v1325 = vadd.f32 0.0, %v1324
    %v1326 = vpop.f32.mrb[0].mxu0
    %v1327 = vadd.f32 0.0, %v1326
    %v1328 = vpop.f32.mrb[0].mxu0
    %v1329 = vadd.f32 0.0, %v1328
    %v1330 = vpop.f32.mrb[0].mxu0
    %v1331 = vadd.f32 0.0, %v1330
    %1332 = vmatprep.mubr.bf16.mxu0 %v957
    %1333 = vmatmul.mubr.bf16.gmra.mrb[0].mxu0 %v956
    %v1334 = vpop.f32.mrb[0].mxu0
    %v1335 = vadd.f32 0.0, %v1334
    %v1336 = vpop.f32.mrb[0].mxu0
    %v1337 = vadd.f32 0.0, %v1336
    %v1338 = vpop.f32.mrb[0].mxu0
    %v1339 = vadd.f32 0.0, %v1338
    %v1340 = vpop.f32.mrb[0].mxu0
    %v1341 = vadd.f32 0.0, %v1340
    %1342 = vdwg.mxu0
    %1343 = vmatprep.subr.bf16.mxu0 0
    %1344 = vmatpush1.bf16.msra.mxu0 %v1136
    %1345 = vmatprep.subr.bf16.mxu0 0
    %1346 = vmatpush1.bf16.msra.mxu0 %v1139
    %1347 = vmatprep.subr.bf16.mxu0 0
    %1348 = vmatpush1.bf16.msra.mxu0 %v1142
    %1349 = vmatprep.subr.bf16.mxu0 0
    %1350 = vmatpush1.bf16.msra.mxu0 %v1145
    %1351 = vmatprep.subr.bf16.mxu0 0
    %1352 = vmatpush1.bf16.msra.mxu0 %v1148
    %1353 = vmatprep.subr.bf16.mxu0 0
    %1354 = vmatpush1.bf16.msra.mxu0 %v1151
    %1355 = vmatprep.subr.bf16.mxu0 0
    %1356 = vmatpush1.bf16.msra.mxu0 %v1154
    %1357 = vmatprep.subr.bf16.mxu0 0
    %1358 = vmatpush1.bf16.msra.mxu0 %v1157
    %1359 = vmatprep.subr.bf16.mxu0 0
    %1360 = vmatpush1.bf16.msra.mxu0 %v1160
    %1361 = vmatprep.subr.bf16.mxu0 0
    %1362 = vmatpush1.bf16.msra.mxu0 %v1163
    %1363 = vmatprep.subr.bf16.mxu0 0
    %1364 = vmatpush1.bf16.msra.mxu0 %v1166
    %1365 = vmatprep.subr.bf16.mxu0 0
    %1366 = vmatpush1.bf16.msra.mxu0 %v1169
    %1367 = vmatprep.subr.bf16.mxu0 0
    %1368 = vmatpush1.bf16.msra.mxu0 %v1172
    %1369 = vmatprep.subr.bf16.mxu0 0
    %1370 = vmatpush1.bf16.msra.mxu0 %v1175
    %1371 = vmatprep.subr.bf16.mxu0 0
    %1372 = vmatpush1.bf16.msra.mxu0 %v1178
    %1373 = vmatprep.subr.bf16.mxu0 0
    %1374 = vmatpush1.bf16.msra.mxu0 %v1181
    %1375 = vmatprep.mubr.bf16.mxu0 %v943
    %1376 = vmatmul.mubr.bf16.gmra.mrb[0].mxu0 %v942
    %v1377 = vpop.f32.mrb[0].mxu0
    %v1378 = vadd.f32 0.0, %v1377
    %v1379 = vpop.f32.mrb[0].mxu0
    %v1380 = vpop.f32.mrb[0].mxu0
    %v1381 = vadd.f32 0.0, %v1380
    %v1382 = vpop.f32.mrb[0].mxu0
    %1383 = vmatprep.mubr.bf16.mxu0 %v945
    %1384 = vmatmul.mubr.bf16.gmra.mrb[0].mxu0 %v944
    %v1385 = vpop.f32.mrb[0].mxu0
    %v1386 = vadd.f32 0.0, %v1385
    %v1387 = vpop.f32.mrb[0].mxu0
    %v1388 = vpop.f32.mrb[0].mxu0
    %v1389 = vadd.f32 0.0, %v1388
    %v1390 = vpop.f32.mrb[0].mxu0
    %1391 = vmatprep.mubr.bf16.mxu0 %v947
    %1392 = vmatmul.mubr.bf16.gmra.mrb[0].mxu0 %v946
    %v1393 = vpop.f32.mrb[0].mxu0
    %v1394 = vadd.f32 0.0, %v1393
    %v1395 = vpop.f32.mrb[0].mxu0
    %v1396 = vpop.f32.mrb[0].mxu0
    %v1397 = vadd.f32 0.0, %v1396
    %v1398 = vpop.f32.mrb[0].mxu0
    %1399 = vmatprep.mubr.bf16.mxu0 %v949
    %1400 = vmatmul.mubr.bf16.gmra.mrb[0].mxu0 %v948
    %v1401 = vpop.f32.mrb[0].mxu0
    %v1402 = vadd.f32 0.0, %v1401
    %v1403 = vpop.f32.mrb[0].mxu0
    %v1404 = vpop.f32.mrb[0].mxu0
    %v1405 = vadd.f32 0.0, %v1404
    %v1406 = vpop.f32.mrb[0].mxu0
    %1407 = vmatprep.mubr.bf16.mxu0 %v951
    %1408 = vmatmul.mubr.bf16.gmra.mrb[0].mxu0 %v950
    %v1409 = vpop.f32.mrb[0].mxu0
    %v1410 = vadd.f32 0.0, %v1409
    %v1411 = vpop.f32.mrb[0].mxu0
    %v1412 = vpop.f32.mrb[0].mxu0
    %v1413 = vadd.f32 0.0, %v1412
    %v1414 = vpop.f32.mrb[0].mxu0
    %1415 = vmatprep.mubr.bf16.mxu0 %v953
    %1416 = vmatmul.mubr.bf16.gmra.mrb[0].mxu0 %v952
    %v1417 = vpop.f32.mrb[0].mxu0
    %v1418 = vadd.f32 0.0, %v1417
    %v1419 = vpop.f32.mrb[0].mxu0
    %v1420 = vpop.f32.mrb[0].mxu0
    %v1421 = vadd.f32 0.0, %v1420
    %v1422 = vpop.f32.mrb[0].mxu0
    %1423 = vmatprep.mubr.bf16.mxu0 %v955
    %1424 = vmatmul.mubr.bf16.gmra.mrb[0].mxu0 %v954
    %v1425 = vpop.f32.mrb[0].mxu0
    %v1426 = vadd.f32 0.0, %v1425
    %v1427 = vpop.f32.mrb[0].mxu0
    %v1428 = vpop.f32.mrb[0].mxu0
    %v1429 = vadd.f32 0.0, %v1428
    %v1430 = vpop.f32.mrb[0].mxu0
    %1431 = vmatprep.mubr.bf16.mxu0 %v957
    %1432 = vmatmul.mubr.bf16.gmra.mrb[0].mxu0 %v956
    %v1433 = vpop.f32.mrb[0].mxu0
    %v1434 = vadd.f32 0.0, %v1433
    %v1435 = vpop.f32.mrb[0].mxu0
    %v1436 = vpop.f32.mrb[0].mxu0
    %v1437 = vadd.f32 0.0, %v1436
    %v1438 = vpop.f32.mrb[0].mxu0
    %1439 = vdwg.mxu0
    %v1504 = vunpack.c.l.b16 %v750
    %v1505 = vunpack.c.h.b16 %v750
    %v1506 = vunpack.c.l.b16 %v751
    %v1507 = vunpack.c.l.b16 %v752
    %v1508 = vunpack.c.h.b16 %v752
    %v1509 = vunpack.c.l.b16 %v753
    %v1510 = vunpack.c.l.b16 %v754
    %v1511 = vunpack.c.h.b16 %v754
    %v1512 = vunpack.c.l.b16 %v755
    %v1513 = vunpack.c.l.b16 %v756
    %v1514 = vunpack.c.h.b16 %v756
    %v1515 = vunpack.c.l.b16 %v757
    %v1516 = vunpack.c.l.b16 %v758
    %v1517 = vunpack.c.h.b16 %v758
    %v1518 = vunpack.c.l.b16 %v759
    %v1519 = vunpack.c.l.b16 %v760
    %v1520 = vunpack.c.h.b16 %v760
    %v1521 = vunpack.c.l.b16 %v761
    %v1522 = vunpack.c.l.b16 %v762
    %v1523 = vunpack.c.h.b16 %v762
    %v1524 = vunpack.c.l.b16 %v763
    %v1525 = vunpack.c.l.b16 %v764
    %v1526 = vunpack.c.h.b16 %v764
    %v1527 = vunpack.c.l.b16 %v765
    %v1528 = vunpack.c.l.b16 %v766
    %v1529 = vunpack.c.h.b16 %v766
    %v1530 = vunpack.c.l.b16 %v767
    %v1531 = vunpack.c.l.b16 %v768
    %v1532 = vunpack.c.h.b16 %v768
    %v1533 = vunpack.c.l.b16 %v769
    %v1534 = vunpack.c.l.b16 %v770
    %v1535 = vunpack.c.h.b16 %v770
    %v1536 = vunpack.c.l.b16 %v771
    %v1537 = vunpack.c.l.b16 %v772
    %v1538 = vunpack.c.h.b16 %v772
    %v1539 = vunpack.c.l.b16 %v773
    %v1540 = vunpack.c.l.b16 %v774
    %v1541 = vunpack.c.h.b16 %v774
    %v1542 = vunpack.c.l.b16 %v775
    %v1543 = vunpack.c.l.b16 %v776
    %v1544 = vunpack.c.h.b16 %v776
    %v1545 = vunpack.c.l.b16 %v777
    %v1546 = vunpack.c.l.b16 %v778
    %v1547 = vunpack.c.h.b16 %v778
    %v1548 = vunpack.c.l.b16 %v779
    %v1549 = vunpack.c.l.b16 %v780
    %v1550 = vunpack.c.h.b16 %v780
    %v1551 = vunpack.c.l.b16 %v781
    %v1552 = vunpack.c.l.b16 %v782
    %v1553 = vunpack.c.h.b16 %v782
    %v1554 = vunpack.c.l.b16 %v783
    %v1555 = vunpack.c.l.b16 %v784
    %v1556 = vunpack.c.h.b16 %v784
    %v1557 = vunpack.c.l.b16 %v785
    %v1558 = vunpack.c.l.b16 %v786
    %v1559 = vunpack.c.h.b16 %v786
    %v1560 = vunpack.c.l.b16 %v787
    %v1561 = vunpack.c.l.b16 %v788
    %v1562 = vunpack.c.h.b16 %v788
    %v1563 = vunpack.c.l.b16 %v789
    %v1564 = vunpack.c.l.b16 %v790
    %v1565 = vunpack.c.h.b16 %v790
    %v1566 = vunpack.c.l.b16 %v791
    %v1567 = vunpack.c.l.b16 %v792
    %v1568 = vunpack.c.h.b16 %v792
    %v1569 = vunpack.c.l.b16 %v793
    %v1570 = vunpack.c.l.b16 %v794
    %v1571 = vunpack.c.h.b16 %v794
    %v1572 = vunpack.c.l.b16 %v795
    %v1573 = vunpack.c.l.b16 %v796
    %v1574 = vunpack.c.h.b16 %v796
    %v1575 = vunpack.c.l.b16 %v797
    %v1576 = vunpack.c.l.b16 %v798
    %v1577 = vunpack.c.h.b16 %v798
    %v1578 = vunpack.c.l.b16 %v799
    %v1579 = vunpack.c.l.b16 %v800
    %v1580 = vunpack.c.h.b16 %v800
    %v1581 = vunpack.c.l.b16 %v801
    %v1582 = vunpack.c.l.b16 %v802
    %v1583 = vunpack.c.h.b16 %v802
    %v1584 = vunpack.c.l.b16 %v803
    %v1585 = vunpack.c.l.b16 %v804
    %v1586 = vunpack.c.h.b16 %v804
    %v1587 = vunpack.c.l.b16 %v805
    %v1588 = vunpack.c.l.b16 %v806
    %v1589 = vunpack.c.h.b16 %v806
    %v1590 = vunpack.c.l.b16 %v807
    %v1591 = vunpack.c.l.b16 %v808
    %v1592 = vunpack.c.h.b16 %v808
    %v1593 = vunpack.c.l.b16 %v809
    %v1594 = vunpack.c.l.b16 %v810
    %v1595 = vunpack.c.h.b16 %v810
    %v1596 = vunpack.c.l.b16 %v811
    %v1597 = vunpack.c.l.b16 %v812
    %v1598 = vunpack.c.h.b16 %v812
    %v1599 = vunpack.c.l.b16 %v813
    %v1600 = vpack.c.b16 %v1507, %v1504
    %v1601 = vpack.c.b16 %v1508, %v1505
    %v1602 = vpack.c.b16 %v1509, %v1506
    %v1603 = vpack.c.b16 %v1513, %v1510
    %v1604 = vpack.c.b16 %v1514, %v1511
    %v1605 = vpack.c.b16 %v1515, %v1512
    %v1606 = vpack.c.b16 %v1519, %v1516
    %v1607 = vpack.c.b16 %v1520, %v1517
    %v1608 = vpack.c.b16 %v1521, %v1518
    %v1609 = vpack.c.b16 %v1525, %v1522
    %v1610 = vpack.c.b16 %v1526, %v1523
    %v1611 = vpack.c.b16 %v1527, %v1524
    %v1612 = vpack.c.b16 %v1531, %v1528
    %v1613 = vpack.c.b16 %v1532, %v1529
    %v1614 = vpack.c.b16 %v1533, %v1530
    %v1615 = vpack.c.b16 %v1537, %v1534
    %v1616 = vpack.c.b16 %v1538, %v1535
    %v1617 = vpack.c.b16 %v1539, %v1536
    %v1618 = vpack.c.b16 %v1543, %v1540
    %v1619 = vpack.c.b16 %v1544, %v1541
    %v1620 = vpack.c.b16 %v1545, %v1542
    %v1621 = vpack.c.b16 %v1549, %v1546
    %v1622 = vpack.c.b16 %v1550, %v1547
    %v1623 = vpack.c.b16 %v1551, %v1548
    %v1624 = vpack.c.b16 %v1555, %v1552
    %v1625 = vpack.c.b16 %v1556, %v1553
    %v1626 = vpack.c.b16 %v1557, %v1554
    %v1627 = vpack.c.b16 %v1561, %v1558
    %v1628 = vpack.c.b16 %v1562, %v1559
    %v1629 = vpack.c.b16 %v1563, %v1560
    %v1630 = vpack.c.b16 %v1567, %v1564
    %v1631 = vpack.c.b16 %v1568, %v1565
    %v1632 = vpack.c.b16 %v1569, %v1566
    %v1633 = vpack.c.b16 %v1573, %v1570
    %v1634 = vpack.c.b16 %v1574, %v1571
    %v1635 = vpack.c.b16 %v1575, %v1572
    %v1636 = vpack.c.b16 %v1579, %v1576
    %v1637 = vpack.c.b16 %v1580, %v1577
    %v1638 = vpack.c.b16 %v1581, %v1578
    %v1639 = vpack.c.b16 %v1585, %v1582
    %v1640 = vpack.c.b16 %v1586, %v1583
    %v1641 = vpack.c.b16 %v1587, %v1584
    %v1642 = vpack.c.b16 %v1591, %v1588
    %v1643 = vpack.c.b16 %v1592, %v1589
    %v1644 = vpack.c.b16 %v1593, %v1590
    %v1645 = vpack.c.b16 %v1597, %v1594
    %v1646 = vpack.c.b16 %v1598, %v1595
    %v1647 = vpack.c.b16 %v1599, %v1596
    %1696 = vmatprep.subr.bf16.mxu0 %v1601
    %1697 = vmatpush1.bf16.msra.mxu0 %v1600
    %1698 = vmatprep.subr.bf16.mxu0 %v1604
    %1699 = vmatpush1.bf16.msra.mxu0 %v1603
    %1700 = vmatprep.subr.bf16.mxu0 %v1607
    %1701 = vmatpush1.bf16.msra.mxu0 %v1606
    %1702 = vmatprep.subr.bf16.mxu0 %v1610
    %1703 = vmatpush1.bf16.msra.mxu0 %v1609
    %1704 = vmatprep.subr.bf16.mxu0 %v1613
    %1705 = vmatpush1.bf16.msra.mxu0 %v1612
    %1706 = vmatprep.subr.bf16.mxu0 %v1616
    %1707 = vmatpush1.bf16.msra.mxu0 %v1615
    %1708 = vmatprep.subr.bf16.mxu0 %v1619
    %1709 = vmatpush1.bf16.msra.mxu0 %v1618
    %1710 = vmatprep.subr.bf16.mxu0 %v1622
    %1711 = vmatpush1.bf16.msra.mxu0 %v1621
    %1712 = vmatprep.subr.bf16.mxu0 %v1625
    %1713 = vmatpush1.bf16.msra.mxu0 %v1624
    %1714 = vmatprep.subr.bf16.mxu0 %v1628
    %1715 = vmatpush1.bf16.msra.mxu0 %v1627
    %1716 = vmatprep.subr.bf16.mxu0 %v1631
    %1717 = vmatpush1.bf16.msra.mxu0 %v1630
    %1718 = vmatprep.subr.bf16.mxu0 %v1634
    %1719 = vmatpush1.bf16.msra.mxu0 %v1633
    %1720 = vmatprep.subr.bf16.mxu0 %v1637
    %1721 = vmatpush1.bf16.msra.mxu0 %v1636
    %1722 = vmatprep.subr.bf16.mxu0 %v1640
    %1723 = vmatpush1.bf16.msra.mxu0 %v1639
    %1724 = vmatprep.subr.bf16.mxu0 %v1643
    %1725 = vmatpush1.bf16.msra.mxu0 %v1642
    %1726 = vmatprep.subr.bf16.mxu0 %v1646
    %1727 = vmatpush1.bf16.msra.mxu0 %v1645
    %1728 = vmatprep.mubr.bf16.mxu0 %v735
    %1729 = vmatmul.mubr.bf16.gmra.mrb[0].mxu0 %v734
    %v1730 = vpop.f32.mrb[0].mxu0
    %v1731 = vadd.f32 %v1265, %v1730
    %v1732 = vpop.f32.mrb[0].mxu0
    %v1733 = vadd.f32 %v1267, %v1732
    %v1734 = vpop.f32.mrb[0].mxu0
    %v1735 = vadd.f32 %v1269, %v1734
    %v1736 = vpop.f32.mrb[0].mxu0
    %v1737 = vadd.f32 %v1271, %v1736
    %1738 = vmatprep.mubr.bf16.mxu0 %v737
    %1739 = vmatmul.mubr.bf16.gmra.mrb[0].mxu0 %v736
    %v1740 = vpop.f32.mrb[0].mxu0
    %v1741 = vadd.f32 %v1275, %v1740
    %v1742 = vpop.f32.mrb[0].mxu0
    %v1743 = vadd.f32 %v1277, %v1742
    %v1744 = vpop.f32.mrb[0].mxu0
    %v1745 = vadd.f32 %v1279, %v1744
    %v1746 = vpop.f32.mrb[0].mxu0
    %v1747 = vadd.f32 %v1281, %v1746
    %1748 = vmatprep.mubr.bf16.mxu0 %v739
    %1749 = vmatmul.mubr.bf16.gmra.mrb[0].mxu0 %v738
    %v1750 = vpop.f32.mrb[0].mxu0
    %v1751 = vadd.f32 %v1285, %v1750
    %v1752 = vpop.f32.mrb[0].mxu0
    %v1753 = vadd.f32 %v1287, %v1752
    %v1754 = vpop.f32.mrb[0].mxu0
    %v1755 = vadd.f32 %v1289, %v1754
    %v1756 = vpop.f32.mrb[0].mxu0
    %v1757 = vadd.f32 %v1291, %v1756
    %1758 = vmatprep.mubr.bf16.mxu0 %v741
    %1759 = vmatmul.mubr.bf16.gmra.mrb[0].mxu0 %v740
    %v1760 = vpop.f32.mrb[0].mxu0
    %v1761 = vadd.f32 %v1295, %v1760
    %v1762 = vpop.f32.mrb[0].mxu0
    %v1763 = vadd.f32 %v1297, %v1762
    %v1764 = vpop.f32.mrb[0].mxu0
    %v1765 = vadd.f32 %v1299, %v1764
    %v1766 = vpop.f32.mrb[0].mxu0
    %v1767 = vadd.f32 %v1301, %v1766
    %1768 = vmatprep.mubr.bf16.mxu0 %v743
    %1769 = vmatmul.mubr.bf16.gmra.mrb[0].mxu0 %v742
    %v1770 = vpop.f32.mrb[0].mxu0
    %v1771 = vadd.f32 %v1305, %v1770
    %v1772 = vpop.f32.mrb[0].mxu0
    %v1773 = vadd.f32 %v1307, %v1772
    %v1774 = vpop.f32.mrb[0].mxu0
    %v1775 = vadd.f32 %v1309, %v1774
    %v1776 = vpop.f32.mrb[0].mxu0
    %v1777 = vadd.f32 %v1311, %v1776
    %1778 = vmatprep.mubr.bf16.mxu0 %v745
    %1779 = vmatmul.mubr.bf16.gmra.mrb[0].mxu0 %v744
    %v1780 = vpop.f32.mrb[0].mxu0
    %v1781 = vadd.f32 %v1315, %v1780
    %v1782 = vpop.f32.mrb[0].mxu0
    %v1783 = vadd.f32 %v1317, %v1782
    %v1784 = vpop.f32.mrb[0].mxu0
    %v1785 = vadd.f32 %v1319, %v1784
    %v1786 = vpop.f32.mrb[0].mxu0
    %v1787 = vadd.f32 %v1321, %v1786
    %1788 = vmatprep.mubr.bf16.mxu0 %v747
    %1789 = vmatmul.mubr.bf16.gmra.mrb[0].mxu0 %v746
    %v1790 = vpop.f32.mrb[0].mxu0
    %v1791 = vadd.f32 %v1325, %v1790
    %v1792 = vpop.f32.mrb[0].mxu0
    %v1793 = vadd.f32 %v1327, %v1792
    %v1794 = vpop.f32.mrb[0].mxu0
    %v1795 = vadd.f32 %v1329, %v1794
    %v1796 = vpop.f32.mrb[0].mxu0
    %v1797 = vadd.f32 %v1331, %v1796
    %1798 = vmatprep.mubr.bf16.mxu0 %v749
    %1799 = vmatmul.mubr.bf16.gmra.mrb[0].mxu0 %v748
    %v1800 = vpop.f32.mrb[0].mxu0
    %v1801 = vadd.f32 %v1335, %v1800
    %v1802 = vpop.f32.mrb[0].mxu0
    %v1803 = vadd.f32 %v1337, %v1802
    %v1804 = vpop.f32.mrb[0].mxu0
    %v1805 = vadd.f32 %v1339, %v1804
    %v1806 = vpop.f32.mrb[0].mxu0
    %v1807 = vadd.f32 %v1341, %v1806
    %1808 = vdwg.mxu0
    %1809 = vmatprep.subr.bf16.mxu0 0
    %1810 = vmatpush1.bf16.msra.mxu0 %v1602
    %1811 = vmatprep.subr.bf16.mxu0 0
    %1812 = vmatpush1.bf16.msra.mxu0 %v1605
    %1813 = vmatprep.subr.bf16.mxu0 0
    %1814 = vmatpush1.bf16.msra.mxu0 %v1608
    %1815 = vmatprep.subr.bf16.mxu0 0
    %1816 = vmatpush1.bf16.msra.mxu0 %v1611
    %1817 = vmatprep.subr.bf16.mxu0 0
    %1818 = vmatpush1.bf16.msra.mxu0 %v1614
    %1819 = vmatprep.subr.bf16.mxu0 0
    %1820 = vmatpush1.bf16.msra.mxu0 %v1617
    %1821 = vmatprep.subr.bf16.mxu0 0
    %1822 = vmatpush1.bf16.msra.mxu0 %v1620
    %1823 = vmatprep.subr.bf16.mxu0 0
    %1824 = vmatpush1.bf16.msra.mxu0 %v1623
    %1825 = vmatprep.subr.bf16.mxu0 0
    %1826 = vmatpush1.bf16.msra.mxu0 %v1626
    %1827 = vmatprep.subr.bf16.mxu0 0
    %1828 = vmatpush1.bf16.msra.mxu0 %v1629
    %1829 = vmatprep.subr.bf16.mxu0 0
    %1830 = vmatpush1.bf16.msra.mxu0 %v1632
    %1831 = vmatprep.subr.bf16.mxu0 0
    %1832 = vmatpush1.bf16.msra.mxu0 %v1635
    %1833 = vmatprep.subr.bf16.mxu0 0
    %1834 = vmatpush1.bf16.msra.mxu0 %v1638
    %1835 = vmatprep.subr.bf16.mxu0 0
    %1836 = vmatpush1.bf16.msra.mxu0 %v1641
    %1837 = vmatprep.subr.bf16.mxu0 0
    %1838 = vmatpush1.bf16.msra.mxu0 %v1644
    %1839 = vmatprep.subr.bf16.mxu0 0
    %1840 = vmatpush1.bf16.msra.mxu0 %v1647
    %1841 = vmatprep.mubr.bf16.mxu0 %v735
    %1842 = vmatmul.mubr.bf16.gmra.mrb[0].mxu0 %v734
    %v1843 = vpop.f32.mrb[0].mxu0
    %v1844 = vadd.f32 %v1378, %v1843
    %v1845 = vpop.f32.mrb[0].mxu0
    %v1846 = vpop.f32.mrb[0].mxu0
    %v1847 = vadd.f32 %v1381, %v1846
    %v1848 = vpop.f32.mrb[0].mxu0
    %1849 = vmatprep.mubr.bf16.mxu0 %v737
    %1850 = vmatmul.mubr.bf16.gmra.mrb[0].mxu0 %v736
    %v1851 = vpop.f32.mrb[0].mxu0
    %v1852 = vadd.f32 %v1386, %v1851
    %v1853 = vpop.f32.mrb[0].mxu0
    %v1854 = vpop.f32.mrb[0].mxu0
    %v1855 = vadd.f32 %v1389, %v1854
    %v1856 = vpop.f32.mrb[0].mxu0
    %1857 = vmatprep.mubr.bf16.mxu0 %v739
    %1858 = vmatmul.mubr.bf16.gmra.mrb[0].mxu0 %v738
    %v1859 = vpop.f32.mrb[0].mxu0
    %v1860 = vadd.f32 %v1394, %v1859
    %v1861 = vpop.f32.mrb[0].mxu0
    %v1862 = vpop.f32.mrb[0].mxu0
    %v1863 = vadd.f32 %v1397, %v1862
    %v1864 = vpop.f32.mrb[0].mxu0
    %1865 = vmatprep.mubr.bf16.mxu0 %v741
    %1866 = vmatmul.mubr.bf16.gmra.mrb[0].mxu0 %v740
    %v1867 = vpop.f32.mrb[0].mxu0
    %v1868 = vadd.f32 %v1402, %v1867
    %v1869 = vpop.f32.mrb[0].mxu0
    %v1870 = vpop.f32.mrb[0].mxu0
    %v1871 = vadd.f32 %v1405, %v1870
    %v1872 = vpop.f32.mrb[0].mxu0
    %1873 = vmatprep.mubr.bf16.mxu0 %v743
    %1874 = vmatmul.mubr.bf16.gmra.mrb[0].mxu0 %v742
    %v1875 = vpop.f32.mrb[0].mxu0
    %v1876 = vadd.f32 %v1410, %v1875
    %v1877 = vpop.f32.mrb[0].mxu0
    %v1878 = vpop.f32.mrb[0].mxu0
    %v1879 = vadd.f32 %v1413, %v1878
    %v1880 = vpop.f32.mrb[0].mxu0
    %1881 = vmatprep.mubr.bf16.mxu0 %v745
    %1882 = vmatmul.mubr.bf16.gmra.mrb[0].mxu0 %v744
    %v1883 = vpop.f32.mrb[0].mxu0
    %v1884 = vadd.f32 %v1418, %v1883
    %v1885 = vpop.f32.mrb[0].mxu0
    %v1886 = vpop.f32.mrb[0].mxu0
    %v1887 = vadd.f32 %v1421, %v1886
    %v1888 = vpop.f32.mrb[0].mxu0
    %1889 = vmatprep.mubr.bf16.mxu0 %v747
    %1890 = vmatmul.mubr.bf16.gmra.mrb[0].mxu0 %v746
    %v1891 = vpop.f32.mrb[0].mxu0
    %v1892 = vadd.f32 %v1426, %v1891
    %v1893 = vpop.f32.mrb[0].mxu0
    %v1894 = vpop.f32.mrb[0].mxu0
    %v1895 = vadd.f32 %v1429, %v1894
    %v1896 = vpop.f32.mrb[0].mxu0
    %1897 = vmatprep.mubr.bf16.mxu0 %v749
    %1898 = vmatmul.mubr.bf16.gmra.mrb[0].mxu0 %v748
    %v1899 = vpop.f32.mrb[0].mxu0
    %v1900 = vadd.f32 %v1434, %v1899
    %v1901 = vpop.f32.mrb[0].mxu0
    %v1902 = vpop.f32.mrb[0].mxu0
    %v1903 = vadd.f32 %v1437, %v1902
    %v1904 = vpop.f32.mrb[0].mxu0
    %1905 = vdwg.mxu0
    %v1906 = vld [vmem:[%s5] sm:$0x7]
    %v1908 = vlaneseq
    %v1909 = vshrl.u32 %v1908, 7
    %v1910 = vsub.s32 0, %v1909
    %v1911 = vrot.slane %v1906, %v1910
    %v1912 = vlaneseq
    %v1913 = vshrl.u32 %v1912, 7
    %v1914 = vsub.s32 1, %v1913
    %v1915 = vrot.slane %v1906, %v1914
    %v1916 = vlaneseq
    %v1917 = vshrl.u32 %v1916, 7
    %v1918 = vsub.s32 2, %v1917
    %v1919 = vrot.slane %v1906, %v1918
    %v1923 = vadd.f32 %v1731, %v1911
    %v1924 = vadd.f32 %v1733, %v1915
    %v1925 = vadd.f32 %v1844, %v1919
    %v1926 = vadd.f32 %v1735, %v1911
    %v1927 = vadd.f32 %v1737, %v1915
    %v1928 = vadd.f32 %v1847, %v1919
    %v1929 = vadd.f32 %v1741, %v1911
    %v1930 = vadd.f32 %v1743, %v1915
    %v1931 = vadd.f32 %v1852, %v1919
    %v1932 = vadd.f32 %v1745, %v1911
    %v1933 = vadd.f32 %v1747, %v1915
    %v1934 = vadd.f32 %v1855, %v1919
    %v1935 = vadd.f32 %v1751, %v1911
    %v1936 = vadd.f32 %v1753, %v1915
    %v1937 = vadd.f32 %v1860, %v1919
    %v1938 = vadd.f32 %v1755, %v1911
    %v1939 = vadd.f32 %v1757, %v1915
    %v1940 = vadd.f32 %v1863, %v1919
    %v1941 = vadd.f32 %v1761, %v1911
    %v1942 = vadd.f32 %v1763, %v1915
    %v1943 = vadd.f32 %v1868, %v1919
    %v1944 = vadd.f32 %v1765, %v1911
    %v1945 = vadd.f32 %v1767, %v1915
    %v1946 = vadd.f32 %v1871, %v1919
    %v1947 = vadd.f32 %v1771, %v1911
    %v1948 = vadd.f32 %v1773, %v1915
    %v1949 = vadd.f32 %v1876, %v1919
    %v1950 = vadd.f32 %v1775, %v1911
    %v1951 = vadd.f32 %v1777, %v1915
    %v1952 = vadd.f32 %v1879, %v1919
    %v1953 = vadd.f32 %v1781, %v1911
    %v1954 = vadd.f32 %v1783, %v1915
    %v1955 = vadd.f32 %v1884, %v1919
    %v1956 = vadd.f32 %v1785, %v1911
    %v1957 = vadd.f32 %v1787, %v1915
    %v1958 = vadd.f32 %v1887, %v1919
    %v1959 = vadd.f32 %v1791, %v1911
    %v1960 = vadd.f32 %v1793, %v1915
    %v1961 = vadd.f32 %v1892, %v1919
    %v1962 = vadd.f32 %v1795, %v1911
    %v1963 = vadd.f32 %v1797, %v1915
    %v1964 = vadd.f32 %v1895, %v1919
    %v1965 = vadd.f32 %v1801, %v1911
    %v1966 = vadd.f32 %v1803, %v1915
    %v1967 = vadd.f32 %v1900, %v1919
    %v1968 = vadd.f32 %v1805, %v1911
    %v1969 = vadd.f32 %v1807, %v1915
    %v1970 = vadd.f32 %v1903, %v1919
    %v1971 = vpack.c.bf16 %v1926, %v1923
    %v1972 = vpack.c.bf16 %v1927, %v1924
    %v1973 = vpack.c.bf16 %v1928, %v1925
    %v1974 = vpack.c.bf16 %v1932, %v1929
    %v1975 = vpack.c.bf16 %v1933, %v1930
    %v1976 = vpack.c.bf16 %v1934, %v1931
    %v1977 = vpack.c.bf16 %v1938, %v1935
    %v1978 = vpack.c.bf16 %v1939, %v1936
    %v1979 = vpack.c.bf16 %v1940, %v1937
    %v1980 = vpack.c.bf16 %v1944, %v1941
    %v1981 = vpack.c.bf16 %v1945, %v1942
    %v1982 = vpack.c.bf16 %v1946, %v1943
    %v1983 = vpack.c.bf16 %v1950, %v1947
    %v1984 = vpack.c.bf16 %v1951, %v1948
    %v1985 = vpack.c.bf16 %v1952, %v1949
    %v1986 = vpack.c.bf16 %v1956, %v1953
    %v1987 = vpack.c.bf16 %v1957, %v1954
    %v1988 = vpack.c.bf16 %v1958, %v1955
    %v1989 = vpack.c.bf16 %v1962, %v1959
    %v1990 = vpack.c.bf16 %v1963, %v1960
    %v1991 = vpack.c.bf16 %v1964, %v1961
    %v1992 = vpack.c.bf16 %v1968, %v1965
    %v1993 = vpack.c.bf16 %v1969, %v1966
    %v1994 = vpack.c.bf16 %v1970, %v1967
    %v2019 = vunpack.c.l.b16 %v1971
    %v2020 = vunpack.c.l.b16 %v1972
    %v2021 = vunpack.c.l.b16 %v1973
    %v2022 = vunpack.c.h.b16 %v1971
    %v2023 = vunpack.c.h.b16 %v1972
    %v2024 = vunpack.c.h.b16 %v1973
    %v2025 = vunpack.c.l.b16 %v1974
    %v2026 = vunpack.c.l.b16 %v1975
    %v2027 = vunpack.c.l.b16 %v1976
    %v2028 = vunpack.c.h.b16 %v1974
    %v2029 = vunpack.c.h.b16 %v1975
    %v2030 = vunpack.c.h.b16 %v1976
    %v2031 = vunpack.c.l.b16 %v1977
    %v2032 = vunpack.c.l.b16 %v1978
    %v2033 = vunpack.c.l.b16 %v1979
    %v2034 = vunpack.c.h.b16 %v1977
    %v2035 = vunpack.c.h.b16 %v1978
    %v2036 = vunpack.c.h.b16 %v1979
    %v2037 = vunpack.c.l.b16 %v1980
    %v2038 = vunpack.c.l.b16 %v1981
    %v2039 = vunpack.c.l.b16 %v1982
    %v2040 = vunpack.c.h.b16 %v1980
    %v2041 = vunpack.c.h.b16 %v1981
    %v2042 = vunpack.c.h.b16 %v1982
    %v2043 = vunpack.c.l.b16 %v1983
    %v2044 = vunpack.c.l.b16 %v1984
    %v2045 = vunpack.c.l.b16 %v1985
    %v2046 = vunpack.c.h.b16 %v1983
    %v2047 = vunpack.c.h.b16 %v1984
    %v2048 = vunpack.c.h.b16 %v1985
    %v2049 = vunpack.c.l.b16 %v1986
    %v2050 = vunpack.c.l.b16 %v1987
    %v2051 = vunpack.c.l.b16 %v1988
    %v2052 = vunpack.c.h.b16 %v1986
    %v2053 = vunpack.c.h.b16 %v1987
    %v2054 = vunpack.c.h.b16 %v1988
    %v2055 = vunpack.c.l.b16 %v1989
    %v2056 = vunpack.c.l.b16 %v1990
    %v2057 = vunpack.c.l.b16 %v1991
    %v2058 = vunpack.c.h.b16 %v1989
    %v2059 = vunpack.c.h.b16 %v1990
    %v2060 = vunpack.c.h.b16 %v1991
    %v2061 = vunpack.c.l.b16 %v1992
    %v2062 = vunpack.c.l.b16 %v1993
    %v2063 = vunpack.c.l.b16 %v1994
    %v2064 = vunpack.c.h.b16 %v1992
    %v2065 = vunpack.c.h.b16 %v1993
    %v2066 = vunpack.c.h.b16 %v1994
    %v2067 = vpack.c.b16 %v2020, %v2019
    %v2068 = vpack.c.b16 %v2021, %v2021
    %v2069 = vpack.c.b16 %v2023, %v2022
    %v2070 = vpack.c.b16 %v2024, %v2024
    %v2071 = vpack.c.b16 %v2026, %v2025
    %v2072 = vpack.c.b16 %v2027, %v2027
    %v2073 = vpack.c.b16 %v2029, %v2028
    %v2074 = vpack.c.b16 %v2030, %v2030
    %v2075 = vpack.c.b16 %v2032, %v2031
    %v2076 = vpack.c.b16 %v2033, %v2033
    %v2077 = vpack.c.b16 %v2035, %v2034
    %v2078 = vpack.c.b16 %v2036, %v2036
    %v2079 = vpack.c.b16 %v2038, %v2037
    %v2080 = vpack.c.b16 %v2039, %v2039
    %v2081 = vpack.c.b16 %v2041, %v2040
    %v2082 = vpack.c.b16 %v2042, %v2042
    %v2083 = vpack.c.b16 %v2044, %v2043
    %v2084 = vpack.c.b16 %v2045, %v2045
    %v2085 = vpack.c.b16 %v2047, %v2046
    %v2086 = vpack.c.b16 %v2048, %v2048
    %v2087 = vpack.c.b16 %v2050, %v2049
    %v2088 = vpack.c.b16 %v2051, %v2051
    %v2089 = vpack.c.b16 %v2053, %v2052
    %v2090 = vpack.c.b16 %v2054, %v2054
    %v2091 = vpack.c.b16 %v2056, %v2055
    %v2092 = vpack.c.b16 %v2057, %v2057
    %v2093 = vpack.c.b16 %v2059, %v2058
    %v2094 = vpack.c.b16 %v2060, %v2060
    %v2095 = vpack.c.b16 %v2062, %v2061
    %v2096 = vpack.c.b16 %v2063, %v2063
    %v2097 = vpack.c.b16 %v2065, %v2064
    %v2098 = vpack.c.b16 %v2066, %v2066
    %2131 = vst [vmem:[%s6] sm:$0xff] %v2067
    %2132 = vst [vmem:[%s6 + $0x8] sm:$0xf] %v2068
    %2133 = vst [vmem:[%s6 + $0xc] sm:$0xff] %v2069
    %2134 = vst [vmem:[%s6 + $0x14] sm:$0xf] %v2070
    %2135 = vst [vmem:[%s6 + $0x18] sm:$0xff] %v2071
    %2136 = vst [vmem:[%s6 + $0x20] sm:$0xf] %v2072
    %2137 = vst [vmem:[%s6 + $0x24] sm:$0xff] %v2073
    %2138 = vst [vmem:[%s6 + $0x2c] sm:$0xf] %v2074
    %2139 = vst [vmem:[%s6 + $0x30] sm:$0xff] %v2075
    %2140 = vst [vmem:[%s6 + $0x38] sm:$0xf] %v2076
    %2141 = vst [vmem:[%s6 + $0x3c] sm:$0xff] %v2077
    %2142 = vst [vmem:[%s6 + $0x44] sm:$0xf] %v2078
    %2143 = vst [vmem:[%s6 + $0x48] sm:$0xff] %v2079
    %2144 = vst [vmem:[%s6 + $0x50] sm:$0xf] %v2080
    %2145 = vst [vmem:[%s6 + $0x54] sm:$0xff] %v2081
    %2146 = vst [vmem:[%s6 + $0x5c] sm:$0xf] %v2082
    %2147 = vst [vmem:[%s6 + $0x60] sm:$0xff] %v2083
    %2148 = vst [vmem:[%s6 + $0x68] sm:$0xf] %v2084
    %2149 = vst [vmem:[%s6 + $0x6c] sm:$0xff] %v2085
    %2150 = vst [vmem:[%s6 + $0x74] sm:$0xf] %v2086
    %2151 = vst [vmem:[%s6 + $0x78] sm:$0xff] %v2087
    %2152 = vst [vmem:[%s6 + $0x80] sm:$0xf] %v2088
    %2153 = vst [vmem:[%s6 + $0x84] sm:$0xff] %v2089
    %2154 = vst [vmem:[%s6 + $0x8c] sm:$0xf] %v2090
    %2155 = vst [vmem:[%s6 + $0x90] sm:$0xff] %v2091
    %2156 = vst [vmem:[%s6 + $0x98] sm:$0xf] %v2092
    %2157 = vst [vmem:[%s6 + $0x9c] sm:$0xff] %v2093
    %2158 = vst [vmem:[%s6 + $0xa4] sm:$0xf] %v2094
    %2159 = vst [vmem:[%s6 + $0xa8] sm:$0xff] %v2095
    %2160 = vst [vmem:[%s6 + $0xb0] sm:$0xf] %v2096
    %2161 = vst [vmem:[%s6 + $0xb4] sm:$0xff] %v2097
    %2162 = vst [vmem:[%s6 + $0xbc] sm:$0xf] %v2098
  $region33: #{sage_linear_forward.4} parent=0 // pred_fallthru
    _
  // Predicated region
  $region34: #{sage_linear_forward.4} parent=0 // pred_check
    _
  $region35: #{sage_linear_forward.4} parent=0 // pred_check_branch
    %2164 = sbr.rel (0) target = $region37
  $region36: #{sage_linear_forward.4} parent=0 // pred_region
    _
  $region37: #{sage_linear_forward.4} parent=0 // pred_fallthru
    _
  // Predicated region
  $region38: #{sage_linear_forward.4} parent=0 // pred_check
    _
  $region39: #{sage_linear_forward.4} parent=0 // pred_check_branch
    %2166 = sbr.rel (0) target = $region41
  $region40: #{sage_linear_forward.4} parent=0 // pred_region
    _
  $region41: #{sage_linear_forward.4} parent=0 // pred_fallthru
    _

// kernel: sage_linear_forward.5
$region0: #{sage_linear_forward.5}
  #allocation0 [shape = 'u32[]', space=smem, size = 0x4, offset = 0x4, fixed_abs, tag = 'smem constant byte address 0x4 - core index']
  #allocation1 [shape = 'u32[144,128]{1,0:T(1,128)}', space=vmem, size = 0x12000, scoped, tag = 'internal scratch']
  #allocation2 [shape = 'f32[1]{0:T(128)S(6)}', space=smem, size = 0x200, scoped, tag = 'scoped memory for sage_linear_forward.5']
  %s0 = inlined_call_operand.vmem [shape: bf16[128,384], index: 0, kind: input, shape index: {}]
  %s1 = inlined_call_operand.vmem [shape: bf16[128,384], index: 1, kind: input, shape index: {}]
  %s2 = inlined_call_operand.vmem [shape: bf16[384,384], index: 2, kind: input, shape index: {}]
  %s3 = inlined_call_operand.vmem [shape: f32[1,384], index: 3, kind: input, shape index: {}]
  %s4 = inlined_call_operand.vmem [shape: f32[1,384], index: 4, kind: input, shape index: {}]
  %s5 = inlined_call_operand.<no memory space> [shape: f32[1], index: 5, kind: input, shape index: {}]
  %s6 = inlined_call_operand.vmem [shape: f32[1,128], index: 6, kind: output, shape index: {}]
  %s7 = sld [smem:[#allocation0]]
  $region34: #{sage_linear_forward.5} parent=0
    _
  %s9 = ssub.s32 1, %s7
  %s10 = scalar_select 0, %s9, %s7
  %11 = sst [smem:[#allocation2]] %s5
  // Predicated region
  $region2: #{sage_linear_forward.5} parent=0 // pred_check
    _
  $region3: #{sage_linear_forward.5} parent=0 // pred_check_branch
    %13 = sbr.rel (0) target = $region5
  $region4: #{sage_linear_forward.5} parent=0 // pred_region
    _
  $region5: #{sage_linear_forward.5} parent=0 // pred_fallthru
    _
  // Predicated region
  $region6: #{sage_linear_forward.5} parent=0 // pred_check
    _
  $region7: #{sage_linear_forward.5} parent=0 // pred_check_branch
    %15 = sbr.rel (0) target = $region9
  $region8: #{sage_linear_forward.5} parent=0 // pred_region
    _
  $region9: #{sage_linear_forward.5} parent=0 // pred_fallthru
    _
  // Predicated region
  $region10: #{sage_linear_forward.5} parent=0 // pred_check
    _
  $region11: #{sage_linear_forward.5} parent=0 // pred_check_branch
    %17 = sbr.rel (0) target = $region13
  $region12: #{sage_linear_forward.5} parent=0 // pred_region
    _
  $region13: #{sage_linear_forward.5} parent=0 // pred_fallthru
    _
  // Predicated region
  $region14: #{sage_linear_forward.5} parent=0 // pred_check
    _
  $region15: #{sage_linear_forward.5} parent=0 // pred_check_branch
    %19 = sbr.rel (0) target = $region17
  $region16: #{sage_linear_forward.5} parent=0 // pred_region
    _
  $region17: #{sage_linear_forward.5} parent=0 // pred_fallthru
    _
  // Predicated region
  $region18: #{sage_linear_forward.5} parent=0 // pred_check
    _
  $region19: #{sage_linear_forward.5} parent=0 // pred_check_branch
    %21 = sbr.rel (0) target = $region21
  $region20: #{sage_linear_forward.5} parent=0 // pred_region
    _
  $region21: #{sage_linear_forward.5} parent=0 // pred_fallthru
    _
  // Predicated region
  $region22: #{sage_linear_forward.5} parent=0 // pred_check
    _
  $region23: #{sage_linear_forward.5} parent=0 // pred_check_branch
    %23 = sbr.rel (0) target = $region25
  $region24: #{sage_linear_forward.5} parent=0 // pred_region
    _
  $region25: #{sage_linear_forward.5} parent=0 // pred_fallthru
    _
  %v25 = vld [vmem:[%s0] sm:$0xff]
  %v26 = vld [vmem:[%s0 + $0x8] sm:$0xf]
  %v27 = vld [vmem:[%s0 + $0xc] sm:$0xff]
  %v28 = vld [vmem:[%s0 + $0x14] sm:$0xf]
  %v29 = vld [vmem:[%s0 + $0x18] sm:$0xff]
  %v30 = vld [vmem:[%s0 + $0x20] sm:$0xf]
  %v31 = vld [vmem:[%s0 + $0x24] sm:$0xff]
  %v32 = vld [vmem:[%s0 + $0x2c] sm:$0xf]
  %v33 = vld [vmem:[%s0 + $0x30] sm:$0xff]
  %v34 = vld [vmem:[%s0 + $0x38] sm:$0xf]
  %v35 = vld [vmem:[%s0 + $0x3c] sm:$0xff]
  %v36 = vld [vmem:[%s0 + $0x44] sm:$0xf]
  %v37 = vld [vmem:[%s0 + $0x48] sm:$0xff]
  %v38 = vld [vmem:[%s0 + $0x50] sm:$0xf]
  %v39 = vld [vmem:[%s0 + $0x54] sm:$0xff]
  %v40 = vld [vmem:[%s0 + $0x5c] sm:$0xf]
  %v41 = vld [vmem:[%s0 + $0x60] sm:$0xff]
  %v42 = vld [vmem:[%s0 + $0x68] sm:$0xf]
  %v43 = vld [vmem:[%s0 + $0x6c] sm:$0xff]
  %v44 = vld [vmem:[%s0 + $0x74] sm:$0xf]
  %v45 = vld [vmem:[%s0 + $0x78] sm:$0xff]
  %v46 = vld [vmem:[%s0 + $0x80] sm:$0xf]
  %v47 = vld [vmem:[%s0 + $0x84] sm:$0xff]
  %v48 = vld [vmem:[%s0 + $0x8c] sm:$0xf]
  %v49 = vld [vmem:[%s0 + $0x90] sm:$0xff]
  %v50 = vld [vmem:[%s0 + $0x98] sm:$0xf]
  %v51 = vld [vmem:[%s0 + $0x9c] sm:$0xff]
  %v52 = vld [vmem:[%s0 + $0xa4] sm:$0xf]
  %v53 = vld [vmem:[%s0 + $0xa8] sm:$0xff]
  %v54 = vld [vmem:[%s0 + $0xb0] sm:$0xf]
  %v55 = vld [vmem:[%s0 + $0xb4] sm:$0xff]
  %v56 = vld [vmem:[%s0 + $0xbc] sm:$0xf]
  %v57 = vld [vmem:[%s1] sm:$0xff]
  %v58 = vld [vmem:[%s1 + $0x8] sm:$0xf]
  %v59 = vld [vmem:[%s1 + $0xc] sm:$0xff]
  %v60 = vld [vmem:[%s1 + $0x14] sm:$0xf]
  %v61 = vld [vmem:[%s1 + $0x18] sm:$0xff]
  %v62 = vld [vmem:[%s1 + $0x20] sm:$0xf]
  %v63 = vld [vmem:[%s1 + $0x24] sm:$0xff]
  %v64 = vld [vmem:[%s1 + $0x2c] sm:$0xf]
  %v65 = vld [vmem:[%s1 + $0x30] sm:$0xff]
  %v66 = vld [vmem:[%s1 + $0x38] sm:$0xf]
  %v67 = vld [vmem:[%s1 + $0x3c] sm:$0xff]
  %v68 = vld [vmem:[%s1 + $0x44] sm:$0xf]
  %v69 = vld [vmem:[%s1 + $0x48] sm:$0xff]
  %v70 = vld [vmem:[%s1 + $0x50] sm:$0xf]
  %v71 = vld [vmem:[%s1 + $0x54] sm:$0xff]
  %v72 = vld [vmem:[%s1 + $0x5c] sm:$0xf]
  %v73 = vld [vmem:[%s1 + $0x60] sm:$0xff]
  %v74 = vld [vmem:[%s1 + $0x68] sm:$0xf]
  %v75 = vld [vmem:[%s1 + $0x6c] sm:$0xff]
  %v76 = vld [vmem:[%s1 + $0x74] sm:$0xf]
  %v77 = vld [vmem:[%s1 + $0x78] sm:$0xff]
  %v78 = vld [vmem:[%s1 + $0x80] sm:$0xf]
  %v79 = vld [vmem:[%s1 + $0x84] sm:$0xff]
  %v80 = vld [vmem:[%s1 + $0x8c] sm:$0xf]
  %v81 = vld [vmem:[%s1 + $0x90] sm:$0xff]
  %v82 = vld [vmem:[%s1 + $0x98] sm:$0xf]
  %v83 = vld [vmem:[%s1 + $0x9c] sm:$0xff]
  %v84 = vld [vmem:[%s1 + $0xa4] sm:$0xf]
  %v85 = vld [vmem:[%s1 + $0xa8] sm:$0xff]
  %v86 = vld [vmem:[%s1 + $0xb0] sm:$0xf]
  %v87 = vld [vmem:[%s1 + $0xb4] sm:$0xff]
  %v88 = vld [vmem:[%s1 + $0xbc] sm:$0xf]
  %v89 = vmul.bf16 %v25, %v57
  %v90 = vmul.bf16 %v26, %v58
  %v91 = vmul.bf16 %v27, %v59
  %v92 = vmul.bf16 %v28, %v60
  %v93 = vmul.bf16 %v29, %v61
  %v94 = vmul.bf16 %v30, %v62
  %v95 = vmul.bf16 %v31, %v63
  %v96 = vmul.bf16 %v32, %v64
  %v97 = vmul.bf16 %v33, %v65
  %v98 = vmul.bf16 %v34, %v66
  %v99 = vmul.bf16 %v35, %v67
  %v100 = vmul.bf16 %v36, %v68
  %v101 = vmul.bf16 %v37, %v69
  %v102 = vmul.bf16 %v38, %v70
  %v103 = vmul.bf16 %v39, %v71
  %v104 = vmul.bf16 %v40, %v72
  %v105 = vmul.bf16 %v41, %v73
  %v106 = vmul.bf16 %v42, %v74
  %v107 = vmul.bf16 %v43, %v75
  %v108 = vmul.bf16 %v44, %v76
  %v109 = vmul.bf16 %v45, %v77
  %v110 = vmul.bf16 %v46, %v78
  %v111 = vmul.bf16 %v47, %v79
  %v112 = vmul.bf16 %v48, %v80
  %v113 = vmul.bf16 %v49, %v81
  %v114 = vmul.bf16 %v50, %v82
  %v115 = vmul.bf16 %v51, %v83
  %v116 = vmul.bf16 %v52, %v84
  %v117 = vmul.bf16 %v53, %v85
  %v118 = vmul.bf16 %v54, %v86
  %v119 = vmul.bf16 %v55, %v87
  %v120 = vmul.bf16 %v56, %v88
  %v121 = vld [vmem:[%s2] sm:$0xff]
  %v122 = vld [vmem:[%s2 + $0x8] sm:$0xf]
  %v123 = vld [vmem:[%s2 + $0xc] sm:$0xff]
  %v124 = vld [vmem:[%s2 + $0x14] sm:$0xf]
  %v125 = vld [vmem:[%s2 + $0x18] sm:$0xff]
  %v126 = vld [vmem:[%s2 + $0x20] sm:$0xf]
  %v127 = vld [vmem:[%s2 + $0x24] sm:$0xff]
  %v128 = vld [vmem:[%s2 + $0x2c] sm:$0xf]
  %v129 = vld [vmem:[%s2 + $0x30] sm:$0xff]
  %v130 = vld [vmem:[%s2 + $0x38] sm:$0xf]
  %v131 = vld [vmem:[%s2 + $0x3c] sm:$0xff]
  %v132 = vld [vmem:[%s2 + $0x44] sm:$0xf]
  %v133 = vld [vmem:[%s2 + $0x48] sm:$0xff]
  %v134 = vld [vmem:[%s2 + $0x50] sm:$0xf]
  %v135 = vld [vmem:[%s2 + $0x54] sm:$0xff]
  %v136 = vld [vmem:[%s2 + $0x5c] sm:$0xf]
  %v137 = vld [vmem:[%s2 + $0x60] sm:$0xff]
  %v138 = vld [vmem:[%s2 + $0x68] sm:$0xf]
  %v139 = vld [vmem:[%s2 + $0x6c] sm:$0xff]
  %v140 = vld [vmem:[%s2 + $0x74] sm:$0xf]
  %v141 = vld [vmem:[%s2 + $0x78] sm:$0xff]
  %v142 = vld [vmem:[%s2 + $0x80] sm:$0xf]
  %v143 = vld [vmem:[%s2 + $0x84] sm:$0xff]
  %v144 = vld [vmem:[%s2 + $0x8c] sm:$0xf]
  %v145 = vld [vmem:[%s2 + $0x90] sm:$0xff]
  %v146 = vld [vmem:[%s2 + $0x98] sm:$0xf]
  %v147 = vld [vmem:[%s2 + $0x9c] sm:$0xff]
  %v148 = vld [vmem:[%s2 + $0xa4] sm:$0xf]
  %v149 = vld [vmem:[%s2 + $0xa8] sm:$0xff]
  %v150 = vld [vmem:[%s2 + $0xb0] sm:$0xf]
  %v151 = vld [vmem:[%s2 + $0xb4] sm:$0xff]
  %v152 = vld [vmem:[%s2 + $0xbc] sm:$0xf]
  %v153 = vld [vmem:[%s2 + $0xc0] sm:$0xff]
  %v154 = vld [vmem:[%s2 + $0xc8] sm:$0xf]
  %v155 = vld [vmem:[%s2 + $0xcc] sm:$0xff]
  %v156 = vld [vmem:[%s2 + $0xd4] sm:$0xf]
  %v157 = vld [vmem:[%s2 + $0xd8] sm:$0xff]
  %v158 = vld [vmem:[%s2 + $0xe0] sm:$0xf]
  %v159 = vld [vmem:[%s2 + $0xe4] sm:$0xff]
  %v160 = vld [vmem:[%s2 + $0xec] sm:$0xf]
  %v161 = vld [vmem:[%s2 + $0xf0] sm:$0xff]
  %v162 = vld [vmem:[%s2 + $0xf8] sm:$0xf]
  %v163 = vld [vmem:[%s2 + $0xfc] sm:$0xff]
  %v164 = vld [vmem:[%s2 + $0x104] sm:$0xf]
  %v165 = vld [vmem:[%s2 + $0x108] sm:$0xff]
  %v166 = vld [vmem:[%s2 + $0x110] sm:$0xf]
  %v167 = vld [vmem:[%s2 + $0x114] sm:$0xff]
  %v168 = vld [vmem:[%s2 + $0x11c] sm:$0xf]
  %v169 = vld [vmem:[%s2 + $0x120] sm:$0xff]
  %v170 = vld [vmem:[%s2 + $0x128] sm:$0xf]
  %v171 = vld [vmem:[%s2 + $0x12c] sm:$0xff]
  %v172 = vld [vmem:[%s2 + $0x134] sm:$0xf]
  %v173 = vld [vmem:[%s2 + $0x138] sm:$0xff]
  %v174 = vld [vmem:[%s2 + $0x140] sm:$0xf]
  %v175 = vld [vmem:[%s2 + $0x144] sm:$0xff]
  %v176 = vld [vmem:[%s2 + $0x14c] sm:$0xf]
  %v177 = vld [vmem:[%s2 + $0x150] sm:$0xff]
  %v178 = vld [vmem:[%s2 + $0x158] sm:$0xf]
  %v179 = vld [vmem:[%s2 + $0x15c] sm:$0xff]
  %v180 = vld [vmem:[%s2 + $0x164] sm:$0xf]
  %v181 = vld [vmem:[%s2 + $0x168] sm:$0xff]
  %v182 = vld [vmem:[%s2 + $0x170] sm:$0xf]
  %v183 = vld [vmem:[%s2 + $0x174] sm:$0xff]
  %v184 = vld [vmem:[%s2 + $0x17c] sm:$0xf]
  %v185 = vld [vmem:[%s2 + $0x180] sm:$0xff]
  %v186 = vld [vmem:[%s2 + $0x188] sm:$0xf]
  %v187 = vld [vmem:[%s2 + $0x18c] sm:$0xff]
  %v188 = vld [vmem:[%s2 + $0x194] sm:$0xf]
  %v189 = vld [vmem:[%s2 + $0x198] sm:$0xff]
  %v190 = vld [vmem:[%s2 + $0x1a0] sm:$0xf]
  %v191 = vld [vmem:[%s2 + $0x1a4] sm:$0xff]
  %v192 = vld [vmem:[%s2 + $0x1ac] sm:$0xf]
  %v193 = vld [vmem:[%s2 + $0x1b0] sm:$0xff]
  %v194 = vld [vmem:[%s2 + $0x1b8] sm:$0xf]
  %v195 = vld [vmem:[%s2 + $0x1bc] sm:$0xff]
  %v196 = vld [vmem:[%s2 + $0x1c4] sm:$0xf]
  %v197 = vld [vmem:[%s2 + $0x1c8] sm:$0xff]
  %v198 = vld [vmem:[%s2 + $0x1d0] sm:$0xf]
  %v199 = vld [vmem:[%s2 + $0x1d4] sm:$0xff]
  %v200 = vld [vmem:[%s2 + $0x1dc] sm:$0xf]
  %v201 = vld [vmem:[%s2 + $0x1e0] sm:$0xff]
  %v202 = vld [vmem:[%s2 + $0x1e8] sm:$0xf]
  %v203 = vld [vmem:[%s2 + $0x1ec] sm:$0xff]
  %v204 = vld [vmem:[%s2 + $0x1f4] sm:$0xf]
  %v205 = vld [vmem:[%s2 + $0x1f8] sm:$0xff]
  %v206 = vld [vmem:[%s2 + $0x200] sm:$0xf]
  %v207 = vld [vmem:[%s2 + $0x204] sm:$0xff]
  %v208 = vld [vmem:[%s2 + $0x20c] sm:$0xf]
  %v209 = vld [vmem:[%s2 + $0x210] sm:$0xff]
  %v210 = vld [vmem:[%s2 + $0x218] sm:$0xf]
  %v211 = vld [vmem:[%s2 + $0x21c] sm:$0xff]
  %v212 = vld [vmem:[%s2 + $0x224] sm:$0xf]
  %v213 = vld [vmem:[%s2 + $0x228] sm:$0xff]
  %v214 = vld [vmem:[%s2 + $0x230] sm:$0xf]
  %v215 = vld [vmem:[%s2 + $0x234] sm:$0xff]
  %v216 = vld [vmem:[%s2 + $0x23c] sm:$0xf]
  %v217 = vld [vmem:[%s3] sm:$0x7]
  %v219 = vlaneseq
  %v220 = vshrl.u32 %v219, 7
  %v221 = vsub.s32 0, %v220
  %v222 = vrot.slane %v217, %v221
  %v223 = vlaneseq
  %v224 = vshrl.u32 %v223, 7
  %v225 = vsub.s32 1, %v224
  %v226 = vrot.slane %v217, %v225
  %v227 = vlaneseq
  %v228 = vshrl.u32 %v227, 7
  %v229 = vsub.s32 2, %v228
  %v230 = vrot.slane %v217, %v229
  %v266 = vunpack.c.l.b16 %v89
  %v267 = vunpack.c.h.b16 %v89
  %v268 = vunpack.c.l.b16 %v90
  %v269 = vunpack.c.l.b16 %v91
  %v270 = vunpack.c.h.b16 %v91
  %v271 = vunpack.c.l.b16 %v92
  %v272 = vunpack.c.l.b16 %v93
  %v273 = vunpack.c.h.b16 %v93
  %v274 = vunpack.c.l.b16 %v94
  %v275 = vunpack.c.l.b16 %v95
  %v276 = vunpack.c.h.b16 %v95
  %v277 = vunpack.c.l.b16 %v96
  %v278 = vunpack.c.l.b16 %v97
  %v279 = vunpack.c.h.b16 %v97
  %v280 = vunpack.c.l.b16 %v98
  %v281 = vunpack.c.l.b16 %v99
  %v282 = vunpack.c.h.b16 %v99
  %v283 = vunpack.c.l.b16 %v100
  %v284 = vunpack.c.l.b16 %v101
  %v285 = vunpack.c.h.b16 %v101
  %v286 = vunpack.c.l.b16 %v102
  %v287 = vunpack.c.l.b16 %v103
  %v288 = vunpack.c.h.b16 %v103
  %v289 = vunpack.c.l.b16 %v104
  %v290 = vunpack.c.l.b16 %v105
  %v291 = vunpack.c.h.b16 %v105
  %v292 = vunpack.c.l.b16 %v106
  %v293 = vunpack.c.l.b16 %v107
  %v294 = vunpack.c.h.b16 %v107
  %v295 = vunpack.c.l.b16 %v108
  %v296 = vunpack.c.l.b16 %v109
  %v297 = vunpack.c.h.b16 %v109
  %v298 = vunpack.c.l.b16 %v110
  %v299 = vunpack.c.l.b16 %v111
  %v300 = vunpack.c.h.b16 %v111
  %v301 = vunpack.c.l.b16 %v112
  %v302 = vunpack.c.l.b16 %v113
  %v303 = vunpack.c.h.b16 %v113
  %v304 = vunpack.c.l.b16 %v114
  %v305 = vunpack.c.l.b16 %v115
  %v306 = vunpack.c.h.b16 %v115
  %v307 = vunpack.c.l.b16 %v116
  %v308 = vunpack.c.l.b16 %v117
  %v309 = vunpack.c.h.b16 %v117
  %v310 = vunpack.c.l.b16 %v118
  %v311 = vunpack.c.l.b16 %v119
  %v312 = vunpack.c.h.b16 %v119
  %v313 = vunpack.c.l.b16 %v120
  %v314 = vpack.c.b16 %v269, %v266
  %v315 = vpack.c.b16 %v270, %v267
  %v316 = vpack.c.b16 %v271, %v268
  %v317 = vpack.c.b16 %v275, %v272
  %v318 = vpack.c.b16 %v276, %v273
  %v319 = vpack.c.b16 %v277, %v274
  %v320 = vpack.c.b16 %v281, %v278
  %v321 = vpack.c.b16 %v282, %v279
  %v322 = vpack.c.b16 %v283, %v280
  %v323 = vpack.c.b16 %v287, %v284
  %v324 = vpack.c.b16 %v288, %v285
  %v325 = vpack.c.b16 %v289, %v286
  %v326 = vpack.c.b16 %v293, %v290
  %v327 = vpack.c.b16 %v294, %v291
  %v328 = vpack.c.b16 %v295, %v292
  %v329 = vpack.c.b16 %v299, %v296
  %v330 = vpack.c.b16 %v300, %v297
  %v331 = vpack.c.b16 %v301, %v298
  %v332 = vpack.c.b16 %v305, %v302
  %v333 = vpack.c.b16 %v306, %v303
  %v334 = vpack.c.b16 %v307, %v304
  %v335 = vpack.c.b16 %v311, %v308
  %v336 = vpack.c.b16 %v312, %v309
  %v337 = vpack.c.b16 %v313, %v310
  %v458 = vunpack.c.l.b16 %v121
  %v459 = vunpack.c.h.b16 %v121
  %v460 = vunpack.c.l.b16 %v122
  %v461 = vunpack.c.l.b16 %v123
  %v462 = vunpack.c.h.b16 %v123
  %v463 = vunpack.c.l.b16 %v124
  %v464 = vunpack.c.l.b16 %v125
  %v465 = vunpack.c.h.b16 %v125
  %v466 = vunpack.c.l.b16 %v126
  %v467 = vunpack.c.l.b16 %v127
  %v468 = vunpack.c.h.b16 %v127
  %v469 = vunpack.c.l.b16 %v128
  %v470 = vunpack.c.l.b16 %v129
  %v471 = vunpack.c.h.b16 %v129
  %v472 = vunpack.c.l.b16 %v130
  %v473 = vunpack.c.l.b16 %v131
  %v474 = vunpack.c.h.b16 %v131
  %v475 = vunpack.c.l.b16 %v132
  %v476 = vunpack.c.l.b16 %v133
  %v477 = vunpack.c.h.b16 %v133
  %v478 = vunpack.c.l.b16 %v134
  %v479 = vunpack.c.l.b16 %v135
  %v480 = vunpack.c.h.b16 %v135
  %v481 = vunpack.c.l.b16 %v136
  %v482 = vunpack.c.l.b16 %v137
  %v483 = vunpack.c.h.b16 %v137
  %v484 = vunpack.c.l.b16 %v138
  %v485 = vunpack.c.l.b16 %v139
  %v486 = vunpack.c.h.b16 %v139
  %v487 = vunpack.c.l.b16 %v140
  %v488 = vunpack.c.l.b16 %v141
  %v489 = vunpack.c.h.b16 %v141
  %v490 = vunpack.c.l.b16 %v142
  %v491 = vunpack.c.l.b16 %v143
  %v492 = vunpack.c.h.b16 %v143
  %v493 = vunpack.c.l.b16 %v144
  %v494 = vunpack.c.l.b16 %v145
  %v495 = vunpack.c.h.b16 %v145
  %v496 = vunpack.c.l.b16 %v146
  %v497 = vunpack.c.l.b16 %v147
  %v498 = vunpack.c.h.b16 %v147
  %v499 = vunpack.c.l.b16 %v148
  %v500 = vunpack.c.l.b16 %v149
  %v501 = vunpack.c.h.b16 %v149
  %v502 = vunpack.c.l.b16 %v150
  %v503 = vunpack.c.l.b16 %v151
  %v504 = vunpack.c.h.b16 %v151
  %v505 = vunpack.c.l.b16 %v152
  %v506 = vunpack.c.l.b16 %v153
  %v507 = vunpack.c.h.b16 %v153
  %v508 = vunpack.c.l.b16 %v154
  %v509 = vunpack.c.l.b16 %v155
  %v510 = vunpack.c.h.b16 %v155
  %v511 = vunpack.c.l.b16 %v156
  %v512 = vunpack.c.l.b16 %v157
  %v513 = vunpack.c.h.b16 %v157
  %v514 = vunpack.c.l.b16 %v158
  %v515 = vunpack.c.l.b16 %v159
  %v516 = vunpack.c.h.b16 %v159
  %v517 = vunpack.c.l.b16 %v160
  %v518 = vunpack.c.l.b16 %v161
  %v519 = vunpack.c.h.b16 %v161
  %v520 = vunpack.c.l.b16 %v162
  %v521 = vunpack.c.l.b16 %v163
  %v522 = vunpack.c.h.b16 %v163
  %v523 = vunpack.c.l.b16 %v164
  %v524 = vunpack.c.l.b16 %v165
  %v525 = vunpack.c.h.b16 %v165
  %v526 = vunpack.c.l.b16 %v166
  %v527 = vunpack.c.l.b16 %v167
  %v528 = vunpack.c.h.b16 %v167
  %v529 = vunpack.c.l.b16 %v168
  %v530 = vunpack.c.l.b16 %v169
  %v531 = vunpack.c.h.b16 %v169
  %v532 = vunpack.c.l.b16 %v170
  %v533 = vunpack.c.l.b16 %v171
  %v534 = vunpack.c.h.b16 %v171
  %v535 = vunpack.c.l.b16 %v172
  %v536 = vunpack.c.l.b16 %v173
  %v537 = vunpack.c.h.b16 %v173
  %v538 = vunpack.c.l.b16 %v174
  %v539 = vunpack.c.l.b16 %v175
  %v540 = vunpack.c.h.b16 %v175
  %v541 = vunpack.c.l.b16 %v176
  %v542 = vunpack.c.l.b16 %v177
  %v543 = vunpack.c.h.b16 %v177
  %v544 = vunpack.c.l.b16 %v178
  %v545 = vunpack.c.l.b16 %v179
  %v546 = vunpack.c.h.b16 %v179
  %v547 = vunpack.c.l.b16 %v180
  %v548 = vunpack.c.l.b16 %v181
  %v549 = vunpack.c.h.b16 %v181
  %v550 = vunpack.c.l.b16 %v182
  %v551 = vunpack.c.l.b16 %v183
  %v552 = vunpack.c.h.b16 %v183
  %v553 = vunpack.c.l.b16 %v184
  %v554 = vunpack.c.l.b16 %v185
  %v555 = vunpack.c.h.b16 %v185
  %v556 = vunpack.c.l.b16 %v186
  %v557 = vunpack.c.l.b16 %v187
  %v558 = vunpack.c.h.b16 %v187
  %v559 = vunpack.c.l.b16 %v188
  %v560 = vunpack.c.l.b16 %v189
  %v561 = vunpack.c.h.b16 %v189
  %v562 = vunpack.c.l.b16 %v190
  %v563 = vunpack.c.l.b16 %v191
  %v564 = vunpack.c.h.b16 %v191
  %v565 = vunpack.c.l.b16 %v192
  %v566 = vunpack.c.l.b16 %v193
  %v567 = vunpack.c.h.b16 %v193
  %v568 = vunpack.c.l.b16 %v194
  %v569 = vunpack.c.l.b16 %v195
  %v570 = vunpack.c.h.b16 %v195
  %v571 = vunpack.c.l.b16 %v196
  %v572 = vunpack.c.l.b16 %v197
  %v573 = vunpack.c.h.b16 %v197
  %v574 = vunpack.c.l.b16 %v198
  %v575 = vunpack.c.l.b16 %v199
  %v576 = vunpack.c.h.b16 %v199
  %v577 = vunpack.c.l.b16 %v200
  %v578 = vunpack.c.l.b16 %v201
  %v579 = vunpack.c.h.b16 %v201
  %v580 = vunpack.c.l.b16 %v202
  %v581 = vunpack.c.l.b16 %v203
  %v582 = vunpack.c.h.b16 %v203
  %v583 = vunpack.c.l.b16 %v204
  %v584 = vunpack.c.l.b16 %v205
  %v585 = vunpack.c.h.b16 %v205
  %v586 = vunpack.c.l.b16 %v206
  %v587 = vunpack.c.l.b16 %v207
  %v588 = vunpack.c.h.b16 %v207
  %v589 = vunpack.c.l.b16 %v208
  %v590 = vunpack.c.l.b16 %v209
  %v591 = vunpack.c.h.b16 %v209
  %v592 = vunpack.c.l.b16 %v210
  %v593 = vunpack.c.l.b16 %v211
  %v594 = vunpack.c.h.b16 %v211
  %v595 = vunpack.c.l.b16 %v212
  %v596 = vunpack.c.l.b16 %v213
  %v597 = vunpack.c.h.b16 %v213
  %v598 = vunpack.c.l.b16 %v214
  %v599 = vunpack.c.l.b16 %v215
  %v600 = vunpack.c.h.b16 %v215
  %v601 = vunpack.c.l.b16 %v216
  %v602 = vpack.c.b16 %v461, %v458
  %v603 = vpack.c.b16 %v462, %v459
  %v604 = vpack.c.b16 %v463, %v460
  %v605 = vpack.c.b16 %v467, %v464
  %v606 = vpack.c.b16 %v468, %v465
  %v607 = vpack.c.b16 %v469, %v466
  %v608 = vpack.c.b16 %v473, %v470
  %v609 = vpack.c.b16 %v474, %v471
  %v610 = vpack.c.b16 %v475, %v472
  %v611 = vpack.c.b16 %v479, %v476
  %v612 = vpack.c.b16 %v480, %v477
  %v613 = vpack.c.b16 %v481, %v478
  %v614 = vpack.c.b16 %v485, %v482
  %v615 = vpack.c.b16 %v486, %v483
  %v616 = vpack.c.b16 %v487, %v484
  %v617 = vpack.c.b16 %v491, %v488
  %v618 = vpack.c.b16 %v492, %v489
  %v619 = vpack.c.b16 %v493, %v490
  %v620 = vpack.c.b16 %v497, %v494
  %v621 = vpack.c.b16 %v498, %v495
  %v622 = vpack.c.b16 %v499, %v496
  %v623 = vpack.c.b16 %v503, %v500
  %v624 = vpack.c.b16 %v504, %v501
  %v625 = vpack.c.b16 %v505, %v502
  %v626 = vpack.c.b16 %v509, %v506
  %v627 = vpack.c.b16 %v510, %v507
  %v628 = vpack.c.b16 %v511, %v508
  %v629 = vpack.c.b16 %v515, %v512
  %v630 = vpack.c.b16 %v516, %v513
  %v631 = vpack.c.b16 %v517, %v514
  %v632 = vpack.c.b16 %v521, %v518
  %v633 = vpack.c.b16 %v522, %v519
  %v634 = vpack.c.b16 %v523, %v520
  %v635 = vpack.c.b16 %v527, %v524
  %v636 = vpack.c.b16 %v528, %v525
  %v637 = vpack.c.b16 %v529, %v526
  %v638 = vpack.c.b16 %v533, %v530
  %v639 = vpack.c.b16 %v534, %v531
  %v640 = vpack.c.b16 %v535, %v532
  %v641 = vpack.c.b16 %v539, %v536
  %v642 = vpack.c.b16 %v540, %v537
  %v643 = vpack.c.b16 %v541, %v538
  %v644 = vpack.c.b16 %v545, %v542
  %v645 = vpack.c.b16 %v546, %v543
  %v646 = vpack.c.b16 %v547, %v544
  %v647 = vpack.c.b16 %v551, %v548
  %v648 = vpack.c.b16 %v552, %v549
  %v649 = vpack.c.b16 %v553, %v550
  %v650 = vpack.c.b16 %v557, %v554
  %v651 = vpack.c.b16 %v558, %v555
  %v652 = vpack.c.b16 %v559, %v556
  %v653 = vpack.c.b16 %v563, %v560
  %v654 = vpack.c.b16 %v564, %v561
  %v655 = vpack.c.b16 %v565, %v562
  %v656 = vpack.c.b16 %v569, %v566
  %v657 = vpack.c.b16 %v570, %v567
  %v658 = vpack.c.b16 %v571, %v568
  %v659 = vpack.c.b16 %v575, %v572
  %v660 = vpack.c.b16 %v576, %v573
  %v661 = vpack.c.b16 %v577, %v574
  %v662 = vpack.c.b16 %v581, %v578
  %v663 = vpack.c.b16 %v582, %v579
  %v664 = vpack.c.b16 %v583, %v580
  %v665 = vpack.c.b16 %v587, %v584
  %v666 = vpack.c.b16 %v588, %v585
  %v667 = vpack.c.b16 %v589, %v586
  %v668 = vpack.c.b16 %v593, %v590
  %v669 = vpack.c.b16 %v594, %v591
  %v670 = vpack.c.b16 %v595, %v592
  %v671 = vpack.c.b16 %v599, %v596
  %v672 = vpack.c.b16 %v600, %v597
  %v673 = vpack.c.b16 %v601, %v598
  %746 = vmatprep.subr.bf16.mxu0 %v603
  %747 = vmatpush1.bf16.msra.mxu0 %v602
  %748 = vmatprep.subr.bf16.mxu0 %v606
  %749 = vmatpush1.bf16.msra.mxu0 %v605
  %750 = vmatprep.subr.bf16.mxu0 %v609
  %751 = vmatpush1.bf16.msra.mxu0 %v608
  %752 = vmatprep.subr.bf16.mxu0 %v612
  %753 = vmatpush1.bf16.msra.mxu0 %v611
  %754 = vmatprep.subr.bf16.mxu0 %v615
  %755 = vmatpush1.bf16.msra.mxu0 %v614
  %756 = vmatprep.subr.bf16.mxu0 %v618
  %757 = vmatpush1.bf16.msra.mxu0 %v617
  %758 = vmatprep.subr.bf16.mxu0 %v621
  %759 = vmatpush1.bf16.msra.mxu0 %v620
  %760 = vmatprep.subr.bf16.mxu0 %v624
  %761 = vmatpush1.bf16.msra.mxu0 %v623
  %762 = vmatprep.subr.bf16.mxu0 %v627
  %763 = vmatpush1.bf16.msra.mxu0 %v626
  %764 = vmatprep.subr.bf16.mxu0 %v630
  %765 = vmatpush1.bf16.msra.mxu0 %v629
  %766 = vmatprep.subr.bf16.mxu0 %v633
  %767 = vmatpush1.bf16.msra.mxu0 %v632
  %768 = vmatprep.subr.bf16.mxu0 %v636
  %769 = vmatpush1.bf16.msra.mxu0 %v635
  %770 = vmatprep.subr.bf16.mxu0 %v639
  %771 = vmatpush1.bf16.msra.mxu0 %v638
  %772 = vmatprep.subr.bf16.mxu0 %v642
  %773 = vmatpush1.bf16.msra.mxu0 %v641
  %774 = vmatprep.subr.bf16.mxu0 %v645
  %775 = vmatpush1.bf16.msra.mxu0 %v644
  %776 = vmatprep.subr.bf16.mxu0 %v648
  %777 = vmatpush1.bf16.msra.mxu0 %v647
  %778 = vmatprep.mubr.bf16.mxu0 %v315
  %779 = vmatmul.mubr.bf16.gmra.mrb[0].mxu0 %v314
  %v780 = vpop.f32.mrb[0].mxu0
  %v781 = vadd.f32 %v222, %v780
  %v782 = vpop.f32.mrb[0].mxu0
  %v783 = vadd.f32 %v226, %v782
  %v784 = vpop.f32.mrb[0].mxu0
  %v785 = vadd.f32 %v222, %v784
  %v786 = vpop.f32.mrb[0].mxu0
  %v787 = vadd.f32 %v226, %v786
  %788 = vmatprep.mubr.bf16.mxu0 %v318
  %789 = vmatmul.mubr.bf16.gmra.mrb[0].mxu0 %v317
  %v790 = vpop.f32.mrb[0].mxu0
  %v791 = vadd.f32 %v222, %v790
  %v792 = vpop.f32.mrb[0].mxu0
  %v793 = vadd.f32 %v226, %v792
  %v794 = vpop.f32.mrb[0].mxu0
  %v795 = vadd.f32 %v222, %v794
  %v796 = vpop.f32.mrb[0].mxu0
  %v797 = vadd.f32 %v226, %v796
  %798 = vmatprep.mubr.bf16.mxu0 %v321
  %799 = vmatmul.mubr.bf16.gmra.mrb[0].mxu0 %v320
  %v800 = vpop.f32.mrb[0].mxu0
  %v801 = vadd.f32 %v222, %v800
  %v802 = vpop.f32.mrb[0].mxu0
  %v803 = vadd.f32 %v226, %v802
  %v804 = vpop.f32.mrb[0].mxu0
  %v805 = vadd.f32 %v222, %v804
  %v806 = vpop.f32.mrb[0].mxu0
  %v807 = vadd.f32 %v226, %v806
  %808 = vmatprep.mubr.bf16.mxu0 %v324
  %809 = vmatmul.mubr.bf16.gmra.mrb[0].mxu0 %v323
  %v810 = vpop.f32.mrb[0].mxu0
  %v811 = vadd.f32 %v222, %v810
  %v812 = vpop.f32.mrb[0].mxu0
  %v813 = vadd.f32 %v226, %v812
  %v814 = vpop.f32.mrb[0].mxu0
  %v815 = vadd.f32 %v222, %v814
  %v816 = vpop.f32.mrb[0].mxu0
  %v817 = vadd.f32 %v226, %v816
  %818 = vmatprep.mubr.bf16.mxu0 %v327
  %819 = vmatmul.mubr.bf16.gmra.mrb[0].mxu0 %v326
  %v820 = vpop.f32.mrb[0].mxu0
  %v821 = vadd.f32 %v222, %v820
  %v822 = vpop.f32.mrb[0].mxu0
  %v823 = vadd.f32 %v226, %v822
  %v824 = vpop.f32.mrb[0].mxu0
  %v825 = vadd.f32 %v222, %v824
  %v826 = vpop.f32.mrb[0].mxu0
  %v827 = vadd.f32 %v226, %v826
  %828 = vmatprep.mubr.bf16.mxu0 %v330
  %829 = vmatmul.mubr.bf16.gmra.mrb[0].mxu0 %v329
  %v830 = vpop.f32.mrb[0].mxu0
  %v831 = vadd.f32 %v222, %v830
  %v832 = vpop.f32.mrb[0].mxu0
  %v833 = vadd.f32 %v226, %v832
  %v834 = vpop.f32.mrb[0].mxu0
  %v835 = vadd.f32 %v222, %v834
  %v836 = vpop.f32.mrb[0].mxu0
  %v837 = vadd.f32 %v226, %v836
  %838 = vmatprep.mubr.bf16.mxu0 %v333
  %839 = vmatmul.mubr.bf16.gmra.mrb[0].mxu0 %v332
  %v840 = vpop.f32.mrb[0].mxu0
  %v841 = vadd.f32 %v222, %v840
  %v842 = vpop.f32.mrb[0].mxu0
  %v843 = vadd.f32 %v226, %v842
  %v844 = vpop.f32.mrb[0].mxu0
  %v845 = vadd.f32 %v222, %v844
  %v846 = vpop.f32.mrb[0].mxu0
  %v847 = vadd.f32 %v226, %v846
  %848 = vmatprep.mubr.bf16.mxu0 %v336
  %849 = vmatmul.mubr.bf16.gmra.mrb[0].mxu0 %v335
  %v850 = vpop.f32.mrb[0].mxu0
  %v851 = vadd.f32 %v222, %v850
  %v852 = vpop.f32.mrb[0].mxu0
  %v853 = vadd.f32 %v226, %v852
  %v854 = vpop.f32.mrb[0].mxu0
  %v855 = vadd.f32 %v222, %v854
  %v856 = vpop.f32.mrb[0].mxu0
  %v857 = vadd.f32 %v226, %v856
  %858 = vdwg.mxu0
  %859 = vmatprep.subr.bf16.mxu0 %v651
  %860 = vmatpush1.bf16.msra.mxu0 %v650
  %861 = vmatprep.subr.bf16.mxu0 %v654
  %862 = vmatpush1.bf16.msra.mxu0 %v653
  %863 = vmatprep.subr.bf16.mxu0 %v657
  %864 = vmatpush1.bf16.msra.mxu0 %v656
  %865 = vmatprep.subr.bf16.mxu0 %v660
  %866 = vmatpush1.bf16.msra.mxu0 %v659
  %867 = vmatprep.subr.bf16.mxu0 %v663
  %868 = vmatpush1.bf16.msra.mxu0 %v662
  %869 = vmatprep.subr.bf16.mxu0 %v666
  %870 = vmatpush1.bf16.msra.mxu0 %v665
  %871 = vmatprep.subr.bf16.mxu0 %v669
  %872 = vmatpush1.bf16.msra.mxu0 %v668
  %873 = vmatprep.subr.bf16.mxu0 %v672
  %874 = vmatpush1.bf16.msra.mxu0 %v671
  %875 = vmatprep.subr.bf16.mxu0 0
  %876 = vmatpush1.bf16.msra.mxu0 0
  %877 = vmatprep.subr.bf16.mxu0 0
  %878 = vmatpush1.bf16.msra.mxu0 0
  %879 = vmatprep.subr.bf16.mxu0 0
  %880 = vmatpush1.bf16.msra.mxu0 0
  %881 = vmatprep.subr.bf16.mxu0 0
  %882 = vmatpush1.bf16.msra.mxu0 0
  %883 = vmatprep.subr.bf16.mxu0 0
  %884 = vmatpush1.bf16.msra.mxu0 0
  %885 = vmatprep.subr.bf16.mxu0 0
  %886 = vmatpush1.bf16.msra.mxu0 0
  %887 = vmatprep.subr.bf16.mxu0 0
  %888 = vmatpush1.bf16.msra.mxu0 0
  %889 = vmatprep.subr.bf16.mxu0 0
  %890 = vmatpush1.bf16.msra.mxu0 0
  %891 = vmatprep.mubr.bf16.mxu0 0
  %892 = vmatmul.mubr.bf16.gmra.mrb[0].mxu0 %v316
  %v893 = vpop.f32.mrb[0].mxu0
  %v894 = vadd.f32 %v781, %v893
  %v895 = vpop.f32.mrb[0].mxu0
  %v896 = vadd.f32 %v783, %v895
  %v897 = vpop.f32.mrb[0].mxu0
  %v898 = vadd.f32 %v785, %v897
  %v899 = vpop.f32.mrb[0].mxu0
  %v900 = vadd.f32 %v787, %v899
  %901 = vmatprep.mubr.bf16.mxu0 0
  %902 = vmatmul.mubr.bf16.gmra.mrb[0].mxu0 %v319
  %v903 = vpop.f32.mrb[0].mxu0
  %v904 = vadd.f32 %v791, %v903
  %v905 = vpop.f32.mrb[0].mxu0
  %v906 = vadd.f32 %v793, %v905
  %v907 = vpop.f32.mrb[0].mxu0
  %v908 = vadd.f32 %v795, %v907
  %v909 = vpop.f32.mrb[0].mxu0
  %v910 = vadd.f32 %v797, %v909
  %911 = vmatprep.mubr.bf16.mxu0 0
  %912 = vmatmul.mubr.bf16.gmra.mrb[0].mxu0 %v322
  %v913 = vpop.f32.mrb[0].mxu0
  %v914 = vadd.f32 %v801, %v913
  %v915 = vpop.f32.mrb[0].mxu0
  %v916 = vadd.f32 %v803, %v915
  %v917 = vpop.f32.mrb[0].mxu0
  %v918 = vadd.f32 %v805, %v917
  %v919 = vpop.f32.mrb[0].mxu0
  %v920 = vadd.f32 %v807, %v919
  %921 = vmatprep.mubr.bf16.mxu0 0
  %922 = vmatmul.mubr.bf16.gmra.mrb[0].mxu0 %v325
  %v923 = vpop.f32.mrb[0].mxu0
  %v924 = vadd.f32 %v811, %v923
  %v925 = vpop.f32.mrb[0].mxu0
  %v926 = vadd.f32 %v813, %v925
  %v927 = vpop.f32.mrb[0].mxu0
  %v928 = vadd.f32 %v815, %v927
  %v929 = vpop.f32.mrb[0].mxu0
  %v930 = vadd.f32 %v817, %v929
  %931 = vmatprep.mubr.bf16.mxu0 0
  %932 = vmatmul.mubr.bf16.gmra.mrb[0].mxu0 %v328
  %v933 = vpop.f32.mrb[0].mxu0
  %v934 = vadd.f32 %v821, %v933
  %v935 = vpop.f32.mrb[0].mxu0
  %v936 = vadd.f32 %v823, %v935
  %v937 = vpop.f32.mrb[0].mxu0
  %v938 = vadd.f32 %v825, %v937
  %v939 = vpop.f32.mrb[0].mxu0
  %v940 = vadd.f32 %v827, %v939
  %941 = vmatprep.mubr.bf16.mxu0 0
  %942 = vmatmul.mubr.bf16.gmra.mrb[0].mxu0 %v331
  %v943 = vpop.f32.mrb[0].mxu0
  %v944 = vadd.f32 %v831, %v943
  %v945 = vpop.f32.mrb[0].mxu0
  %v946 = vadd.f32 %v833, %v945
  %v947 = vpop.f32.mrb[0].mxu0
  %v948 = vadd.f32 %v835, %v947
  %v949 = vpop.f32.mrb[0].mxu0
  %v950 = vadd.f32 %v837, %v949
  %951 = vmatprep.mubr.bf16.mxu0 0
  %952 = vmatmul.mubr.bf16.gmra.mrb[0].mxu0 %v334
  %v953 = vpop.f32.mrb[0].mxu0
  %v954 = vadd.f32 %v841, %v953
  %v955 = vpop.f32.mrb[0].mxu0
  %v956 = vadd.f32 %v843, %v955
  %v957 = vpop.f32.mrb[0].mxu0
  %v958 = vadd.f32 %v845, %v957
  %v959 = vpop.f32.mrb[0].mxu0
  %v960 = vadd.f32 %v847, %v959
  %961 = vmatprep.mubr.bf16.mxu0 0
  %962 = vmatmul.mubr.bf16.gmra.mrb[0].mxu0 %v337
  %v963 = vpop.f32.mrb[0].mxu0
  %v964 = vadd.f32 %v851, %v963
  %v965 = vpop.f32.mrb[0].mxu0
  %v966 = vadd.f32 %v853, %v965
  %v967 = vpop.f32.mrb[0].mxu0
  %v968 = vadd.f32 %v855, %v967
  %v969 = vpop.f32.mrb[0].mxu0
  %v970 = vadd.f32 %v857, %v969
  %971 = vdwg.mxu0
  %972 = vmatprep.subr.bf16.mxu0 0
  %973 = vmatpush1.bf16.msra.mxu0 %v604
  %974 = vmatprep.subr.bf16.mxu0 0
  %975 = vmatpush1.bf16.msra.mxu0 %v607
  %976 = vmatprep.subr.bf16.mxu0 0
  %977 = vmatpush1.bf16.msra.mxu0 %v610
  %978 = vmatprep.subr.bf16.mxu0 0
  %979 = vmatpush1.bf16.msra.mxu0 %v613
  %980 = vmatprep.subr.bf16.mxu0 0
  %981 = vmatpush1.bf16.msra.mxu0 %v616
  %982 = vmatprep.subr.bf16.mxu0 0
  %983 = vmatpush1.bf16.msra.mxu0 %v619
  %984 = vmatprep.subr.bf16.mxu0 0
  %985 = vmatpush1.bf16.msra.mxu0 %v622
  %986 = vmatprep.subr.bf16.mxu0 0
  %987 = vmatpush1.bf16.msra.mxu0 %v625
  %988 = vmatprep.subr.bf16.mxu0 0
  %989 = vmatpush1.bf16.msra.mxu0 %v628
  %990 = vmatprep.subr.bf16.mxu0 0
  %991 = vmatpush1.bf16.msra.mxu0 %v631
  %992 = vmatprep.subr.bf16.mxu0 0
  %993 = vmatpush1.bf16.msra.mxu0 %v634
  %994 = vmatprep.subr.bf16.mxu0 0
  %995 = vmatpush1.bf16.msra.mxu0 %v637
  %996 = vmatprep.subr.bf16.mxu0 0
  %997 = vmatpush1.bf16.msra.mxu0 %v640
  %998 = vmatprep.subr.bf16.mxu0 0
  %999 = vmatpush1.bf16.msra.mxu0 %v643
  %1000 = vmatprep.subr.bf16.mxu0 0
  %1001 = vmatpush1.bf16.msra.mxu0 %v646
  %1002 = vmatprep.subr.bf16.mxu0 0
  %1003 = vmatpush1.bf16.msra.mxu0 %v649
  %1004 = vmatprep.mubr.bf16.mxu0 %v315
  %1005 = vmatmul.mubr.bf16.gmra.mrb[0].mxu0 %v314
  %v1006 = vpop.f32.mrb[0].mxu0
  %v1007 = vadd.f32 %v230, %v1006
  %v1008 = vpop.f32.mrb[0].mxu0
  %v1009 = vpop.f32.mrb[0].mxu0
  %v1010 = vadd.f32 %v230, %v1009
  %v1011 = vpop.f32.mrb[0].mxu0
  %1012 = vmatprep.mubr.bf16.mxu0 %v318
  %1013 = vmatmul.mubr.bf16.gmra.mrb[0].mxu0 %v317
  %v1014 = vpop.f32.mrb[0].mxu0
  %v1015 = vadd.f32 %v230, %v1014
  %v1016 = vpop.f32.mrb[0].mxu0
  %v1017 = vpop.f32.mrb[0].mxu0
  %v1018 = vadd.f32 %v230, %v1017
  %v1019 = vpop.f32.mrb[0].mxu0
  %1020 = vmatprep.mubr.bf16.mxu0 %v321
  %1021 = vmatmul.mubr.bf16.gmra.mrb[0].mxu0 %v320
  %v1022 = vpop.f32.mrb[0].mxu0
  %v1023 = vadd.f32 %v230, %v1022
  %v1024 = vpop.f32.mrb[0].mxu0
  %v1025 = vpop.f32.mrb[0].mxu0
  %v1026 = vadd.f32 %v230, %v1025
  %v1027 = vpop.f32.mrb[0].mxu0
  %1028 = vmatprep.mubr.bf16.mxu0 %v324
  %1029 = vmatmul.mubr.bf16.gmra.mrb[0].mxu0 %v323
  %v1030 = vpop.f32.mrb[0].mxu0
  %v1031 = vadd.f32 %v230, %v1030
  %v1032 = vpop.f32.mrb[0].mxu0
  %v1033 = vpop.f32.mrb[0].mxu0
  %v1034 = vadd.f32 %v230, %v1033
  %v1035 = vpop.f32.mrb[0].mxu0
  %1036 = vmatprep.mubr.bf16.mxu0 %v327
  %1037 = vmatmul.mubr.bf16.gmra.mrb[0].mxu0 %v326
  %v1038 = vpop.f32.mrb[0].mxu0
  %v1039 = vadd.f32 %v230, %v1038
  %v1040 = vpop.f32.mrb[0].mxu0
  %v1041 = vpop.f32.mrb[0].mxu0
  %v1042 = vadd.f32 %v230, %v1041
  %v1043 = vpop.f32.mrb[0].mxu0
  %1044 = vmatprep.mubr.bf16.mxu0 %v330
  %1045 = vmatmul.mubr.bf16.gmra.mrb[0].mxu0 %v329
  %v1046 = vpop.f32.mrb[0].mxu0
  %v1047 = vadd.f32 %v230, %v1046
  %v1048 = vpop.f32.mrb[0].mxu0
  %v1049 = vpop.f32.mrb[0].mxu0
  %v1050 = vadd.f32 %v230, %v1049
  %v1051 = vpop.f32.mrb[0].mxu0
  %1052 = vmatprep.mubr.bf16.mxu0 %v333
  %1053 = vmatmul.mubr.bf16.gmra.mrb[0].mxu0 %v332
  %v1054 = vpop.f32.mrb[0].mxu0
  %v1055 = vadd.f32 %v230, %v1054
  %v1056 = vpop.f32.mrb[0].mxu0
  %v1057 = vpop.f32.mrb[0].mxu0
  %v1058 = vadd.f32 %v230, %v1057
  %v1059 = vpop.f32.mrb[0].mxu0
  %1060 = vmatprep.mubr.bf16.mxu0 %v336
  %1061 = vmatmul.mubr.bf16.gmra.mrb[0].mxu0 %v335
  %v1062 = vpop.f32.mrb[0].mxu0
  %v1063 = vadd.f32 %v230, %v1062
  %v1064 = vpop.f32.mrb[0].mxu0
  %v1065 = vpop.f32.mrb[0].mxu0
  %v1066 = vadd.f32 %v230, %v1065
  %v1067 = vpop.f32.mrb[0].mxu0
  %1068 = vdwg.mxu0
  %1069 = vmatprep.subr.bf16.mxu0 0
  %1070 = vmatpush1.bf16.msra.mxu0 %v652
  %1071 = vmatprep.subr.bf16.mxu0 0
  %1072 = vmatpush1.bf16.msra.mxu0 %v655
  %1073 = vmatprep.subr.bf16.mxu0 0
  %1074 = vmatpush1.bf16.msra.mxu0 %v658
  %1075 = vmatprep.subr.bf16.mxu0 0
  %1076 = vmatpush1.bf16.msra.mxu0 %v661
  %1077 = vmatprep.subr.bf16.mxu0 0
  %1078 = vmatpush1.bf16.msra.mxu0 %v664
  %1079 = vmatprep.subr.bf16.mxu0 0
  %1080 = vmatpush1.bf16.msra.mxu0 %v667
  %1081 = vmatprep.subr.bf16.mxu0 0
  %1082 = vmatpush1.bf16.msra.mxu0 %v670
  %1083 = vmatprep.subr.bf16.mxu0 0
  %1084 = vmatpush1.bf16.msra.mxu0 %v673
  %1085 = vmatprep.subr.bf16.mxu0 0
  %1086 = vmatpush1.bf16.msra.mxu0 0
  %1087 = vmatprep.subr.bf16.mxu0 0
  %1088 = vmatpush1.bf16.msra.mxu0 0
  %1089 = vmatprep.subr.bf16.mxu0 0
  %1090 = vmatpush1.bf16.msra.mxu0 0
  %1091 = vmatprep.subr.bf16.mxu0 0
  %1092 = vmatpush1.bf16.msra.mxu0 0
  %1093 = vmatprep.subr.bf16.mxu0 0
  %1094 = vmatpush1.bf16.msra.mxu0 0
  %1095 = vmatprep.subr.bf16.mxu0 0
  %1096 = vmatpush1.bf16.msra.mxu0 0
  %1097 = vmatprep.subr.bf16.mxu0 0
  %1098 = vmatpush1.bf16.msra.mxu0 0
  %1099 = vmatprep.subr.bf16.mxu0 0
  %1100 = vmatpush1.bf16.msra.mxu0 0
  %1101 = vmatprep.mubr.bf16.mxu0 0
  %1102 = vmatmul.mubr.bf16.gmra.mrb[0].mxu0 %v316
  %v1103 = vpop.f32.mrb[0].mxu0
  %v1104 = vadd.f32 %v1007, %v1103
  %v1105 = vpop.f32.mrb[0].mxu0
  %v1106 = vpop.f32.mrb[0].mxu0
  %v1107 = vadd.f32 %v1010, %v1106
  %v1108 = vpop.f32.mrb[0].mxu0
  %1109 = vmatprep.mubr.bf16.mxu0 0
  %1110 = vmatmul.mubr.bf16.gmra.mrb[0].mxu0 %v319
  %v1111 = vpop.f32.mrb[0].mxu0
  %v1112 = vadd.f32 %v1015, %v1111
  %v1113 = vpop.f32.mrb[0].mxu0
  %v1114 = vpop.f32.mrb[0].mxu0
  %v1115 = vadd.f32 %v1018, %v1114
  %v1116 = vpop.f32.mrb[0].mxu0
  %1117 = vmatprep.mubr.bf16.mxu0 0
  %1118 = vmatmul.mubr.bf16.gmra.mrb[0].mxu0 %v322
  %v1119 = vpop.f32.mrb[0].mxu0
  %v1120 = vadd.f32 %v1023, %v1119
  %v1121 = vpop.f32.mrb[0].mxu0
  %v1122 = vpop.f32.mrb[0].mxu0
  %v1123 = vadd.f32 %v1026, %v1122
  %v1124 = vpop.f32.mrb[0].mxu0
  %1125 = vmatprep.mubr.bf16.mxu0 0
  %1126 = vmatmul.mubr.bf16.gmra.mrb[0].mxu0 %v325
  %v1127 = vpop.f32.mrb[0].mxu0
  %v1128 = vadd.f32 %v1031, %v1127
  %v1129 = vpop.f32.mrb[0].mxu0
  %v1130 = vpop.f32.mrb[0].mxu0
  %v1131 = vadd.f32 %v1034, %v1130
  %v1132 = vpop.f32.mrb[0].mxu0
  %1133 = vmatprep.mubr.bf16.mxu0 0
  %1134 = vmatmul.mubr.bf16.gmra.mrb[0].mxu0 %v328
  %v1135 = vpop.f32.mrb[0].mxu0
  %v1136 = vadd.f32 %v1039, %v1135
  %v1137 = vpop.f32.mrb[0].mxu0
  %v1138 = vpop.f32.mrb[0].mxu0
  %v1139 = vadd.f32 %v1042, %v1138
  %v1140 = vpop.f32.mrb[0].mxu0
  %1141 = vmatprep.mubr.bf16.mxu0 0
  %1142 = vmatmul.mubr.bf16.gmra.mrb[0].mxu0 %v331
  %v1143 = vpop.f32.mrb[0].mxu0
  %v1144 = vadd.f32 %v1047, %v1143
  %v1145 = vpop.f32.mrb[0].mxu0
  %v1146 = vpop.f32.mrb[0].mxu0
  %v1147 = vadd.f32 %v1050, %v1146
  %v1148 = vpop.f32.mrb[0].mxu0
  %1149 = vmatprep.mubr.bf16.mxu0 0
  %1150 = vmatmul.mubr.bf16.gmra.mrb[0].mxu0 %v334
  %v1151 = vpop.f32.mrb[0].mxu0
  %v1152 = vadd.f32 %v1055, %v1151
  %v1153 = vpop.f32.mrb[0].mxu0
  %v1154 = vpop.f32.mrb[0].mxu0
  %v1155 = vadd.f32 %v1058, %v1154
  %v1156 = vpop.f32.mrb[0].mxu0
  %1157 = vmatprep.mubr.bf16.mxu0 0
  %1158 = vmatmul.mubr.bf16.gmra.mrb[0].mxu0 %v337
  %v1159 = vpop.f32.mrb[0].mxu0
  %v1160 = vadd.f32 %v1063, %v1159
  %v1161 = vpop.f32.mrb[0].mxu0
  %v1162 = vpop.f32.mrb[0].mxu0
  %v1163 = vadd.f32 %v1066, %v1162
  %v1164 = vpop.f32.mrb[0].mxu0
  %1165 = vdwg.mxu0
  %v1166 = vmax.f32 %v894, 0.0
  %v1167 = vmax.f32 %v896, 0.0
  %v1168 = vmax.f32 %v1104, 0.0
  %v1169 = vmax.f32 %v898, 0.0
  %v1170 = vmax.f32 %v900, 0.0
  %v1171 = vmax.f32 %v1107, 0.0
  %v1172 = vmax.f32 %v904, 0.0
  %v1173 = vmax.f32 %v906, 0.0
  %v1174 = vmax.f32 %v1112, 0.0
  %v1175 = vmax.f32 %v908, 0.0
  %v1176 = vmax.f32 %v910, 0.0
  %v1177 = vmax.f32 %v1115, 0.0
  %v1178 = vmax.f32 %v914, 0.0
  %v1179 = vmax.f32 %v916, 0.0
  %v1180 = vmax.f32 %v1120, 0.0
  %v1181 = vmax.f32 %v918, 0.0
  %v1182 = vmax.f32 %v920, 0.0
  %v1183 = vmax.f32 %v1123, 0.0
  %v1184 = vmax.f32 %v924, 0.0
  %v1185 = vmax.f32 %v926, 0.0
  %v1186 = vmax.f32 %v1128, 0.0
  %v1187 = vmax.f32 %v928, 0.0
  %v1188 = vmax.f32 %v930, 0.0
  %v1189 = vmax.f32 %v1131, 0.0
  %v1190 = vmax.f32 %v934, 0.0
  %v1191 = vmax.f32 %v936, 0.0
  %v1192 = vmax.f32 %v1136, 0.0
  %v1193 = vmax.f32 %v938, 0.0
  %v1194 = vmax.f32 %v940, 0.0
  %v1195 = vmax.f32 %v1139, 0.0
  %v1196 = vmax.f32 %v944, 0.0
  %v1197 = vmax.f32 %v946, 0.0
  %v1198 = vmax.f32 %v1144, 0.0
  %v1199 = vmax.f32 %v948, 0.0
  %v1200 = vmax.f32 %v950, 0.0
  %v1201 = vmax.f32 %v1147, 0.0
  %v1202 = vmax.f32 %v954, 0.0
  %v1203 = vmax.f32 %v956, 0.0
  %v1204 = vmax.f32 %v1152, 0.0
  %v1205 = vmax.f32 %v958, 0.0
  %v1206 = vmax.f32 %v960, 0.0
  %v1207 = vmax.f32 %v1155, 0.0
  %v1208 = vmax.f32 %v964, 0.0
  %v1209 = vmax.f32 %v966, 0.0
  %v1210 = vmax.f32 %v1160, 0.0
  %v1211 = vmax.f32 %v968, 0.0
  %v1212 = vmax.f32 %v970, 0.0
  %v1213 = vmax.f32 %v1163, 0.0
  %v1214 = vld [vmem:[%s4] sm:$0x7]
  %v1216 = vlaneseq
  %v1217 = vshrl.u32 %v1216, 7
  %v1218 = vsub.s32 0, %v1217
  %v1219 = vrot.slane %v1214, %v1218
  %v1220 = vlaneseq
  %v1221 = vshrl.u32 %v1220, 7
  %v1222 = vsub.s32 1, %v1221
  %v1223 = vrot.slane %v1214, %v1222
  %v1224 = vlaneseq
  %v1225 = vshrl.u32 %v1224, 7
  %v1226 = vsub.s32 2, %v1225
  %v1227 = vrot.slane %v1214, %v1226
  %v1231 = vmul.f32 %v1166, %v1219
  %v1232 = vmul.f32 %v1167, %v1223
  %v1233 = vmul.f32 %v1168, %v1227
  %v1234 = vmul.f32 %v1169, %v1219
  %v1235 = vmul.f32 %v1170, %v1223
  %v1236 = vmul.f32 %v1171, %v1227
  %v1237 = vmul.f32 %v1172, %v1219
  %v1238 = vmul.f32 %v1173, %v1223
  %v1239 = vmul.f32 %v1174, %v1227
  %v1240 = vmul.f32 %v1175, %v1219
  %v1241 = vmul.f32 %v1176, %v1223
  %v1242 = vmul.f32 %v1177, %v1227
  %v1243 = vmul.f32 %v1178, %v1219
  %v1244 = vmul.f32 %v1179, %v1223
  %v1245 = vmul.f32 %v1180, %v1227
  %v1246 = vmul.f32 %v1181, %v1219
  %v1247 = vmul.f32 %v1182, %v1223
  %v1248 = vmul.f32 %v1183, %v1227
  %v1249 = vmul.f32 %v1184, %v1219
  %v1250 = vmul.f32 %v1185, %v1223
  %v1251 = vmul.f32 %v1186, %v1227
  %v1252 = vmul.f32 %v1187, %v1219
  %v1253 = vmul.f32 %v1188, %v1223
  %v1254 = vmul.f32 %v1189, %v1227
  %v1255 = vmul.f32 %v1190, %v1219
  %v1256 = vmul.f32 %v1191, %v1223
  %v1257 = vmul.f32 %v1192, %v1227
  %v1258 = vmul.f32 %v1193, %v1219
  %v1259 = vmul.f32 %v1194, %v1223
  %v1260 = vmul.f32 %v1195, %v1227
  %v1261 = vmul.f32 %v1196, %v1219
  %v1262 = vmul.f32 %v1197, %v1223
  %v1263 = vmul.f32 %v1198, %v1227
  %v1264 = vmul.f32 %v1199, %v1219
  %v1265 = vmul.f32 %v1200, %v1223
  %v1266 = vmul.f32 %v1201, %v1227
  %v1267 = vmul.f32 %v1202, %v1219
  %v1268 = vmul.f32 %v1203, %v1223
  %v1269 = vmul.f32 %v1204, %v1227
  %v1270 = vmul.f32 %v1205, %v1219
  %v1271 = vmul.f32 %v1206, %v1223
  %v1272 = vmul.f32 %v1207, %v1227
  %v1273 = vmul.f32 %v1208, %v1219
  %v1274 = vmul.f32 %v1209, %v1223
  %v1275 = vmul.f32 %v1210, %v1227
  %v1276 = vmul.f32 %v1211, %v1219
  %v1277 = vmul.f32 %v1212, %v1223
  %v1278 = vmul.f32 %v1213, %v1227
  %v1279 = vadd.f32 %v1231, %v1232
  %v1280 = vadd.f32 %v1279, %v1233
  %1281 = vadd.xlane.f32.xlu0 %v1280
  %v1282 = vpop.xlane.xlu0 %1281
  %v1283 = vadd.f32 %v1234, %v1235
  %v1284 = vadd.f32 %v1283, %v1236
  %1285 = vadd.xlane.f32.xlu0 %v1284
  %v1286 = vpop.xlane.xlu0 %1285
  %v1287 = vadd.f32 %v1237, %v1238
  %v1288 = vadd.f32 %v1287, %v1239
  %1289 = vadd.xlane.f32.xlu0 %v1288
  %v1290 = vpop.xlane.xlu0 %1289
  %v1291 = vadd.f32 %v1240, %v1241
  %v1292 = vadd.f32 %v1291, %v1242
  %1293 = vadd.xlane.f32.xlu0 %v1292
  %v1294 = vpop.xlane.xlu0 %1293
  %v1295 = vadd.f32 %v1243, %v1244
  %v1296 = vadd.f32 %v1295, %v1245
  %1297 = vadd.xlane.f32.xlu0 %v1296
  %v1298 = vpop.xlane.xlu0 %1297
  %v1299 = vadd.f32 %v1246, %v1247
  %v1300 = vadd.f32 %v1299, %v1248
  %1301 = vadd.xlane.f32.xlu0 %v1300
  %v1302 = vpop.xlane.xlu0 %1301
  %v1303 = vadd.f32 %v1249, %v1250
  %v1304 = vadd.f32 %v1303, %v1251
  %1305 = vadd.xlane.f32.xlu0 %v1304
  %v1306 = vpop.xlane.xlu0 %1305
  %v1307 = vadd.f32 %v1252, %v1253
  %v1308 = vadd.f32 %v1307, %v1254
  %1309 = vadd.xlane.f32.xlu0 %v1308
  %v1310 = vpop.xlane.xlu0 %1309
  %v1311 = vadd.f32 %v1255, %v1256
  %v1312 = vadd.f32 %v1311, %v1257
  %1313 = vadd.xlane.f32.xlu0 %v1312
  %v1314 = vpop.xlane.xlu0 %1313
  %v1315 = vadd.f32 %v1258, %v1259
  %v1316 = vadd.f32 %v1315, %v1260
  %1317 = vadd.xlane.f32.xlu0 %v1316
  %v1318 = vpop.xlane.xlu0 %1317
  %v1319 = vadd.f32 %v1261, %v1262
  %v1320 = vadd.f32 %v1319, %v1263
  %1321 = vadd.xlane.f32.xlu0 %v1320
  %v1322 = vpop.xlane.xlu0 %1321
  %v1323 = vadd.f32 %v1264, %v1265
  %v1324 = vadd.f32 %v1323, %v1266
  %1325 = vadd.xlane.f32.xlu0 %v1324
  %v1326 = vpop.xlane.xlu0 %1325
  %v1327 = vadd.f32 %v1267, %v1268
  %v1328 = vadd.f32 %v1327, %v1269
  %1329 = vadd.xlane.f32.xlu0 %v1328
  %v1330 = vpop.xlane.xlu0 %1329
  %v1331 = vadd.f32 %v1270, %v1271
  %v1332 = vadd.f32 %v1331, %v1272
  %1333 = vadd.xlane.f32.xlu0 %v1332
  %v1334 = vpop.xlane.xlu0 %1333
  %v1335 = vadd.f32 %v1273, %v1274
  %v1336 = vadd.f32 %v1335, %v1275
  %1337 = vadd.xlane.f32.xlu0 %v1336
  %v1338 = vpop.xlane.xlu0 %1337
  %v1339 = vadd.f32 %v1276, %v1277
  %v1340 = vadd.f32 %v1339, %v1278
  %1341 = vadd.xlane.f32.xlu0 %v1340
  %v1342 = vpop.xlane.xlu0 %1341
  %s1343 = sld [smem:[#allocation2]]
  %v1344 = vstv %s1343
  %v1345 = vadd.f32 %v1282, %v1344
  %v1346 = vadd.f32 %v1286, %v1344
  %v1347 = vadd.f32 %v1290, %v1344
  %v1348 = vadd.f32 %v1294, %v1344
  %v1349 = vadd.f32 %v1298, %v1344
  %v1350 = vadd.f32 %v1302, %v1344
  %v1351 = vadd.f32 %v1306, %v1344
  %v1352 = vadd.f32 %v1310, %v1344
  %v1353 = vadd.f32 %v1314, %v1344
  %v1354 = vadd.f32 %v1318, %v1344
  %v1355 = vadd.f32 %v1322, %v1344
  %v1356 = vadd.f32 %v1326, %v1344
  %v1357 = vadd.f32 %v1330, %v1344
  %v1358 = vadd.f32 %v1334, %v1344
  %v1359 = vadd.f32 %v1338, %v1344
  %v1360 = vadd.f32 %v1342, %v1344
  %v1361 = vxor.u32 %v1345, 2147483648
  %v1362 = vxor.u32 %v1346, 2147483648
  %v1363 = vxor.u32 %v1347, 2147483648
  %v1364 = vxor.u32 %v1348, 2147483648
  %v1365 = vxor.u32 %v1349, 2147483648
  %v1366 = vxor.u32 %v1350, 2147483648
  %v1367 = vxor.u32 %v1351, 2147483648
  %v1368 = vxor.u32 %v1352, 2147483648
  %v1369 = vxor.u32 %v1353, 2147483648
  %v1370 = vxor.u32 %v1354, 2147483648
  %v1371 = vxor.u32 %v1355, 2147483648
  %v1372 = vxor.u32 %v1356, 2147483648
  %v1373 = vxor.u32 %v1357, 2147483648
  %v1374 = vxor.u32 %v1358, 2147483648
  %v1375 = vxor.u32 %v1359, 2147483648
  %v1376 = vxor.u32 %v1360, 2147483648
  %v1377 = vmul.f32 %v1361, 1.442695
  %v1378 = vpow.pop %v1377
  %v1379 = vmul.f32 %v1362, 1.442695
  %v1380 = vpow.pop %v1379
  %v1381 = vmul.f32 %v1363, 1.442695
  %v1382 = vpow.pop %v1381
  %v1383 = vmul.f32 %v1364, 1.442695
  %v1384 = vpow.pop %v1383
  %v1385 = vmul.f32 %v1365, 1.442695
  %v1386 = vpow.pop %v1385
  %v1387 = vmul.f32 %v1366, 1.442695
  %v1388 = vpow.pop %v1387
  %v1389 = vmul.f32 %v1367, 1.442695
  %v1390 = vpow.pop %v1389
  %v1391 = vmul.f32 %v1368, 1.442695
  %v1392 = vpow.pop %v1391
  %v1393 = vmul.f32 %v1369, 1.442695
  %v1394 = vpow.pop %v1393
  %v1395 = vmul.f32 %v1370, 1.442695
  %v1396 = vpow.pop %v1395
  %v1397 = vmul.f32 %v1371, 1.442695
  %v1398 = vpow.pop %v1397
  %v1399 = vmul.f32 %v1372, 1.442695
  %v1400 = vpow.pop %v1399
  %v1401 = vmul.f32 %v1373, 1.442695
  %v1402 = vpow.pop %v1401
  %v1403 = vmul.f32 %v1374, 1.442695
  %v1404 = vpow.pop %v1403
  %v1405 = vmul.f32 %v1375, 1.442695
  %v1406 = vpow.pop %v1405
  %v1407 = vmul.f32 %v1376, 1.442695
  %v1408 = vpow.pop %v1407
  %v1409 = vadd.f32 %v1378, 1.0
  %v1410 = vadd.f32 %v1380, 1.0
  %v1411 = vadd.f32 %v1382, 1.0
  %v1412 = vadd.f32 %v1384, 1.0
  %v1413 = vadd.f32 %v1386, 1.0
  %v1414 = vadd.f32 %v1388, 1.0
  %v1415 = vadd.f32 %v1390, 1.0
  %v1416 = vadd.f32 %v1392, 1.0
  %v1417 = vadd.f32 %v1394, 1.0
  %v1418 = vadd.f32 %v1396, 1.0
  %v1419 = vadd.f32 %v1398, 1.0
  %v1420 = vadd.f32 %v1400, 1.0
  %v1421 = vadd.f32 %v1402, 1.0
  %v1422 = vadd.f32 %v1404, 1.0
  %v1423 = vadd.f32 %v1406, 1.0
  %v1424 = vadd.f32 %v1408, 1.0
  %v1425 = vrcp.pop %v1409
  %v1426 = vmul.f32 1.0, %v1425
  %v1427 = vrcp.pop %v1410
  %v1428 = vmul.f32 1.0, %v1427
  %v1429 = vrcp.pop %v1411
  %v1430 = vmul.f32 1.0, %v1429
  %v1431 = vrcp.pop %v1412
  %v1432 = vmul.f32 1.0, %v1431
  %v1433 = vrcp.pop %v1413
  %v1434 = vmul.f32 1.0, %v1433
  %v1435 = vrcp.pop %v1414
  %v1436 = vmul.f32 1.0, %v1435
  %v1437 = vrcp.pop %v1415
  %v1438 = vmul.f32 1.0, %v1437
  %v1439 = vrcp.pop %v1416
  %v1440 = vmul.f32 1.0, %v1439
  %v1441 = vrcp.pop %v1417
  %v1442 = vmul.f32 1.0, %v1441
  %v1443 = vrcp.pop %v1418
  %v1444 = vmul.f32 1.0, %v1443
  %v1445 = vrcp.pop %v1419
  %v1446 = vmul.f32 1.0, %v1445
  %v1447 = vrcp.pop %v1420
  %v1448 = vmul.f32 1.0, %v1447
  %v1449 = vrcp.pop %v1421
  %v1450 = vmul.f32 1.0, %v1449
  %v1451 = vrcp.pop %v1422
  %v1452 = vmul.f32 1.0, %v1451
  %v1453 = vrcp.pop %v1423
  %v1454 = vmul.f32 1.0, %v1453
  %v1455 = vrcp.pop %v1424
  %v1456 = vmul.f32 1.0, %v1455
  %v1473 = vlaneseq
  %v1474 = vand.u32 %v1473, 127
  %v1475 = vlaneseq
  %v1476 = vshrl.u32 %v1475, 7
  %v1477 = vsub.s32 %v1474, %v1476
  %v1478 = vrot.slane %v1426, %v1477
  %v1479 = vadd.s32 %v1474, 4294967288
  %v1480 = vlaneseq
  %v1481 = vshrl.u32 %v1480, 7
  %v1482 = vsub.s32 %v1479, %v1481
  %v1483 = vrot.slane %v1428, %v1482
  %vm1484 = vcmask 130112
  %v1485 = vsel %vm1484, %v1483, %v1478
  %v1486 = vadd.s32 %v1474, 4294967280
  %v1487 = vlaneseq
  %v1488 = vshrl.u32 %v1487, 7
  %v1489 = vsub.s32 %v1486, %v1488
  %v1490 = vrot.slane %v1430, %v1489
  %vm1491 = vcmask 195712
  %v1492 = vsel %vm1491, %v1490, %v1485
  %v1493 = vadd.s32 %v1474, 4294967272
  %v1494 = vlaneseq
  %v1495 = vshrl.u32 %v1494, 7
  %v1496 = vsub.s32 %v1493, %v1495
  %v1497 = vrot.slane %v1432, %v1496
  %vm1498 = vcmask 261312
  %v1499 = vsel %vm1498, %v1497, %v1492
  %v1500 = vadd.s32 %v1474, 4294967264
  %v1501 = vlaneseq
  %v1502 = vshrl.u32 %v1501, 7
  %v1503 = vsub.s32 %v1500, %v1502
  %v1504 = vrot.slane %v1434, %v1503
  %vm1505 = vcmask 326912
  %v1506 = vsel %vm1505, %v1504, %v1499
  %v1507 = vadd.s32 %v1474, 4294967256
  %v1508 = vlaneseq
  %v1509 = vshrl.u32 %v1508, 7
  %v1510 = vsub.s32 %v1507, %v1509
  %v1511 = vrot.slane %v1436, %v1510
  %vm1512 = vcmask 392512
  %v1513 = vsel %vm1512, %v1511, %v1506
  %v1514 = vadd.s32 %v1474, 4294967248
  %v1515 = vlaneseq
  %v1516 = vshrl.u32 %v1515, 7
  %v1517 = vsub.s32 %v1514, %v1516
  %v1518 = vrot.slane %v1438, %v1517
  %vm1519 = vcmask 458112
  %v1520 = vsel %vm1519, %v1518, %v1513
  %v1521 = vadd.s32 %v1474, 4294967240
  %v1522 = vlaneseq
  %v1523 = vshrl.u32 %v1522, 7
  %v1524 = vsub.s32 %v1521, %v1523
  %v1525 = vrot.slane %v1440, %v1524
  %vm1526 = vcmask 523712
  %v1527 = vsel %vm1526, %v1525, %v1520
  %v1528 = vadd.s32 %v1474, 4294967232
  %v1529 = vlaneseq
  %v1530 = vshrl.u32 %v1529, 7
  %v1531 = vsub.s32 %v1528, %v1530
  %v1532 = vrot.slane %v1442, %v1531
  %vm1533 = vcmask 589312
  %v1534 = vsel %vm1533, %v1532, %v1527
  %v1535 = vadd.s32 %v1474, 4294967224
  %v1536 = vlaneseq
  %v1537 = vshrl.u32 %v1536, 7
  %v1538 = vsub.s32 %v1535, %v1537
  %v1539 = vrot.slane %v1444, %v1538
  %vm1540 = vcmask 654912
  %v1541 = vsel %vm1540, %v1539, %v1534
  %v1542 = vadd.s32 %v1474, 4294967216
  %v1543 = vlaneseq
  %v1544 = vshrl.u32 %v1543, 7
  %v1545 = vsub.s32 %v1542, %v1544
  %v1546 = vrot.slane %v1446, %v1545
  %vm1547 = vcmask 720512
  %v1548 = vsel %vm1547, %v1546, %v1541
  %v1549 = vadd.s32 %v1474, 4294967208
  %v1550 = vlaneseq
  %v1551 = vshrl.u32 %v1550, 7
  %v1552 = vsub.s32 %v1549, %v1551
  %v1553 = vrot.slane %v1448, %v1552
  %vm1554 = vcmask 786112
  %v1555 = vsel %vm1554, %v1553, %v1548
  %v1556 = vadd.s32 %v1474, 4294967200
  %v1557 = vlaneseq
  %v1558 = vshrl.u32 %v1557, 7
  %v1559 = vsub.s32 %v1556, %v1558
  %v1560 = vrot.slane %v1450, %v1559
  %vm1561 = vcmask 851712
  %v1562 = vsel %vm1561, %v1560, %v1555
  %v1563 = vadd.s32 %v1474, 4294967192
  %v1564 = vlaneseq
  %v1565 = vshrl.u32 %v1564, 7
  %v1566 = vsub.s32 %v1563, %v1565
  %v1567 = vrot.slane %v1452, %v1566
  %vm1568 = vcmask 917312
  %v1569 = vsel %vm1568, %v1567, %v1562
  %v1570 = vadd.s32 %v1474, 4294967184
  %v1571 = vlaneseq
  %v1572 = vshrl.u32 %v1571, 7
  %v1573 = vsub.s32 %v1570, %v1572
  %v1574 = vrot.slane %v1454, %v1573
  %vm1575 = vcmask 982912
  %v1576 = vsel %vm1575, %v1574, %v1569
  %v1577 = vadd.s32 %v1474, 4294967176
  %v1578 = vlaneseq
  %v1579 = vshrl.u32 %v1578, 7
  %v1580 = vsub.s32 %v1577, %v1579
  %v1581 = vrot.slane %v1456, %v1580
  %vm1582 = vcmask 1048512
  %v1583 = vsel %vm1582, %v1581, %v1576
  %1585 = vst [vmem:[%s6] sm:$0x1] %v1583
  // Predicated region
  $region26: #{sage_linear_forward.5} parent=0 // pred_check
    _
  $region27: #{sage_linear_forward.5} parent=0 // pred_check_branch
    %1587 = sbr.rel (0) target = $region29
  $region28: #{sage_linear_forward.5} parent=0 // pred_region
    _
  $region29: #{sage_linear_forward.5} parent=0 // pred_fallthru
    _
  // Predicated region
  $region30: #{sage_linear_forward.5} parent=0 // pred_check
    _
  $region31: #{sage_linear_forward.5} parent=0 // pred_check_branch
    %1589 = sbr.rel (0) target = $region33
  $region32: #{sage_linear_forward.5} parent=0 // pred_region
    _
  $region33: #{sage_linear_forward.5} parent=0 // pred_fallthru
    _

</llo_original>
